<compile_context>
chip_gen: v5e
topology: v5e:2x2
jax: 0.10.0
libtpu: 0.0.40
codegen_flags: <defaults>
</compile_context>

<pallas_src>
import jax
import jax.numpy as jnp
from jax import lax
from jax.experimental import pallas as pl
from jax.experimental.pallas import tpu as pltpu

_GATHER_DEPTH = 8          # max in-flight embedding-row DMAs (power of two)


def _rows_to_lane_major(v):
    """(Bt, H) -> (1, Bt*H), batch-major along the lane axis (slice+concat, no reshape)."""
    bt = v.shape[0]
    return jnp.concatenate([v[b:b + 1, :] for b in range(bt)], axis=1)


def _encoder_kernel(ids_ref,        # SMEM (S*B,)    int32 token ids (scalar prefetch)
                    lens_ref,       # VMEM (Bt, 1)   int32 valid lengths for this tile
                    emb_hbm_ref,    # HBM  (V, E)    f32 embedding table (pl.ANY)
                    wih_ref,        # VMEM (E, 6H)   bf16 [W_ih_f^T | W_ih_b^T]
                    bih_ref,        # VMEM (1, 6H)   f32  [b_ih_f   | b_ih_b  ]
                    whh_ref,        # VMEM (2H, 6H)  f32  block_diag(W_hh_f^T, W_hh_b^T)
                    bhh_ref,        # VMEM (1, 6H)   f32  [b_hh_f   | b_hh_b  ]
                    res_ref,        # out  (S, Bt*H) f32 summed bidirectional outputs
                    hid_ref,        # out  (2, Bt*H) f32 final hidden states (fwd, bwd)
                    emb_vmem,       # scratch (S*Bt, E)   f32 gathered embeddings
                    gx_ref,         # scratch (S, Bt, 6H) f32 hoisted input gates (time-major)
                    outb_ref,       # scratch (S, Bt*H)   f32 backward-direction outputs
                    gsem):          # scratch DMA semaphores (_GATHER_DEPTH,)
    S, Bt, H6 = gx_ref.shape
    H = H6 // 6
    H2, H3 = 2 * H, 3 * H
    B = pl.num_programs(0) * Bt                      # full batch size
    num_rows = S * Bt
    b0 = pl.program_id(0) * Bt                       # global batch offset of this tile

    # ---- 1) Embedding row gather: HBM -> VMEM DMAs with bounded in-flight depth. ----
    # TODO(synk): for very long sequences, batch several rows per DMA descriptor.
    def _issue(r, carry):
        t, bb = carry
        slot = r & (_GATHER_DEPTH - 1)

        @pl.when(r >= _GATHER_DEPTH)
        def _():
            # wait for the copy issued _GATHER_DEPTH iterations ago on this slot
            pltpu.make_async_copy(emb_hbm_ref.at[pl.ds(0, 1), :],
                                  emb_vmem.at[pl.ds(r - _GATHER_DEPTH, 1), :],
                                  gsem.at[slot]).wait()

        tok = ids_ref[t * B + b0 + bb]
        pltpu.make_async_copy(emb_hbm_ref.at[pl.ds(tok, 1), :],
                              emb_vmem.at[pl.ds(r, 1), :],
                              gsem.at[slot]).start()
        bb = bb + 1
        wrap = bb == Bt
        return (jnp.where(wrap, t + 1, t), jnp.where(wrap, jnp.int32(0), bb))

    lax.fori_loop(0, num_rows, _issue, (jnp.int32(0), jnp.int32(0)))
    tail = min(_GATHER_DEPTH, num_rows)
    for r in range(num_rows - tail, num_rows):       # drain the still-outstanding copies
        pltpu.make_async_copy(emb_hbm_ref.at[pl.ds(0, 1), :],
                              emb_vmem.at[pl.ds(r, 1), :],
                              gsem.at[r % _GATHER_DEPTH]).wait()

    # ---- 2) Hoisted input projection, both directions: one (S*Bt, E) @ (E, 6H). -----
    # bf16 operands -> native MXU rate; f32 accumulate; biases / gates stay f32.
    # TODO(synk): for very large S, chunk this projection over time so only a chunk
    #             of gates is resident in VMEM (mandatory sooner on v7x's 64 MiB).
    gx = jnp.dot(emb_vmem[...].astype(jnp.bfloat16), wih_ref[...],
                 preferred_element_type=jnp.float32) + bih_ref[...]      # (S*Bt, 6H)
    gx_ref[...] = gx.reshape(S, Bt, H6)              # time-major gate scratch

    lens = lens_ref[...]                             # (Bt, 1) lengths for this tile
    whh = whh_ref[...]
    bhh = bhh_ref[...]

    # ---- 3) Serial bidirectional recurrence: one fused block-diag matmul per step. ---
    def body(t, carry):
        h_f, h_b = carry
        tb = S - 1 - t
        gx_t = gx_ref[t]                              # (Bt, 6H): fwd gates in [:, :3H]
        gx_tb = gx_ref[tb]                            # (Bt, 6H): bwd gates in [:, 3H:]
        h_cat = jnp.concatenate([h_f, h_b], axis=-1)  # (Bt, 2H)
        gh = jnp.dot(h_cat, whh,
                     preferred_element_type=jnp.float32) + bhh           # (Bt, 6H)

        # PyTorch GRU gate order [r, z, n]; r/z sigmoids fused; b_hn stays inside r*(.)
        rz_f = jax.nn.sigmoid(gx_t[:, :H2] + gh[:, :H2])
        n_f = jnp.tanh(gx_t[:, H2:H3] + rz_f[:, :H] * gh[:, H2:H3])
        z_f = rz_f[:, H:H2]
        h_f_new = (1.0 - z_f) * n_f + z_f * h_f

        rz_b = jax.nn.sigmoid(gx_tb[:, H3:H3 + H2] + gh[:, H3:H3 + H2])
        n_b = jnp.tanh(gx_tb[:, H3 + H2:] + rz_b[:, :H] * gh[:, H3 + H2:])
        z_b = rz_b[:, H:H2]
        h_b_new = (1.0 - z_b) * n_b + z_b * h_b

        # Packed-sequence semantics: hidden updates only on valid steps, padded
        # outputs are zero (pad_packed_sequence default padding_value=0).
        valid_f = t < lens
        valid_b = tb < lens
        h_f = jnp.where(valid_f, h_f_new, h_f)
        h_b = jnp.where(valid_b, h_b_new, h_b)
        res_ref[pl.ds(t, 1), :] = _rows_to_lane_major(jnp.where(valid_f, h_f, 0.0))
        outb_ref[pl.ds(tb, 1), :] = _rows_to_lane_major(jnp.where(valid_b, h_b, 0.0))
        return (h_f, h_b)

    h0 = jnp.zeros((Bt, H), jnp.float32)
    h_f, h_b = lax.fori_loop(0, S, body, (h0, h0), unroll=min(8, S))

    # ---- 4) Epilogue: fold backward outputs into res; write final hidden states. ----
    res_ref[...] = res_ref[...] + outb_ref[...]
    hid_ref[pl.ds(0, 1), :] = _rows_to_lane_major(h_f)
    hid_ref[pl.ds(1, 1), :] = _rows_to_lane_major(h_b)


def encoder_forward(src, lengths, params, *, batch_tile=None):
    """src: (S, B) int32 ids; lengths: (B,) int32 (>= 1). Returns (res (S,B,H), hid (2,B,H))."""
    S, B = src.shape
    emb_table = params["embedding"].astype(jnp.float32)            # (V, E)
    V, E = emb_table.shape
    H = params["w_hh_f"].shape[1]                                  # w_hh_*: (3H, H)
    H3, H6 = 3 * H, 6 * H
    Bt = B if batch_tile is None else batch_tile
    assert B % Bt == 0, "batch_tile must divide the batch size"

    # One-time parameter relayout: (out,in) -> (in,out); both directions fused so the
    # input projection is a single (S*Bt, E) @ (E, 6H) matmul and the recurrence is a
    # single block-diagonal (Bt, 2H) @ (2H, 6H) matmul per timestep.
    wih = jnp.concatenate([params["w_ih_f"].T, params["w_ih_b"].T],
                          axis=1).astype(jnp.bfloat16)             # (E, 6H) bf16
    bih = jnp.concatenate([params["b_ih_f"], params["b_ih_b"]]
                          ).reshape(1, H6).astype(jnp.float32)
    zeros = jnp.zeros((H, H3), jnp.float32)
    whh = jnp.concatenate(
        [jnp.concatenate([params["w_hh_f"].T.astype(jnp.float32), zeros], axis=1),
         jnp.concatenate([zeros, params["w_hh_b"].T.astype(jnp.float32)], axis=1)],
        axis=0)                                                    # (2H, 6H) block-diag
    bhh = jnp.concatenate([params["b_hh_f"], params["b_hh_b"]]
                          ).reshape(1, H6).astype(jnp.float32)

    ids = src.reshape(S * B).astype(jnp.int32)                     # -> SMEM scalar prefetch
    lens3d = lengths.reshape(B // Bt, Bt, 1).astype(jnp.int32)     # per-tile length blocks

    # Explicit scoped-VMEM budget (v5e's default scoped limit is only 16 MiB).
    io_bytes = (B * 4 + E * H6 * 2 + 2 * H6 * 4 + 2 * H * H6 * 4
                + S * Bt * H * 4 + 2 * Bt * H * 4)
    scratch_bytes = S * Bt * (E + H6 + H) * 4
    vmem_limit = int(min(max(2 * (2 * io_bytes + scratch_bytes), 32 << 20), 100 << 20))

    res_flat, hid_flat = pl.pallas_call(
        _encoder_kernel,
        out_shape=(jax.ShapeDtypeStruct((S, B * H), jnp.float32),
                   jax.ShapeDtypeStruct((2, B * H), jnp.float32)),
        grid_spec=pltpu.PrefetchScalarGridSpec(
            num_scalar_prefetch=1,                     # token ids land in SMEM
            grid=(B // Bt,),                           # batch tiles (parallel / megacore)
            in_specs=[
                pl.BlockSpec((None, Bt, 1), lambda i, _ids: (i, 0, 0)),   # lengths tile
                pl.BlockSpec(memory_space=pl.ANY),                        # emb table (HBM)
                pl.BlockSpec((E, H6), lambda i, _ids: (0, 0)),            # W_ih fwd|bwd
                pl.BlockSpec((1, H6), lambda i, _ids: (0, 0)),            # b_ih fwd|bwd
                pl.BlockSpec((2 * H, H6), lambda i, _ids: (0, 0)),        # W_hh block-diag
                pl.BlockSpec((1, H6), lambda i, _ids: (0, 0)),            # b_hh fwd|bwd
            ],
            out_specs=(
                pl.BlockSpec((S, Bt * H), lambda i, _ids: (0, i)),        # res (lane-dense)
                pl.BlockSpec((2, Bt * H), lambda i, _ids: (0, i)),        # hidden
            ),
            scratch_shapes=[
                pltpu.VMEM((S * Bt, E), jnp.float32),                     # gathered embeddings
                pltpu.VMEM((S, Bt, H6), jnp.float32),                     # gates, time-major
                pltpu.VMEM((S, Bt * H), jnp.float32),                     # backward outputs
                pltpu.SemaphoreType.DMA((_GATHER_DEPTH,)),                # gather DMA sems
            ],
        ),
        compiler_params=pltpu.CompilerParams(
            dimension_semantics=("parallel",),
            vmem_limit_bytes=vmem_limit),
    )(ids, lens3d, emb_table, wih, bih, whh, bhh)

    return res_flat.reshape(S, B, H), hid_flat.reshape(2, B, H)


def _reference(src, lengths, params):
    """Pure-JAX re-implementation of the PyTorch packed bidirectional-GRU Encoder."""
    emb = params["embedding"][src]                    # (S, B, E)
    S, B, _ = emb.shape
    H = params["w_hh_f"].shape[1]
    hp = lax.Precision.HIGHEST

    def cell(x, h, w_ih, w_hh, b_ih, b_hh):
        gx = jnp.dot(x, w_ih.T, precision=hp) + b_ih
        gh = jnp.dot(h, w_hh.T, precision=hp) + b_hh
        r = jax.nn.sigmoid(gx[:, :H] + gh[:, :H])
        z = jax.nn.sigmoid(gx[:, H:2 * H] + gh[:, H:2 * H])
        n = jnp.tanh(gx[:, 2 * H:] + r * gh[:, 2 * H:])
        return (1.0 - z) * n + z * h

    mask = (jnp.arange(S)[:, None] < lengths[None, :])[..., None]    # (S, B, 1)

    h_f = jnp.zeros((B, H), jnp.float32)
    out_f = []
    for t in range(S):
        h_new = cell(emb[t], h_f, params["w_ih_f"], params["w_hh_f"],
                     params["b_ih_f"], params["b_hh_f"])
        h_f = jnp.where(mask[t], h_new, h_f)
        out_f.append(jnp.where(mask[t], h_f, 0.0))

    h_b = jnp.zeros((B, H), jnp.float32)
    out_b = [None] * S
    for t in range(S - 1, -1, -1):
        h_new = cell(emb[t], h_b, params["w_ih_b"], params["w_hh_b"],
                     params["b_ih_b"], params["b_hh_b"])
        h_b = jnp.where(mask[t], h_new, h_b)
        out_b[t] = jnp.where(mask[t], h_b, 0.0)

    res = jnp.stack(out_f) + jnp.stack(out_b)         # (S, B, H)
    hidden = jnp.stack([h_f, h_b])                    # (2, B, H)
    return res, hidden


if __name__ == "__main__":
    S, B = 8, 8            # seq_len, batch (two batch tiles of 4 -> grid=(2,), parallel)
    V, E, H = 50, 16, 32   # src vocab, embedding_dim, encoder_hdn_size

    key = jax.random.PRNGKey(0)
    ks = jax.random.split(key, 10)

    params = {
        "embedding": jax.random.normal(ks[0], (V, E), jnp.float32) * 0.5,
        "w_ih_f": jax.random.uniform(ks[1], (3 * H, E), jnp.float32, -0.2, 0.2),
        "w_hh_f": jax.random.uniform(ks[2], (3 * H, H), jnp.float32, -0.2, 0.2),
        "b_ih_f": jax.random.normal(ks[3], (3 * H,), jnp.float32) * 0.1,
        "b_hh_f": jax.random.normal(ks[4], (3 * H,), jnp.float32) * 0.1,
        "w_ih_b": jax.random.uniform(ks[5], (3 * H, E), jnp.float32, -0.2, 0.2),
        "w_hh_b": jax.random.uniform(ks[6], (3 * H, H), jnp.float32, -0.2, 0.2),
        "b_ih_b": jax.random.normal(ks[7], (3 * H,), jnp.float32) * 0.1,
        "b_hh_b": jax.random.normal(ks[8], (3 * H,), jnp.float32) * 0.1,
    }

    lengths = jnp.array([8, 5, 7, 3, 8, 1, 4, 6], dtype=jnp.int32)   # >= 1 each
    src = jax.random.randint(ks[9], (S, B), 0, V, dtype=jnp.int32)
    # Zero the padding positions (cosmetic -- they are masked out either way).
    src = jnp.where(jnp.arange(S)[:, None] < lengths[None, :], src, 0)

    res, hidden = encoder_forward(src, lengths, params, batch_tile=4)
    res, hidden = jax.block_until_ready((res, hidden))

    res_ref, hid_ref = _reference(src, lengths, params)
    assert res.shape == (S, B, H) and hidden.shape == (2, B, H)
    # bf16 operands on the hoisted input projection -> compare with a bf16-level tolerance.
    assert jnp.allclose(res, res_ref, atol=2e-2, rtol=2e-2), "res mismatch vs reference"
    assert jnp.allclose(hidden, hid_ref, atol=2e-2, rtol=2e-2), "hidden mismatch vs reference"

    print("KERNEL_OK")
</pallas_src>

<mosaic_0001>
module attributes {stable_mosaic.version = 11 : i64} {
  func.func @_encoder_kernel(%arg0: i32, %arg1: memref<64xi32, #tpu.memory_space<smem>>, %arg2: memref<1x4x1xi32, #tpu.memory_space<vmem>>, %arg3: memref<50x16xf32, #tpu.memory_space<any>>, %arg4: memref<16x192xbf16, #tpu.memory_space<vmem>>, %arg5: memref<1x192xf32, #tpu.memory_space<vmem>>, %arg6: memref<64x192xf32, #tpu.memory_space<vmem>>, %arg7: memref<1x192xf32, #tpu.memory_space<vmem>>, %arg8: memref<8x128xf32, #tpu.memory_space<vmem>>, %arg9: memref<2x128xf32, #tpu.memory_space<vmem>>, %arg10: memref<32x16xf32, #tpu.memory_space<vmem>>, %arg11: memref<8x4x192xf32, #tpu.memory_space<vmem>>, %arg12: memref<8x128xf32, #tpu.memory_space<vmem>>, %arg13: memref<8x!tpu.dma_semaphore, #tpu.memory_space<semaphore_mem>>) attributes {dimension_semantics = [#tpu.dimension_semantics<parallel>], iteration_bounds = array<i64: 2>, scalar_prefetch = 1 : i64, scratch_operands = 4 : i64, tpu.core_type = #tpu.core_type<tc>, window_params = [{transform_indices = @transform_0, window_bounds = array<i64: 1, 4, 1>}, {}, {pipeline_mode = #tpu.pipeline_mode<synchronous>, transform_indices = @transform_2, window_bounds = array<i64: 16, 192>}, {pipeline_mode = #tpu.pipeline_mode<synchronous>, transform_indices = @transform_3, window_bounds = array<i64: 1, 192>}, {pipeline_mode = #tpu.pipeline_mode<synchronous>, transform_indices = @transform_4, window_bounds = array<i64: 64, 192>}, {pipeline_mode = #tpu.pipeline_mode<synchronous>, transform_indices = @transform_5, window_bounds = array<i64: 1, 192>}, {transform_indices = @transform_6, window_bounds = array<i64: 8, 128>}, {transform_indices = @transform_7, window_bounds = array<i64: 2, 128>}]} {
    %c4_i32 = arith.constant 4 : i32
    %0 = arith.muli %arg0, %c4_i32 : i32
    %c0_i32 = arith.constant 0 : i32
    %c0_i32_0 = arith.constant 0 : i32
    %c0_i32_1 = arith.constant 0 : i32
    %c32_i32 = arith.constant 32 : i32
    %1 = arith.addi %c0_i32_1, %c32_i32 : i32
    %c1_i32 = arith.constant 1 : i32
    %2:2 = scf.for %arg14 = %c0_i32_1 to %1 step %c1_i32 iter_args(%arg15 = %c0_i32, %arg16 = %c0_i32_0) -> (i32, i32)  : i32 {
      %c7_i32_175 = arith.constant 7 : i32
      %729 = arith.andi %arg14, %c7_i32_175 : i32
      %c8_i32_176 = arith.constant 8 : i32
      %730 = arith.cmpi sge, %arg14, %c8_i32_176 : i32
      %731 = arith.extui %730 : i1 to i32
      %c0_i32_177 = arith.constant 0 : i32
      %732 = arith.cmpi ne, %731, %c0_i32_177 : i32
      scf.if %732 {
        %c8_i32_185 = arith.constant 8 : i32
        %747 = arith.subi %arg14, %c8_i32_185 : i32
        %c0_i32_186 = arith.constant 0 : i32
        %c0_i32_187 = arith.constant 0 : i32
        %748 = tpu.memref_slice %arg3[%c0_i32_186, %c0_i32_187] : memref<50x16xf32, #tpu.memory_space<any>> -> memref<1x16xf32, #tpu.memory_space<any>>
        %c0_i32_188 = arith.constant 0 : i32
        %749 = tpu.memref_slice %arg10[%747, %c0_i32_188] : memref<32x16xf32, #tpu.memory_space<vmem>> -> memref<1x16xf32, #tpu.memory_space<vmem>>
        %750 = tpu.memref_slice %arg13[%729] : memref<8x!tpu.dma_semaphore, #tpu.memory_space<semaphore_mem>> -> memref<1x!tpu.dma_semaphore, #tpu.memory_space<semaphore_mem>>
        %751 = tpu.memref_squeeze %750 : memref<1x!tpu.dma_semaphore, #tpu.memory_space<semaphore_mem>> -> memref<!tpu.dma_semaphore, #tpu.memory_space<semaphore_mem>>
        tpu.wait_dma2 semaphore(%751 : memref<!tpu.dma_semaphore, #tpu.memory_space<semaphore_mem>>) src(%748 : memref<1x16xf32, #tpu.memory_space<any>>) dst(%749 : memref<1x16xf32, #tpu.memory_space<vmem>>)
      } else {
      }
      %c8_i32_178 = arith.constant 8 : i32
      %733 = arith.muli %arg15, %c8_i32_178 : i32
      %734 = arith.addi %733, %0 : i32
      %735 = arith.addi %734, %arg16 : i32
      %736 = arith.index_cast %735 : i32 to index
      %737 = memref.load %arg1[%736] : memref<64xi32, #tpu.memory_space<smem>>
      %c0_i32_179 = arith.constant 0 : i32
      %738 = tpu.memref_slice %arg3[%737, %c0_i32_179] : memref<50x16xf32, #tpu.memory_space<any>> -> memref<1x16xf32, #tpu.memory_space<any>>
      %c0_i32_180 = arith.constant 0 : i32
      %739 = tpu.memref_slice %arg10[%arg14, %c0_i32_180] : memref<32x16xf32, #tpu.memory_space<vmem>> -> memref<1x16xf32, #tpu.memory_space<vmem>>
      %740 = tpu.memref_slice %arg13[%729] : memref<8x!tpu.dma_semaphore, #tpu.memory_space<semaphore_mem>> -> memref<1x!tpu.dma_semaphore, #tpu.memory_space<semaphore_mem>>
      %741 = tpu.memref_squeeze %740 : memref<1x!tpu.dma_semaphore, #tpu.memory_space<semaphore_mem>> -> memref<!tpu.dma_semaphore, #tpu.memory_space<semaphore_mem>>
      tpu.enqueue_dma source(%738 : memref<1x16xf32, #tpu.memory_space<any>>) target(%739 : memref<1x16xf32, #tpu.memory_space<vmem>>) target_semaphore(%741 : memref<!tpu.dma_semaphore, #tpu.memory_space<semaphore_mem>>)
      %c1_i32_181 = arith.constant 1 : i32
      %742 = arith.addi %arg16, %c1_i32_181 : i32
      %c4_i32_182 = arith.constant 4 : i32
      %743 = arith.cmpi eq, %742, %c4_i32_182 : i32
      %c1_i32_183 = arith.constant 1 : i32
      %744 = arith.addi %arg15, %c1_i32_183 : i32
      %745 = arith.select %743, %744, %arg15 : i32
      %c0_i32_184 = arith.constant 0 : i32
      %746 = arith.select %743, %c0_i32_184, %742 : i32
      scf.yield %745, %746 : i32, i32
    }
    %c32_i32_2 = arith.constant 32 : i32
    %c0_i32_3 = arith.constant 0 : i32
    %c0_i32_4 = arith.constant 0 : i32
    %c0_i32_5 = arith.constant 0 : i32
    %3 = tpu.memref_slice %arg3[%c0_i32_4, %c0_i32_5] : memref<50x16xf32, #tpu.memory_space<any>> -> memref<1x16xf32, #tpu.memory_space<any>>
    %c24_i32 = arith.constant 24 : i32
    %c0_i32_6 = arith.constant 0 : i32
    %4 = tpu.memref_slice %arg10[%c24_i32, %c0_i32_6] : memref<32x16xf32, #tpu.memory_space<vmem>> -> memref<1x16xf32, #tpu.memory_space<vmem>>
    %5 = tpu.memref_slice %arg13[%c0_i32_3] : memref<8x!tpu.dma_semaphore, #tpu.memory_space<semaphore_mem>> -> memref<1x!tpu.dma_semaphore, #tpu.memory_space<semaphore_mem>>
    %6 = tpu.memref_squeeze %5 : memref<1x!tpu.dma_semaphore, #tpu.memory_space<semaphore_mem>> -> memref<!tpu.dma_semaphore, #tpu.memory_space<semaphore_mem>>
    tpu.wait_dma2 semaphore(%6 : memref<!tpu.dma_semaphore, #tpu.memory_space<semaphore_mem>>) src(%3 : memref<1x16xf32, #tpu.memory_space<any>>) dst(%4 : memref<1x16xf32, #tpu.memory_space<vmem>>)
    %c1_i32_7 = arith.constant 1 : i32
    %c0_i32_8 = arith.constant 0 : i32
    %c0_i32_9 = arith.constant 0 : i32
    %7 = tpu.memref_slice %arg3[%c0_i32_8, %c0_i32_9] : memref<50x16xf32, #tpu.memory_space<any>> -> memref<1x16xf32, #tpu.memory_space<any>>
    %c25_i32 = arith.constant 25 : i32
    %c0_i32_10 = arith.constant 0 : i32
    %8 = tpu.memref_slice %arg10[%c25_i32, %c0_i32_10] : memref<32x16xf32, #tpu.memory_space<vmem>> -> memref<1x16xf32, #tpu.memory_space<vmem>>
    %9 = tpu.memref_slice %arg13[%c1_i32_7] : memref<8x!tpu.dma_semaphore, #tpu.memory_space<semaphore_mem>> -> memref<1x!tpu.dma_semaphore, #tpu.memory_space<semaphore_mem>>
    %10 = tpu.memref_squeeze %9 : memref<1x!tpu.dma_semaphore, #tpu.memory_space<semaphore_mem>> -> memref<!tpu.dma_semaphore, #tpu.memory_space<semaphore_mem>>
    tpu.wait_dma2 semaphore(%10 : memref<!tpu.dma_semaphore, #tpu.memory_space<semaphore_mem>>) src(%7 : memref<1x16xf32, #tpu.memory_space<any>>) dst(%8 : memref<1x16xf32, #tpu.memory_space<vmem>>)
    %c2_i32 = arith.constant 2 : i32
    %c0_i32_11 = arith.constant 0 : i32
    %c0_i32_12 = arith.constant 0 : i32
    %11 = tpu.memref_slice %arg3[%c0_i32_11, %c0_i32_12] : memref<50x16xf32, #tpu.memory_space<any>> -> memref<1x16xf32, #tpu.memory_space<any>>
    %c26_i32 = arith.constant 26 : i32
    %c0_i32_13 = arith.constant 0 : i32
    %12 = tpu.memref_slice %arg10[%c26_i32, %c0_i32_13] : memref<32x16xf32, #tpu.memory_space<vmem>> -> memref<1x16xf32, #tpu.memory_space<vmem>>
    %13 = tpu.memref_slice %arg13[%c2_i32] : memref<8x!tpu.dma_semaphore, #tpu.memory_space<semaphore_mem>> -> memref<1x!tpu.dma_semaphore, #tpu.memory_space<semaphore_mem>>
    %14 = tpu.memref_squeeze %13 : memref<1x!tpu.dma_semaphore, #tpu.memory_space<semaphore_mem>> -> memref<!tpu.dma_semaphore, #tpu.memory_space<semaphore_mem>>
    tpu.wait_dma2 semaphore(%14 : memref<!tpu.dma_semaphore, #tpu.memory_space<semaphore_mem>>) src(%11 : memref<1x16xf32, #tpu.memory_space<any>>) dst(%12 : memref<1x16xf32, #tpu.memory_space<vmem>>)
    %c3_i32 = arith.constant 3 : i32
    %c0_i32_14 = arith.constant 0 : i32
    %c0_i32_15 = arith.constant 0 : i32
    %15 = tpu.memref_slice %arg3[%c0_i32_14, %c0_i32_15] : memref<50x16xf32, #tpu.memory_space<any>> -> memref<1x16xf32, #tpu.memory_space<any>>
    %c27_i32 = arith.constant 27 : i32
    %c0_i32_16 = arith.constant 0 : i32
    %16 = tpu.memref_slice %arg10[%c27_i32, %c0_i32_16] : memref<32x16xf32, #tpu.memory_space<vmem>> -> memref<1x16xf32, #tpu.memory_space<vmem>>
    %17 = tpu.memref_slice %arg13[%c3_i32] : memref<8x!tpu.dma_semaphore, #tpu.memory_space<semaphore_mem>> -> memref<1x!tpu.dma_semaphore, #tpu.memory_space<semaphore_mem>>
    %18 = tpu.memref_squeeze %17 : memref<1x!tpu.dma_semaphore, #tpu.memory_space<semaphore_mem>> -> memref<!tpu.dma_semaphore, #tpu.memory_space<semaphore_mem>>
    tpu.wait_dma2 semaphore(%18 : memref<!tpu.dma_semaphore, #tpu.memory_space<semaphore_mem>>) src(%15 : memref<1x16xf32, #tpu.memory_space<any>>) dst(%16 : memref<1x16xf32, #tpu.memory_space<vmem>>)
    %c4_i32_17 = arith.constant 4 : i32
    %c0_i32_18 = arith.constant 0 : i32
    %c0_i32_19 = arith.constant 0 : i32
    %19 = tpu.memref_slice %arg3[%c0_i32_18, %c0_i32_19] : memref<50x16xf32, #tpu.memory_space<any>> -> memref<1x16xf32, #tpu.memory_space<any>>
    %c28_i32 = arith.constant 28 : i32
    %c0_i32_20 = arith.constant 0 : i32
    %20 = tpu.memref_slice %arg10[%c28_i32, %c0_i32_20] : memref<32x16xf32, #tpu.memory_space<vmem>> -> memref<1x16xf32, #tpu.memory_space<vmem>>
    %21 = tpu.memref_slice %arg13[%c4_i32_17] : memref<8x!tpu.dma_semaphore, #tpu.memory_space<semaphore_mem>> -> memref<1x!tpu.dma_semaphore, #tpu.memory_space<semaphore_mem>>
    %22 = tpu.memref_squeeze %21 : memref<1x!tpu.dma_semaphore, #tpu.memory_space<semaphore_mem>> -> memref<!tpu.dma_semaphore, #tpu.memory_space<semaphore_mem>>
    tpu.wait_dma2 semaphore(%22 : memref<!tpu.dma_semaphore, #tpu.memory_space<semaphore_mem>>) src(%19 : memref<1x16xf32, #tpu.memory_space<any>>) dst(%20 : memref<1x16xf32, #tpu.memory_space<vmem>>)
    %c5_i32 = arith.constant 5 : i32
    %c0_i32_21 = arith.constant 0 : i32
    %c0_i32_22 = arith.constant 0 : i32
    %23 = tpu.memref_slice %arg3[%c0_i32_21, %c0_i32_22] : memref<50x16xf32, #tpu.memory_space<any>> -> memref<1x16xf32, #tpu.memory_space<any>>
    %c29_i32 = arith.constant 29 : i32
    %c0_i32_23 = arith.constant 0 : i32
    %24 = tpu.memref_slice %arg10[%c29_i32, %c0_i32_23] : memref<32x16xf32, #tpu.memory_space<vmem>> -> memref<1x16xf32, #tpu.memory_space<vmem>>
    %25 = tpu.memref_slice %arg13[%c5_i32] : memref<8x!tpu.dma_semaphore, #tpu.memory_space<semaphore_mem>> -> memref<1x!tpu.dma_semaphore, #tpu.memory_space<semaphore_mem>>
    %26 = tpu.memref_squeeze %25 : memref<1x!tpu.dma_semaphore, #tpu.memory_space<semaphore_mem>> -> memref<!tpu.dma_semaphore, #tpu.memory_space<semaphore_mem>>
    tpu.wait_dma2 semaphore(%26 : memref<!tpu.dma_semaphore, #tpu.memory_space<semaphore_mem>>) src(%23 : memref<1x16xf32, #tpu.memory_space<any>>) dst(%24 : memref<1x16xf32, #tpu.memory_space<vmem>>)
    %c6_i32 = arith.constant 6 : i32
    %c0_i32_24 = arith.constant 0 : i32
    %c0_i32_25 = arith.constant 0 : i32
    %27 = tpu.memref_slice %arg3[%c0_i32_24, %c0_i32_25] : memref<50x16xf32, #tpu.memory_space<any>> -> memref<1x16xf32, #tpu.memory_space<any>>
    %c30_i32 = arith.constant 30 : i32
    %c0_i32_26 = arith.constant 0 : i32
    %28 = tpu.memref_slice %arg10[%c30_i32, %c0_i32_26] : memref<32x16xf32, #tpu.memory_space<vmem>> -> memref<1x16xf32, #tpu.memory_space<vmem>>
    %29 = tpu.memref_slice %arg13[%c6_i32] : memref<8x!tpu.dma_semaphore, #tpu.memory_space<semaphore_mem>> -> memref<1x!tpu.dma_semaphore, #tpu.memory_space<semaphore_mem>>
    %30 = tpu.memref_squeeze %29 : memref<1x!tpu.dma_semaphore, #tpu.memory_space<semaphore_mem>> -> memref<!tpu.dma_semaphore, #tpu.memory_space<semaphore_mem>>
    tpu.wait_dma2 semaphore(%30 : memref<!tpu.dma_semaphore, #tpu.memory_space<semaphore_mem>>) src(%27 : memref<1x16xf32, #tpu.memory_space<any>>) dst(%28 : memref<1x16xf32, #tpu.memory_space<vmem>>)
    %c7_i32 = arith.constant 7 : i32
    %c0_i32_27 = arith.constant 0 : i32
    %c0_i32_28 = arith.constant 0 : i32
    %31 = tpu.memref_slice %arg3[%c0_i32_27, %c0_i32_28] : memref<50x16xf32, #tpu.memory_space<any>> -> memref<1x16xf32, #tpu.memory_space<any>>
    %c31_i32 = arith.constant 31 : i32
    %c0_i32_29 = arith.constant 0 : i32
    %32 = tpu.memref_slice %arg10[%c31_i32, %c0_i32_29] : memref<32x16xf32, #tpu.memory_space<vmem>> -> memref<1x16xf32, #tpu.memory_space<vmem>>
    %33 = tpu.memref_slice %arg13[%c7_i32] : memref<8x!tpu.dma_semaphore, #tpu.memory_space<semaphore_mem>> -> memref<1x!tpu.dma_semaphore, #tpu.memory_space<semaphore_mem>>
    %34 = tpu.memref_squeeze %33 : memref<1x!tpu.dma_semaphore, #tpu.memory_space<semaphore_mem>> -> memref<!tpu.dma_semaphore, #tpu.memory_space<semaphore_mem>>
    tpu.wait_dma2 semaphore(%34 : memref<!tpu.dma_semaphore, #tpu.memory_space<semaphore_mem>>) src(%31 : memref<1x16xf32, #tpu.memory_space<any>>) dst(%32 : memref<1x16xf32, #tpu.memory_space<vmem>>)
    %c0 = arith.constant 0 : index
    %c0_30 = arith.constant 0 : index
    %35 = vector.load %arg10[%c0, %c0_30] : memref<32x16xf32, #tpu.memory_space<vmem>>, vector<32x16xf32>
    %36 = arith.truncf %35 : vector<32x16xf32> to vector<32x16xbf16>
    %c0_31 = arith.constant 0 : index
    %c0_32 = arith.constant 0 : index
    %37 = vector.load %arg4[%c0_31, %c0_32] : memref<16x192xbf16, #tpu.memory_space<vmem>>, vector<16x192xbf16>
    %cst = arith.constant dense<0.000000e+00> : vector<32x192xf32>
    %38 = tpu.matmul %36, %37, %cst {dimension_numbers = #tpu.dot_dimension_numbers<[1], [0], [0], [1], [0, 0, 1, 1], [], []>} : vector<32x16xbf16>, vector<16x192xbf16>, vector<32x192xf32> -> vector<32x192xf32>
    %c0_33 = arith.constant 0 : index
    %c0_34 = arith.constant 0 : index
    %39 = vector.load %arg5[%c0_33, %c0_34] : memref<1x192xf32, #tpu.memory_space<vmem>>, vector<1x192xf32>
    %40 = vector.broadcast %39 : vector<1x192xf32> to vector<32x192xf32>
    %41 = arith.addf %38, %40 : vector<32x192xf32>
    %42 = vector.shape_cast %41 : vector<32x192xf32> to vector<8x4x192xf32>
    %c0_35 = arith.constant 0 : index
    %c0_36 = arith.constant 0 : index
    %c0_37 = arith.constant 0 : index
    %43 = vector.load %arg11[%c0_35, %c0_36, %c0_37] : memref<8x4x192xf32, #tpu.memory_space<vmem>>, vector<8x4x192xf32>
    tpu.vector_store %arg11[%c0_35, %c0_36, %c0_37], %42 {strides = array<i32>} : memref<8x4x192xf32, #tpu.memory_space<vmem>>, vector<8x4x192xf32>,
    %c0_38 = arith.constant 0 : index
    %c0_39 = arith.constant 0 : index
    %c0_40 = arith.constant 0 : index
    %44 = vector.load %arg2[%c0_38, %c0_39, %c0_40] : memref<1x4x1xi32, #tpu.memory_space<vmem>>, vector<1x4x1xi32>
    %45 = vector.shape_cast %44 : vector<1x4x1xi32> to vector<4x1xi32>
    %c0_41 = arith.constant 0 : index
    %c0_42 = arith.constant 0 : index
    %46 = vector.load %arg6[%c0_41, %c0_42] : memref<64x192xf32, #tpu.memory_space<vmem>>, vector<64x192xf32>
    %c0_43 = arith.constant 0 : index
    %c0_44 = arith.constant 0 : index
    %47 = vector.load %arg7[%c0_43, %c0_44] : memref<1x192xf32, #tpu.memory_space<vmem>>, vector<1x192xf32>
    %cst_45 = arith.constant 0.000000e+00 : f32
    %48 = vector.broadcast %cst_45 : f32 to vector<4x32xf32>
    %c0_i32_46 = arith.constant 0 : i32
    %c7_i32_47 = arith.constant 7 : i32
    %49 = arith.subi %c7_i32_47, %c0_i32_46 : i32
    %50 = arith.index_cast %c0_i32_46 : i32 to index
    %c0_48 = arith.constant 0 : index
    %c0_49 = arith.constant 0 : index
    %51 = vector.load %arg11[%50, %c0_48, %c0_49] : memref<8x4x192xf32, #tpu.memory_space<vmem>>, vector<1x4x192xf32>
    %52 = vector.shape_cast %51 : vector<1x4x192xf32> to vector<4x192xf32>
    %53 = arith.index_cast %49 : i32 to index
    %c0_50 = arith.constant 0 : index
    %c0_51 = arith.constant 0 : index
    %54 = vector.load %arg11[%53, %c0_50, %c0_51] : memref<8x4x192xf32, #tpu.memory_space<vmem>>, vector<1x4x192xf32>
    %55 = vector.shape_cast %54 : vector<1x4x192xf32> to vector<4x192xf32>
    %56 = tpu.concatenate %48, %48 in 1 : vector<4x32xf32>, vector<4x32xf32> -> vector<4x64xf32>
    %cst_52 = arith.constant dense<0.000000e+00> : vector<4x192xf32>
    %57 = tpu.matmul %56, %46, %cst_52 {dimension_numbers = #tpu.dot_dimension_numbers<[1], [0], [0], [1], [0, 0, 1, 1], [], []>} : vector<4x64xf32>, vector<64x192xf32>, vector<4x192xf32> -> vector<4x192xf32>
    %58 = vector.broadcast %47 : vector<1x192xf32> to vector<4x192xf32>
    %59 = arith.addf %57, %58 : vector<4x192xf32>
    %60 = vector.extract_strided_slice %52 {offsets = [0, 0], sizes = [4, 64], strides = [1, 1]} : vector<4x192xf32> to vector<4x64xf32>
    %61 = vector.extract_strided_slice %59 {offsets = [0, 0], sizes = [4, 64], strides = [1, 1]} : vector<4x192xf32> to vector<4x64xf32>
    %62 = arith.addf %60, %61 : vector<4x64xf32>
    %63 = arith.negf %62 : vector<4x64xf32>
    %64 = math.exp %63 : vector<4x64xf32>
    %cst_53 = arith.constant 1.000000e+00 : f32
    %65 = vector.broadcast %cst_53 : f32 to vector<4x64xf32>
    %66 = arith.addf %65, %64 : vector<4x64xf32>
    %67 = arith.divf %65, %66 : vector<4x64xf32>
    %68 = vector.extract_strided_slice %52 {offsets = [0, 64], sizes = [4, 32], strides = [1, 1]} : vector<4x192xf32> to vector<4x32xf32>
    %69 = vector.extract_strided_slice %67 {offsets = [0, 0], sizes = [4, 32], strides = [1, 1]} : vector<4x64xf32> to vector<4x32xf32>
    %70 = vector.extract_strided_slice %59 {offsets = [0, 64], sizes = [4, 32], strides = [1, 1]} : vector<4x192xf32> to vector<4x32xf32>
    %71 = arith.mulf %69, %70 : vector<4x32xf32>
    %72 = arith.addf %68, %71 : vector<4x32xf32>
    %73 = math.tanh %72 : vector<4x32xf32>
    %74 = vector.extract_strided_slice %67 {offsets = [0, 32], sizes = [4, 32], strides = [1, 1]} : vector<4x64xf32> to vector<4x32xf32>
    %cst_54 = arith.constant 1.000000e+00 : f32
    %75 = vector.broadcast %cst_54 : f32 to vector<4x32xf32>
    %76 = arith.subf %75, %74 : vector<4x32xf32>
    %77 = arith.mulf %76, %73 : vector<4x32xf32>
    %78 = arith.mulf %74, %48 : vector<4x32xf32>
    %79 = arith.addf %77, %78 : vector<4x32xf32>
    %80 = vector.extract_strided_slice %55 {offsets = [0, 96], sizes = [4, 64], strides = [1, 1]} : vector<4x192xf32> to vector<4x64xf32>
    %81 = vector.extract_strided_slice %59 {offsets = [0, 96], sizes = [4, 64], strides = [1, 1]} : vector<4x192xf32> to vector<4x64xf32>
    %82 = arith.addf %80, %81 : vector<4x64xf32>
    %83 = arith.negf %82 : vector<4x64xf32>
    %84 = math.exp %83 : vector<4x64xf32>
    %cst_55 = arith.constant 1.000000e+00 : f32
    %85 = vector.broadcast %cst_55 : f32 to vector<4x64xf32>
    %86 = arith.addf %85, %84 : vector<4x64xf32>
    %87 = arith.divf %85, %86 : vector<4x64xf32>
    %88 = vector.extract_strided_slice %55 {offsets = [0, 160], sizes = [4, 32], strides = [1, 1]} : vector<4x192xf32> to vector<4x32xf32>
    %89 = vector.extract_strided_slice %87 {offsets = [0, 0], sizes = [4, 32], strides = [1, 1]} : vector<4x64xf32> to vector<4x32xf32>
    %90 = vector.extract_strided_slice %59 {offsets = [0, 160], sizes = [4, 32], strides = [1, 1]} : vector<4x192xf32> to vector<4x32xf32>
    %91 = arith.mulf %89, %90 : vector<4x32xf32>
    %92 = arith.addf %88, %91 : vector<4x32xf32>
    %93 = math.tanh %92 : vector<4x32xf32>
    %94 = vector.extract_strided_slice %87 {offsets = [0, 32], sizes = [4, 32], strides = [1, 1]} : vector<4x64xf32> to vector<4x32xf32>
    %cst_56 = arith.constant 1.000000e+00 : f32
    %95 = vector.broadcast %cst_56 : f32 to vector<4x32xf32>
    %96 = arith.subf %95, %94 : vector<4x32xf32>
    %97 = arith.mulf %96, %93 : vector<4x32xf32>
    %98 = arith.mulf %94, %48 : vector<4x32xf32>
    %99 = arith.addf %97, %98 : vector<4x32xf32>
    %100 = vector.broadcast %c0_i32_46 : i32 to vector<4x1xi32>
    %101 = arith.cmpi slt, %100, %45 : vector<4x1xi32>
    %102 = vector.broadcast %49 : i32 to vector<4x1xi32>
    %103 = arith.cmpi slt, %102, %45 : vector<4x1xi32>
    %104 = vector.shape_cast %101 : vector<4x1xi1> to vector<4x1xi1>
    %105 = vector.broadcast %104 : vector<4x1xi1> to vector<4x32xi1>
    %106 = arith.select %105, %79, %48 : vector<4x32xi1>, vector<4x32xf32>
    %107 = vector.shape_cast %103 : vector<4x1xi1> to vector<4x1xi1>
    %108 = vector.broadcast %107 : vector<4x1xi1> to vector<4x32xi1>
    %109 = arith.select %108, %99, %48 : vector<4x32xi1>, vector<4x32xf32>
    %cst_57 = arith.constant 0.000000e+00 : f32
    %110 = vector.shape_cast %101 : vector<4x1xi1> to vector<4x1xi1>
    %111 = vector.broadcast %110 : vector<4x1xi1> to vector<4x32xi1>
    %112 = vector.broadcast %cst_57 : f32 to vector<4x32xf32>
    %113 = arith.select %111, %106, %112 : vector<4x32xi1>, vector<4x32xf32>
    %114 = vector.extract_strided_slice %113 {offsets = [0, 0], sizes = [1, 32], strides = [1, 1]} : vector<4x32xf32> to vector<1x32xf32>
    %115 = vector.extract_strided_slice %113 {offsets = [1, 0], sizes = [1, 32], strides = [1, 1]} : vector<4x32xf32> to vector<1x32xf32>
    %116 = vector.extract_strided_slice %113 {offsets = [2, 0], sizes = [1, 32], strides = [1, 1]} : vector<4x32xf32> to vector<1x32xf32>
    %117 = vector.extract_strided_slice %113 {offsets = [3, 0], sizes = [1, 32], strides = [1, 1]} : vector<4x32xf32> to vector<1x32xf32>
    %118 = tpu.concatenate %114, %115, %116, %117 in 1 : vector<1x32xf32>, vector<1x32xf32>, vector<1x32xf32>, vector<1x32xf32> -> vector<1x128xf32>
    %119 = arith.index_cast %c0_i32_46 : i32 to index
    %c0_58 = arith.constant 0 : index
    %120 = vector.load %arg8[%119, %c0_58] : memref<8x128xf32, #tpu.memory_space<vmem>>, vector<1x128xf32>
    tpu.vector_store %arg8[%119, %c0_58], %118 {strides = array<i32>} : memref<8x128xf32, #tpu.memory_space<vmem>>, vector<1x128xf32>,
    %cst_59 = arith.constant 0.000000e+00 : f32
    %121 = vector.shape_cast %103 : vector<4x1xi1> to vector<4x1xi1>
    %122 = vector.broadcast %121 : vector<4x1xi1> to vector<4x32xi1>
    %123 = vector.broadcast %cst_59 : f32 to vector<4x32xf32>
    %124 = arith.select %122, %109, %123 : vector<4x32xi1>, vector<4x32xf32>
    %125 = vector.extract_strided_slice %124 {offsets = [0, 0], sizes = [1, 32], strides = [1, 1]} : vector<4x32xf32> to vector<1x32xf32>
    %126 = vector.extract_strided_slice %124 {offsets = [1, 0], sizes = [1, 32], strides = [1, 1]} : vector<4x32xf32> to vector<1x32xf32>
    %127 = vector.extract_strided_slice %124 {offsets = [2, 0], sizes = [1, 32], strides = [1, 1]} : vector<4x32xf32> to vector<1x32xf32>
    %128 = vector.extract_strided_slice %124 {offsets = [3, 0], sizes = [1, 32], strides = [1, 1]} : vector<4x32xf32> to vector<1x32xf32>
    %129 = tpu.concatenate %125, %126, %127, %128 in 1 : vector<1x32xf32>, vector<1x32xf32>, vector<1x32xf32>, vector<1x32xf32> -> vector<1x128xf32>
    %130 = arith.index_cast %49 : i32 to index
    %c0_60 = arith.constant 0 : index
    %131 = vector.load %arg12[%130, %c0_60] : memref<8x128xf32, #tpu.memory_space<vmem>>, vector<1x128xf32>
    tpu.vector_store %arg12[%130, %c0_60], %129 {strides = array<i32>} : memref<8x128xf32, #tpu.memory_space<vmem>>, vector<1x128xf32>,
    %c1_i32_61 = arith.constant 1 : i32
    %c7_i32_62 = arith.constant 7 : i32
    %132 = arith.subi %c7_i32_62, %c1_i32_61 : i32
    %133 = arith.index_cast %c1_i32_61 : i32 to index
    %c0_63 = arith.constant 0 : index
    %c0_64 = arith.constant 0 : index
    %134 = vector.load %arg11[%133, %c0_63, %c0_64] : memref<8x4x192xf32, #tpu.memory_space<vmem>>, vector<1x4x192xf32>
    %135 = vector.shape_cast %134 : vector<1x4x192xf32> to vector<4x192xf32>
    %136 = arith.index_cast %132 : i32 to index
    %c0_65 = arith.constant 0 : index
    %c0_66 = arith.constant 0 : index
    %137 = vector.load %arg11[%136, %c0_65, %c0_66] : memref<8x4x192xf32, #tpu.memory_space<vmem>>, vector<1x4x192xf32>
    %138 = vector.shape_cast %137 : vector<1x4x192xf32> to vector<4x192xf32>
    %139 = tpu.concatenate %106, %109 in 1 : vector<4x32xf32>, vector<4x32xf32> -> vector<4x64xf32>
    %cst_67 = arith.constant dense<0.000000e+00> : vector<4x192xf32>
    %140 = tpu.matmul %139, %46, %cst_67 {dimension_numbers = #tpu.dot_dimension_numbers<[1], [0], [0], [1], [0, 0, 1, 1], [], []>} : vector<4x64xf32>, vector<64x192xf32>, vector<4x192xf32> -> vector<4x192xf32>
    %141 = vector.broadcast %47 : vector<1x192xf32> to vector<4x192xf32>
    %142 = arith.addf %140, %141 : vector<4x192xf32>
    %143 = vector.extract_strided_slice %135 {offsets = [0, 0], sizes = [4, 64], strides = [1, 1]} : vector<4x192xf32> to vector<4x64xf32>
    %144 = vector.extract_strided_slice %142 {offsets = [0, 0], sizes = [4, 64], strides = [1, 1]} : vector<4x192xf32> to vector<4x64xf32>
    %145 = arith.addf %143, %144 : vector<4x64xf32>
    %146 = arith.negf %145 : vector<4x64xf32>
    %147 = math.exp %146 : vector<4x64xf32>
    %cst_68 = arith.constant 1.000000e+00 : f32
    %148 = vector.broadcast %cst_68 : f32 to vector<4x64xf32>
    %149 = arith.addf %148, %147 : vector<4x64xf32>
    %150 = arith.divf %148, %149 : vector<4x64xf32>
    %151 = vector.extract_strided_slice %135 {offsets = [0, 64], sizes = [4, 32], strides = [1, 1]} : vector<4x192xf32> to vector<4x32xf32>
    %152 = vector.extract_strided_slice %150 {offsets = [0, 0], sizes = [4, 32], strides = [1, 1]} : vector<4x64xf32> to vector<4x32xf32>
    %153 = vector.extract_strided_slice %142 {offsets = [0, 64], sizes = [4, 32], strides = [1, 1]} : vector<4x192xf32> to vector<4x32xf32>
    %154 = arith.mulf %152, %153 : vector<4x32xf32>
    %155 = arith.addf %151, %154 : vector<4x32xf32>
    %156 = math.tanh %155 : vector<4x32xf32>
    %157 = vector.extract_strided_slice %150 {offsets = [0, 32], sizes = [4, 32], strides = [1, 1]} : vector<4x64xf32> to vector<4x32xf32>
    %cst_69 = arith.constant 1.000000e+00 : f32
    %158 = vector.broadcast %cst_69 : f32 to vector<4x32xf32>
    %159 = arith.subf %158, %157 : vector<4x32xf32>
    %160 = arith.mulf %159, %156 : vector<4x32xf32>
    %161 = arith.mulf %157, %106 : vector<4x32xf32>
    %162 = arith.addf %160, %161 : vector<4x32xf32>
    %163 = vector.extract_strided_slice %138 {offsets = [0, 96], sizes = [4, 64], strides = [1, 1]} : vector<4x192xf32> to vector<4x64xf32>
    %164 = vector.extract_strided_slice %142 {offsets = [0, 96], sizes = [4, 64], strides = [1, 1]} : vector<4x192xf32> to vector<4x64xf32>
    %165 = arith.addf %163, %164 : vector<4x64xf32>
    %166 = arith.negf %165 : vector<4x64xf32>
    %167 = math.exp %166 : vector<4x64xf32>
    %cst_70 = arith.constant 1.000000e+00 : f32
    %168 = vector.broadcast %cst_70 : f32 to vector<4x64xf32>
    %169 = arith.addf %168, %167 : vector<4x64xf32>
    %170 = arith.divf %168, %169 : vector<4x64xf32>
    %171 = vector.extract_strided_slice %138 {offsets = [0, 160], sizes = [4, 32], strides = [1, 1]} : vector<4x192xf32> to vector<4x32xf32>
    %172 = vector.extract_strided_slice %170 {offsets = [0, 0], sizes = [4, 32], strides = [1, 1]} : vector<4x64xf32> to vector<4x32xf32>
    %173 = vector.extract_strided_slice %142 {offsets = [0, 160], sizes = [4, 32], strides = [1, 1]} : vector<4x192xf32> to vector<4x32xf32>
    %174 = arith.mulf %172, %173 : vector<4x32xf32>
    %175 = arith.addf %171, %174 : vector<4x32xf32>
    %176 = math.tanh %175 : vector<4x32xf32>
    %177 = vector.extract_strided_slice %170 {offsets = [0, 32], sizes = [4, 32], strides = [1, 1]} : vector<4x64xf32> to vector<4x32xf32>
    %cst_71 = arith.constant 1.000000e+00 : f32
    %178 = vector.broadcast %cst_71 : f32 to vector<4x32xf32>
    %179 = arith.subf %178, %177 : vector<4x32xf32>
    %180 = arith.mulf %179, %176 : vector<4x32xf32>
    %181 = arith.mulf %177, %109 : vector<4x32xf32>
    %182 = arith.addf %180, %181 : vector<4x32xf32>
    %183 = vector.broadcast %c1_i32_61 : i32 to vector<4x1xi32>
    %184 = arith.cmpi slt, %183, %45 : vector<4x1xi32>
    %185 = vector.broadcast %132 : i32 to vector<4x1xi32>
    %186 = arith.cmpi slt, %185, %45 : vector<4x1xi32>
    %187 = vector.shape_cast %184 : vector<4x1xi1> to vector<4x1xi1>
    %188 = vector.broadcast %187 : vector<4x1xi1> to vector<4x32xi1>
    %189 = arith.select %188, %162, %106 : vector<4x32xi1>, vector<4x32xf32>
    %190 = vector.shape_cast %186 : vector<4x1xi1> to vector<4x1xi1>
    %191 = vector.broadcast %190 : vector<4x1xi1> to vector<4x32xi1>
    %192 = arith.select %191, %182, %109 : vector<4x32xi1>, vector<4x32xf32>
    %cst_72 = arith.constant 0.000000e+00 : f32
    %193 = vector.shape_cast %184 : vector<4x1xi1> to vector<4x1xi1>
    %194 = vector.broadcast %193 : vector<4x1xi1> to vector<4x32xi1>
    %195 = vector.broadcast %cst_72 : f32 to vector<4x32xf32>
    %196 = arith.select %194, %189, %195 : vector<4x32xi1>, vector<4x32xf32>
    %197 = vector.extract_strided_slice %196 {offsets = [0, 0], sizes = [1, 32], strides = [1, 1]} : vector<4x32xf32> to vector<1x32xf32>
    %198 = vector.extract_strided_slice %196 {offsets = [1, 0], sizes = [1, 32], strides = [1, 1]} : vector<4x32xf32> to vector<1x32xf32>
    %199 = vector.extract_strided_slice %196 {offsets = [2, 0], sizes = [1, 32], strides = [1, 1]} : vector<4x32xf32> to vector<1x32xf32>
    %200 = vector.extract_strided_slice %196 {offsets = [3, 0], sizes = [1, 32], strides = [1, 1]} : vector<4x32xf32> to vector<1x32xf32>
    %201 = tpu.concatenate %197, %198, %199, %200 in 1 : vector<1x32xf32>, vector<1x32xf32>, vector<1x32xf32>, vector<1x32xf32> -> vector<1x128xf32>
    %202 = arith.index_cast %c1_i32_61 : i32 to index
    %c0_73 = arith.constant 0 : index
    %203 = vector.load %arg8[%202, %c0_73] : memref<8x128xf32, #tpu.memory_space<vmem>>, vector<1x128xf32>
    tpu.vector_store %arg8[%202, %c0_73], %201 {strides = array<i32>} : memref<8x128xf32, #tpu.memory_space<vmem>>, vector<1x128xf32>,
    %cst_74 = arith.constant 0.000000e+00 : f32
    %204 = vector.shape_cast %186 : vector<4x1xi1> to vector<4x1xi1>
    %205 = vector.broadcast %204 : vector<4x1xi1> to vector<4x32xi1>
    %206 = vector.broadcast %cst_74 : f32 to vector<4x32xf32>
    %207 = arith.select %205, %192, %206 : vector<4x32xi1>, vector<4x32xf32>
    %208 = vector.extract_strided_slice %207 {offsets = [0, 0], sizes = [1, 32], strides = [1, 1]} : vector<4x32xf32> to vector<1x32xf32>
    %209 = vector.extract_strided_slice %207 {offsets = [1, 0], sizes = [1, 32], strides = [1, 1]} : vector<4x32xf32> to vector<1x32xf32>
    %210 = vector.extract_strided_slice %207 {offsets = [2, 0], sizes = [1, 32], strides = [1, 1]} : vector<4x32xf32> to vector<1x32xf32>
    %211 = vector.extract_strided_slice %207 {offsets = [3, 0], sizes = [1, 32], strides = [1, 1]} : vector<4x32xf32> to vector<1x32xf32>
    %212 = tpu.concatenate %208, %209, %210, %211 in 1 : vector<1x32xf32>, vector<1x32xf32>, vector<1x32xf32>, vector<1x32xf32> -> vector<1x128xf32>
    %213 = arith.index_cast %132 : i32 to index
    %c0_75 = arith.constant 0 : index
    %214 = vector.load %arg12[%213, %c0_75] : memref<8x128xf32, #tpu.memory_space<vmem>>, vector<1x128xf32>
    tpu.vector_store %arg12[%213, %c0_75], %212 {strides = array<i32>} : memref<8x128xf32, #tpu.memory_space<vmem>>, vector<1x128xf32>,
    %c2_i32_76 = arith.constant 2 : i32
    %c7_i32_77 = arith.constant 7 : i32
    %215 = arith.subi %c7_i32_77, %c2_i32_76 : i32
    %216 = arith.index_cast %c2_i32_76 : i32 to index
    %c0_78 = arith.constant 0 : index
    %c0_79 = arith.constant 0 : index
    %217 = vector.load %arg11[%216, %c0_78, %c0_79] : memref<8x4x192xf32, #tpu.memory_space<vmem>>, vector<1x4x192xf32>
    %218 = vector.shape_cast %217 : vector<1x4x192xf32> to vector<4x192xf32>
    %219 = arith.index_cast %215 : i32 to index
    %c0_80 = arith.constant 0 : index
    %c0_81 = arith.constant 0 : index
    %220 = vector.load %arg11[%219, %c0_80, %c0_81] : memref<8x4x192xf32, #tpu.memory_space<vmem>>, vector<1x4x192xf32>
    %221 = vector.shape_cast %220 : vector<1x4x192xf32> to vector<4x192xf32>
    %222 = tpu.concatenate %189, %192 in 1 : vector<4x32xf32>, vector<4x32xf32> -> vector<4x64xf32>
    %cst_82 = arith.constant dense<0.000000e+00> : vector<4x192xf32>
    %223 = tpu.matmul %222, %46, %cst_82 {dimension_numbers = #tpu.dot_dimension_numbers<[1], [0], [0], [1], [0, 0, 1, 1], [], []>} : vector<4x64xf32>, vector<64x192xf32>, vector<4x192xf32> -> vector<4x192xf32>
    %224 = vector.broadcast %47 : vector<1x192xf32> to vector<4x192xf32>
    %225 = arith.addf %223, %224 : vector<4x192xf32>
    %226 = vector.extract_strided_slice %218 {offsets = [0, 0], sizes = [4, 64], strides = [1, 1]} : vector<4x192xf32> to vector<4x64xf32>
    %227 = vector.extract_strided_slice %225 {offsets = [0, 0], sizes = [4, 64], strides = [1, 1]} : vector<4x192xf32> to vector<4x64xf32>
    %228 = arith.addf %226, %227 : vector<4x64xf32>
    %229 = arith.negf %228 : vector<4x64xf32>
    %230 = math.exp %229 : vector<4x64xf32>
    %cst_83 = arith.constant 1.000000e+00 : f32
    %231 = vector.broadcast %cst_83 : f32 to vector<4x64xf32>
    %232 = arith.addf %231, %230 : vector<4x64xf32>
    %233 = arith.divf %231, %232 : vector<4x64xf32>
    %234 = vector.extract_strided_slice %218 {offsets = [0, 64], sizes = [4, 32], strides = [1, 1]} : vector<4x192xf32> to vector<4x32xf32>
    %235 = vector.extract_strided_slice %233 {offsets = [0, 0], sizes = [4, 32], strides = [1, 1]} : vector<4x64xf32> to vector<4x32xf32>
    %236 = vector.extract_strided_slice %225 {offsets = [0, 64], sizes = [4, 32], strides = [1, 1]} : vector<4x192xf32> to vector<4x32xf32>
    %237 = arith.mulf %235, %236 : vector<4x32xf32>
    %238 = arith.addf %234, %237 : vector<4x32xf32>
    %239 = math.tanh %238 : vector<4x32xf32>
    %240 = vector.extract_strided_slice %233 {offsets = [0, 32], sizes = [4, 32], strides = [1, 1]} : vector<4x64xf32> to vector<4x32xf32>
    %cst_84 = arith.constant 1.000000e+00 : f32
    %241 = vector.broadcast %cst_84 : f32 to vector<4x32xf32>
    %242 = arith.subf %241, %240 : vector<4x32xf32>
    %243 = arith.mulf %242, %239 : vector<4x32xf32>
    %244 = arith.mulf %240, %189 : vector<4x32xf32>
    %245 = arith.addf %243, %244 : vector<4x32xf32>
    %246 = vector.extract_strided_slice %221 {offsets = [0, 96], sizes = [4, 64], strides = [1, 1]} : vector<4x192xf32> to vector<4x64xf32>
    %247 = vector.extract_strided_slice %225 {offsets = [0, 96], sizes = [4, 64], strides = [1, 1]} : vector<4x192xf32> to vector<4x64xf32>
    %248 = arith.addf %246, %247 : vector<4x64xf32>
    %249 = arith.negf %248 : vector<4x64xf32>
    %250 = math.exp %249 : vector<4x64xf32>
    %cst_85 = arith.constant 1.000000e+00 : f32
    %251 = vector.broadcast %cst_85 : f32 to vector<4x64xf32>
    %252 = arith.addf %251, %250 : vector<4x64xf32>
    %253 = arith.divf %251, %252 : vector<4x64xf32>
    %254 = vector.extract_strided_slice %221 {offsets = [0, 160], sizes = [4, 32], strides = [1, 1]} : vector<4x192xf32> to vector<4x32xf32>
    %255 = vector.extract_strided_slice %253 {offsets = [0, 0], sizes = [4, 32], strides = [1, 1]} : vector<4x64xf32> to vector<4x32xf32>
    %256 = vector.extract_strided_slice %225 {offsets = [0, 160], sizes = [4, 32], strides = [1, 1]} : vector<4x192xf32> to vector<4x32xf32>
    %257 = arith.mulf %255, %256 : vector<4x32xf32>
    %258 = arith.addf %254, %257 : vector<4x32xf32>
    %259 = math.tanh %258 : vector<4x32xf32>
    %260 = vector.extract_strided_slice %253 {offsets = [0, 32], sizes = [4, 32], strides = [1, 1]} : vector<4x64xf32> to vector<4x32xf32>
    %cst_86 = arith.constant 1.000000e+00 : f32
    %261 = vector.broadcast %cst_86 : f32 to vector<4x32xf32>
    %262 = arith.subf %261, %260 : vector<4x32xf32>
    %263 = arith.mulf %262, %259 : vector<4x32xf32>
    %264 = arith.mulf %260, %192 : vector<4x32xf32>
    %265 = arith.addf %263, %264 : vector<4x32xf32>
    %266 = vector.broadcast %c2_i32_76 : i32 to vector<4x1xi32>
    %267 = arith.cmpi slt, %266, %45 : vector<4x1xi32>
    %268 = vector.broadcast %215 : i32 to vector<4x1xi32>
    %269 = arith.cmpi slt, %268, %45 : vector<4x1xi32>
    %270 = vector.shape_cast %267 : vector<4x1xi1> to vector<4x1xi1>
    %271 = vector.broadcast %270 : vector<4x1xi1> to vector<4x32xi1>
    %272 = arith.select %271, %245, %189 : vector<4x32xi1>, vector<4x32xf32>
    %273 = vector.shape_cast %269 : vector<4x1xi1> to vector<4x1xi1>
    %274 = vector.broadcast %273 : vector<4x1xi1> to vector<4x32xi1>
    %275 = arith.select %274, %265, %192 : vector<4x32xi1>, vector<4x32xf32>
    %cst_87 = arith.constant 0.000000e+00 : f32
    %276 = vector.shape_cast %267 : vector<4x1xi1> to vector<4x1xi1>
    %277 = vector.broadcast %276 : vector<4x1xi1> to vector<4x32xi1>
    %278 = vector.broadcast %cst_87 : f32 to vector<4x32xf32>
    %279 = arith.select %277, %272, %278 : vector<4x32xi1>, vector<4x32xf32>
    %280 = vector.extract_strided_slice %279 {offsets = [0, 0], sizes = [1, 32], strides = [1, 1]} : vector<4x32xf32> to vector<1x32xf32>
    %281 = vector.extract_strided_slice %279 {offsets = [1, 0], sizes = [1, 32], strides = [1, 1]} : vector<4x32xf32> to vector<1x32xf32>
    %282 = vector.extract_strided_slice %279 {offsets = [2, 0], sizes = [1, 32], strides = [1, 1]} : vector<4x32xf32> to vector<1x32xf32>
    %283 = vector.extract_strided_slice %279 {offsets = [3, 0], sizes = [1, 32], strides = [1, 1]} : vector<4x32xf32> to vector<1x32xf32>
    %284 = tpu.concatenate %280, %281, %282, %283 in 1 : vector<1x32xf32>, vector<1x32xf32>, vector<1x32xf32>, vector<1x32xf32> -> vector<1x128xf32>
    %285 = arith.index_cast %c2_i32_76 : i32 to index
    %c0_88 = arith.constant 0 : index
    %286 = vector.load %arg8[%285, %c0_88] : memref<8x128xf32, #tpu.memory_space<vmem>>, vector<1x128xf32>
    tpu.vector_store %arg8[%285, %c0_88], %284 {strides = array<i32>} : memref<8x128xf32, #tpu.memory_space<vmem>>, vector<1x128xf32>,
    %cst_89 = arith.constant 0.000000e+00 : f32
    %287 = vector.shape_cast %269 : vector<4x1xi1> to vector<4x1xi1>
    %288 = vector.broadcast %287 : vector<4x1xi1> to vector<4x32xi1>
    %289 = vector.broadcast %cst_89 : f32 to vector<4x32xf32>
    %290 = arith.select %288, %275, %289 : vector<4x32xi1>, vector<4x32xf32>
    %291 = vector.extract_strided_slice %290 {offsets = [0, 0], sizes = [1, 32], strides = [1, 1]} : vector<4x32xf32> to vector<1x32xf32>
    %292 = vector.extract_strided_slice %290 {offsets = [1, 0], sizes = [1, 32], strides = [1, 1]} : vector<4x32xf32> to vector<1x32xf32>
    %293 = vector.extract_strided_slice %290 {offsets = [2, 0], sizes = [1, 32], strides = [1, 1]} : vector<4x32xf32> to vector<1x32xf32>
    %294 = vector.extract_strided_slice %290 {offsets = [3, 0], sizes = [1, 32], strides = [1, 1]} : vector<4x32xf32> to vector<1x32xf32>
    %295 = tpu.concatenate %291, %292, %293, %294 in 1 : vector<1x32xf32>, vector<1x32xf32>, vector<1x32xf32>, vector<1x32xf32> -> vector<1x128xf32>
    %296 = arith.index_cast %215 : i32 to index
    %c0_90 = arith.constant 0 : index
    %297 = vector.load %arg12[%296, %c0_90] : memref<8x128xf32, #tpu.memory_space<vmem>>, vector<1x128xf32>
    tpu.vector_store %arg12[%296, %c0_90], %295 {strides = array<i32>} : memref<8x128xf32, #tpu.memory_space<vmem>>, vector<1x128xf32>,
    %c3_i32_91 = arith.constant 3 : i32
    %c7_i32_92 = arith.constant 7 : i32
    %298 = arith.subi %c7_i32_92, %c3_i32_91 : i32
    %299 = arith.index_cast %c3_i32_91 : i32 to index
    %c0_93 = arith.constant 0 : index
    %c0_94 = arith.constant 0 : index
    %300 = vector.load %arg11[%299, %c0_93, %c0_94] : memref<8x4x192xf32, #tpu.memory_space<vmem>>, vector<1x4x192xf32>
    %301 = vector.shape_cast %300 : vector<1x4x192xf32> to vector<4x192xf32>
    %302 = arith.index_cast %298 : i32 to index
    %c0_95 = arith.constant 0 : index
    %c0_96 = arith.constant 0 : index
    %303 = vector.load %arg11[%302, %c0_95, %c0_96] : memref<8x4x192xf32, #tpu.memory_space<vmem>>, vector<1x4x192xf32>
    %304 = vector.shape_cast %303 : vector<1x4x192xf32> to vector<4x192xf32>
    %305 = tpu.concatenate %272, %275 in 1 : vector<4x32xf32>, vector<4x32xf32> -> vector<4x64xf32>
    %cst_97 = arith.constant dense<0.000000e+00> : vector<4x192xf32>
    %306 = tpu.matmul %305, %46, %cst_97 {dimension_numbers = #tpu.dot_dimension_numbers<[1], [0], [0], [1], [0, 0, 1, 1], [], []>} : vector<4x64xf32>, vector<64x192xf32>, vector<4x192xf32> -> vector<4x192xf32>
    %307 = vector.broadcast %47 : vector<1x192xf32> to vector<4x192xf32>
    %308 = arith.addf %306, %307 : vector<4x192xf32>
    %309 = vector.extract_strided_slice %301 {offsets = [0, 0], sizes = [4, 64], strides = [1, 1]} : vector<4x192xf32> to vector<4x64xf32>
    %310 = vector.extract_strided_slice %308 {offsets = [0, 0], sizes = [4, 64], strides = [1, 1]} : vector<4x192xf32> to vector<4x64xf32>
    %311 = arith.addf %309, %310 : vector<4x64xf32>
    %312 = arith.negf %311 : vector<4x64xf32>
    %313 = math.exp %312 : vector<4x64xf32>
    %cst_98 = arith.constant 1.000000e+00 : f32
    %314 = vector.broadcast %cst_98 : f32 to vector<4x64xf32>
    %315 = arith.addf %314, %313 : vector<4x64xf32>
    %316 = arith.divf %314, %315 : vector<4x64xf32>
    %317 = vector.extract_strided_slice %301 {offsets = [0, 64], sizes = [4, 32], strides = [1, 1]} : vector<4x192xf32> to vector<4x32xf32>
    %318 = vector.extract_strided_slice %316 {offsets = [0, 0], sizes = [4, 32], strides = [1, 1]} : vector<4x64xf32> to vector<4x32xf32>
    %319 = vector.extract_strided_slice %308 {offsets = [0, 64], sizes = [4, 32], strides = [1, 1]} : vector<4x192xf32> to vector<4x32xf32>
    %320 = arith.mulf %318, %319 : vector<4x32xf32>
    %321 = arith.addf %317, %320 : vector<4x32xf32>
    %322 = math.tanh %321 : vector<4x32xf32>
    %323 = vector.extract_strided_slice %316 {offsets = [0, 32], sizes = [4, 32], strides = [1, 1]} : vector<4x64xf32> to vector<4x32xf32>
    %cst_99 = arith.constant 1.000000e+00 : f32
    %324 = vector.broadcast %cst_99 : f32 to vector<4x32xf32>
    %325 = arith.subf %324, %323 : vector<4x32xf32>
    %326 = arith.mulf %325, %322 : vector<4x32xf32>
    %327 = arith.mulf %323, %272 : vector<4x32xf32>
    %328 = arith.addf %326, %327 : vector<4x32xf32>
    %329 = vector.extract_strided_slice %304 {offsets = [0, 96], sizes = [4, 64], strides = [1, 1]} : vector<4x192xf32> to vector<4x64xf32>
    %330 = vector.extract_strided_slice %308 {offsets = [0, 96], sizes = [4, 64], strides = [1, 1]} : vector<4x192xf32> to vector<4x64xf32>
    %331 = arith.addf %329, %330 : vector<4x64xf32>
    %332 = arith.negf %331 : vector<4x64xf32>
    %333 = math.exp %332 : vector<4x64xf32>
    %cst_100 = arith.constant 1.000000e+00 : f32
    %334 = vector.broadcast %cst_100 : f32 to vector<4x64xf32>
    %335 = arith.addf %334, %333 : vector<4x64xf32>
    %336 = arith.divf %334, %335 : vector<4x64xf32>
    %337 = vector.extract_strided_slice %304 {offsets = [0, 160], sizes = [4, 32], strides = [1, 1]} : vector<4x192xf32> to vector<4x32xf32>
    %338 = vector.extract_strided_slice %336 {offsets = [0, 0], sizes = [4, 32], strides = [1, 1]} : vector<4x64xf32> to vector<4x32xf32>
    %339 = vector.extract_strided_slice %308 {offsets = [0, 160], sizes = [4, 32], strides = [1, 1]} : vector<4x192xf32> to vector<4x32xf32>
    %340 = arith.mulf %338, %339 : vector<4x32xf32>
    %341 = arith.addf %337, %340 : vector<4x32xf32>
    %342 = math.tanh %341 : vector<4x32xf32>
    %343 = vector.extract_strided_slice %336 {offsets = [0, 32], sizes = [4, 32], strides = [1, 1]} : vector<4x64xf32> to vector<4x32xf32>
    %cst_101 = arith.constant 1.000000e+00 : f32
    %344 = vector.broadcast %cst_101 : f32 to vector<4x32xf32>
    %345 = arith.subf %344, %343 : vector<4x32xf32>
    %346 = arith.mulf %345, %342 : vector<4x32xf32>
    %347 = arith.mulf %343, %275 : vector<4x32xf32>
    %348 = arith.addf %346, %347 : vector<4x32xf32>
    %349 = vector.broadcast %c3_i32_91 : i32 to vector<4x1xi32>
    %350 = arith.cmpi slt, %349, %45 : vector<4x1xi32>
    %351 = vector.broadcast %298 : i32 to vector<4x1xi32>
    %352 = arith.cmpi slt, %351, %45 : vector<4x1xi32>
    %353 = vector.shape_cast %350 : vector<4x1xi1> to vector<4x1xi1>
    %354 = vector.broadcast %353 : vector<4x1xi1> to vector<4x32xi1>
    %355 = arith.select %354, %328, %272 : vector<4x32xi1>, vector<4x32xf32>
    %356 = vector.shape_cast %352 : vector<4x1xi1> to vector<4x1xi1>
    %357 = vector.broadcast %356 : vector<4x1xi1> to vector<4x32xi1>
    %358 = arith.select %357, %348, %275 : vector<4x32xi1>, vector<4x32xf32>
    %cst_102 = arith.constant 0.000000e+00 : f32
    %359 = vector.shape_cast %350 : vector<4x1xi1> to vector<4x1xi1>
    %360 = vector.broadcast %359 : vector<4x1xi1> to vector<4x32xi1>
    %361 = vector.broadcast %cst_102 : f32 to vector<4x32xf32>
    %362 = arith.select %360, %355, %361 : vector<4x32xi1>, vector<4x32xf32>
    %363 = vector.extract_strided_slice %362 {offsets = [0, 0], sizes = [1, 32], strides = [1, 1]} : vector<4x32xf32> to vector<1x32xf32>
    %364 = vector.extract_strided_slice %362 {offsets = [1, 0], sizes = [1, 32], strides = [1, 1]} : vector<4x32xf32> to vector<1x32xf32>
    %365 = vector.extract_strided_slice %362 {offsets = [2, 0], sizes = [1, 32], strides = [1, 1]} : vector<4x32xf32> to vector<1x32xf32>
    %366 = vector.extract_strided_slice %362 {offsets = [3, 0], sizes = [1, 32], strides = [1, 1]} : vector<4x32xf32> to vector<1x32xf32>
    %367 = tpu.concatenate %363, %364, %365, %366 in 1 : vector<1x32xf32>, vector<1x32xf32>, vector<1x32xf32>, vector<1x32xf32> -> vector<1x128xf32>
    %368 = arith.index_cast %c3_i32_91 : i32 to index
    %c0_103 = arith.constant 0 : index
    %369 = vector.load %arg8[%368, %c0_103] : memref<8x128xf32, #tpu.memory_space<vmem>>, vector<1x128xf32>
    tpu.vector_store %arg8[%368, %c0_103], %367 {strides = array<i32>} : memref<8x128xf32, #tpu.memory_space<vmem>>, vector<1x128xf32>,
    %cst_104 = arith.constant 0.000000e+00 : f32
    %370 = vector.shape_cast %352 : vector<4x1xi1> to vector<4x1xi1>
    %371 = vector.broadcast %370 : vector<4x1xi1> to vector<4x32xi1>
    %372 = vector.broadcast %cst_104 : f32 to vector<4x32xf32>
    %373 = arith.select %371, %358, %372 : vector<4x32xi1>, vector<4x32xf32>
    %374 = vector.extract_strided_slice %373 {offsets = [0, 0], sizes = [1, 32], strides = [1, 1]} : vector<4x32xf32> to vector<1x32xf32>
    %375 = vector.extract_strided_slice %373 {offsets = [1, 0], sizes = [1, 32], strides = [1, 1]} : vector<4x32xf32> to vector<1x32xf32>
    %376 = vector.extract_strided_slice %373 {offsets = [2, 0], sizes = [1, 32], strides = [1, 1]} : vector<4x32xf32> to vector<1x32xf32>
    %377 = vector.extract_strided_slice %373 {offsets = [3, 0], sizes = [1, 32], strides = [1, 1]} : vector<4x32xf32> to vector<1x32xf32>
    %378 = tpu.concatenate %374, %375, %376, %377 in 1 : vector<1x32xf32>, vector<1x32xf32>, vector<1x32xf32>, vector<1x32xf32> -> vector<1x128xf32>
    %379 = arith.index_cast %298 : i32 to index
    %c0_105 = arith.constant 0 : index
    %380 = vector.load %arg12[%379, %c0_105] : memref<8x128xf32, #tpu.memory_space<vmem>>, vector<1x128xf32>
    tpu.vector_store %arg12[%379, %c0_105], %378 {strides = array<i32>} : memref<8x128xf32, #tpu.memory_space<vmem>>, vector<1x128xf32>,
    %c4_i32_106 = arith.constant 4 : i32
    %c7_i32_107 = arith.constant 7 : i32
    %381 = arith.subi %c7_i32_107, %c4_i32_106 : i32
    %382 = arith.index_cast %c4_i32_106 : i32 to index
    %c0_108 = arith.constant 0 : index
    %c0_109 = arith.constant 0 : index
    %383 = vector.load %arg11[%382, %c0_108, %c0_109] : memref<8x4x192xf32, #tpu.memory_space<vmem>>, vector<1x4x192xf32>
    %384 = vector.shape_cast %383 : vector<1x4x192xf32> to vector<4x192xf32>
    %385 = arith.index_cast %381 : i32 to index
    %c0_110 = arith.constant 0 : index
    %c0_111 = arith.constant 0 : index
    %386 = vector.load %arg11[%385, %c0_110, %c0_111] : memref<8x4x192xf32, #tpu.memory_space<vmem>>, vector<1x4x192xf32>
    %387 = vector.shape_cast %386 : vector<1x4x192xf32> to vector<4x192xf32>
    %388 = tpu.concatenate %355, %358 in 1 : vector<4x32xf32>, vector<4x32xf32> -> vector<4x64xf32>
    %cst_112 = arith.constant dense<0.000000e+00> : vector<4x192xf32>
    %389 = tpu.matmul %388, %46, %cst_112 {dimension_numbers = #tpu.dot_dimension_numbers<[1], [0], [0], [1], [0, 0, 1, 1], [], []>} : vector<4x64xf32>, vector<64x192xf32>, vector<4x192xf32> -> vector<4x192xf32>
    %390 = vector.broadcast %47 : vector<1x192xf32> to vector<4x192xf32>
    %391 = arith.addf %389, %390 : vector<4x192xf32>
    %392 = vector.extract_strided_slice %384 {offsets = [0, 0], sizes = [4, 64], strides = [1, 1]} : vector<4x192xf32> to vector<4x64xf32>
    %393 = vector.extract_strided_slice %391 {offsets = [0, 0], sizes = [4, 64], strides = [1, 1]} : vector<4x192xf32> to vector<4x64xf32>
    %394 = arith.addf %392, %393 : vector<4x64xf32>
    %395 = arith.negf %394 : vector<4x64xf32>
    %396 = math.exp %395 : vector<4x64xf32>
    %cst_113 = arith.constant 1.000000e+00 : f32
    %397 = vector.broadcast %cst_113 : f32 to vector<4x64xf32>
    %398 = arith.addf %397, %396 : vector<4x64xf32>
    %399 = arith.divf %397, %398 : vector<4x64xf32>
    %400 = vector.extract_strided_slice %384 {offsets = [0, 64], sizes = [4, 32], strides = [1, 1]} : vector<4x192xf32> to vector<4x32xf32>
    %401 = vector.extract_strided_slice %399 {offsets = [0, 0], sizes = [4, 32], strides = [1, 1]} : vector<4x64xf32> to vector<4x32xf32>
    %402 = vector.extract_strided_slice %391 {offsets = [0, 64], sizes = [4, 32], strides = [1, 1]} : vector<4x192xf32> to vector<4x32xf32>
    %403 = arith.mulf %401, %402 : vector<4x32xf32>
    %404 = arith.addf %400, %403 : vector<4x32xf32>
    %405 = math.tanh %404 : vector<4x32xf32>
    %406 = vector.extract_strided_slice %399 {offsets = [0, 32], sizes = [4, 32], strides = [1, 1]} : vector<4x64xf32> to vector<4x32xf32>
    %cst_114 = arith.constant 1.000000e+00 : f32
    %407 = vector.broadcast %cst_114 : f32 to vector<4x32xf32>
    %408 = arith.subf %407, %406 : vector<4x32xf32>
    %409 = arith.mulf %408, %405 : vector<4x32xf32>
    %410 = arith.mulf %406, %355 : vector<4x32xf32>
    %411 = arith.addf %409, %410 : vector<4x32xf32>
    %412 = vector.extract_strided_slice %387 {offsets = [0, 96], sizes = [4, 64], strides = [1, 1]} : vector<4x192xf32> to vector<4x64xf32>
    %413 = vector.extract_strided_slice %391 {offsets = [0, 96], sizes = [4, 64], strides = [1, 1]} : vector<4x192xf32> to vector<4x64xf32>
    %414 = arith.addf %412, %413 : vector<4x64xf32>
    %415 = arith.negf %414 : vector<4x64xf32>
    %416 = math.exp %415 : vector<4x64xf32>
    %cst_115 = arith.constant 1.000000e+00 : f32
    %417 = vector.broadcast %cst_115 : f32 to vector<4x64xf32>
    %418 = arith.addf %417, %416 : vector<4x64xf32>
    %419 = arith.divf %417, %418 : vector<4x64xf32>
    %420 = vector.extract_strided_slice %387 {offsets = [0, 160], sizes = [4, 32], strides = [1, 1]} : vector<4x192xf32> to vector<4x32xf32>
    %421 = vector.extract_strided_slice %419 {offsets = [0, 0], sizes = [4, 32], strides = [1, 1]} : vector<4x64xf32> to vector<4x32xf32>
    %422 = vector.extract_strided_slice %391 {offsets = [0, 160], sizes = [4, 32], strides = [1, 1]} : vector<4x192xf32> to vector<4x32xf32>
    %423 = arith.mulf %421, %422 : vector<4x32xf32>
    %424 = arith.addf %420, %423 : vector<4x32xf32>
    %425 = math.tanh %424 : vector<4x32xf32>
    %426 = vector.extract_strided_slice %419 {offsets = [0, 32], sizes = [4, 32], strides = [1, 1]} : vector<4x64xf32> to vector<4x32xf32>
    %cst_116 = arith.constant 1.000000e+00 : f32
    %427 = vector.broadcast %cst_116 : f32 to vector<4x32xf32>
    %428 = arith.subf %427, %426 : vector<4x32xf32>
    %429 = arith.mulf %428, %425 : vector<4x32xf32>
    %430 = arith.mulf %426, %358 : vector<4x32xf32>
    %431 = arith.addf %429, %430 : vector<4x32xf32>
    %432 = vector.broadcast %c4_i32_106 : i32 to vector<4x1xi32>
    %433 = arith.cmpi slt, %432, %45 : vector<4x1xi32>
    %434 = vector.broadcast %381 : i32 to vector<4x1xi32>
    %435 = arith.cmpi slt, %434, %45 : vector<4x1xi32>
    %436 = vector.shape_cast %433 : vector<4x1xi1> to vector<4x1xi1>
    %437 = vector.broadcast %436 : vector<4x1xi1> to vector<4x32xi1>
    %438 = arith.select %437, %411, %355 : vector<4x32xi1>, vector<4x32xf32>
    %439 = vector.shape_cast %435 : vector<4x1xi1> to vector<4x1xi1>
    %440 = vector.broadcast %439 : vector<4x1xi1> to vector<4x32xi1>
    %441 = arith.select %440, %431, %358 : vector<4x32xi1>, vector<4x32xf32>
    %cst_117 = arith.constant 0.000000e+00 : f32
    %442 = vector.shape_cast %433 : vector<4x1xi1> to vector<4x1xi1>
    %443 = vector.broadcast %442 : vector<4x1xi1> to vector<4x32xi1>
    %444 = vector.broadcast %cst_117 : f32 to vector<4x32xf32>
    %445 = arith.select %443, %438, %444 : vector<4x32xi1>, vector<4x32xf32>
    %446 = vector.extract_strided_slice %445 {offsets = [0, 0], sizes = [1, 32], strides = [1, 1]} : vector<4x32xf32> to vector<1x32xf32>
    %447 = vector.extract_strided_slice %445 {offsets = [1, 0], sizes = [1, 32], strides = [1, 1]} : vector<4x32xf32> to vector<1x32xf32>
    %448 = vector.extract_strided_slice %445 {offsets = [2, 0], sizes = [1, 32], strides = [1, 1]} : vector<4x32xf32> to vector<1x32xf32>
    %449 = vector.extract_strided_slice %445 {offsets = [3, 0], sizes = [1, 32], strides = [1, 1]} : vector<4x32xf32> to vector<1x32xf32>
    %450 = tpu.concatenate %446, %447, %448, %449 in 1 : vector<1x32xf32>, vector<1x32xf32>, vector<1x32xf32>, vector<1x32xf32> -> vector<1x128xf32>
    %451 = arith.index_cast %c4_i32_106 : i32 to index
    %c0_118 = arith.constant 0 : index
    %452 = vector.load %arg8[%451, %c0_118] : memref<8x128xf32, #tpu.memory_space<vmem>>, vector<1x128xf32>
    tpu.vector_store %arg8[%451, %c0_118], %450 {strides = array<i32>} : memref<8x128xf32, #tpu.memory_space<vmem>>, vector<1x128xf32>,
    %cst_119 = arith.constant 0.000000e+00 : f32
    %453 = vector.shape_cast %435 : vector<4x1xi1> to vector<4x1xi1>
    %454 = vector.broadcast %453 : vector<4x1xi1> to vector<4x32xi1>
    %455 = vector.broadcast %cst_119 : f32 to vector<4x32xf32>
    %456 = arith.select %454, %441, %455 : vector<4x32xi1>, vector<4x32xf32>
    %457 = vector.extract_strided_slice %456 {offsets = [0, 0], sizes = [1, 32], strides = [1, 1]} : vector<4x32xf32> to vector<1x32xf32>
    %458 = vector.extract_strided_slice %456 {offsets = [1, 0], sizes = [1, 32], strides = [1, 1]} : vector<4x32xf32> to vector<1x32xf32>
    %459 = vector.extract_strided_slice %456 {offsets = [2, 0], sizes = [1, 32], strides = [1, 1]} : vector<4x32xf32> to vector<1x32xf32>
    %460 = vector.extract_strided_slice %456 {offsets = [3, 0], sizes = [1, 32], strides = [1, 1]} : vector<4x32xf32> to vector<1x32xf32>
    %461 = tpu.concatenate %457, %458, %459, %460 in 1 : vector<1x32xf32>, vector<1x32xf32>, vector<1x32xf32>, vector<1x32xf32> -> vector<1x128xf32>
    %462 = arith.index_cast %381 : i32 to index
    %c0_120 = arith.constant 0 : index
    %463 = vector.load %arg12[%462, %c0_120] : memref<8x128xf32, #tpu.memory_space<vmem>>, vector<1x128xf32>
    tpu.vector_store %arg12[%462, %c0_120], %461 {strides = array<i32>} : memref<8x128xf32, #tpu.memory_space<vmem>>, vector<1x128xf32>,
    %c5_i32_121 = arith.constant 5 : i32
    %c7_i32_122 = arith.constant 7 : i32
    %464 = arith.subi %c7_i32_122, %c5_i32_121 : i32
    %465 = arith.index_cast %c5_i32_121 : i32 to index
    %c0_123 = arith.constant 0 : index
    %c0_124 = arith.constant 0 : index
    %466 = vector.load %arg11[%465, %c0_123, %c0_124] : memref<8x4x192xf32, #tpu.memory_space<vmem>>, vector<1x4x192xf32>
    %467 = vector.shape_cast %466 : vector<1x4x192xf32> to vector<4x192xf32>
    %468 = arith.index_cast %464 : i32 to index
    %c0_125 = arith.constant 0 : index
    %c0_126 = arith.constant 0 : index
    %469 = vector.load %arg11[%468, %c0_125, %c0_126] : memref<8x4x192xf32, #tpu.memory_space<vmem>>, vector<1x4x192xf32>
    %470 = vector.shape_cast %469 : vector<1x4x192xf32> to vector<4x192xf32>
    %471 = tpu.concatenate %438, %441 in 1 : vector<4x32xf32>, vector<4x32xf32> -> vector<4x64xf32>
    %cst_127 = arith.constant dense<0.000000e+00> : vector<4x192xf32>
    %472 = tpu.matmul %471, %46, %cst_127 {dimension_numbers = #tpu.dot_dimension_numbers<[1], [0], [0], [1], [0, 0, 1, 1], [], []>} : vector<4x64xf32>, vector<64x192xf32>, vector<4x192xf32> -> vector<4x192xf32>
    %473 = vector.broadcast %47 : vector<1x192xf32> to vector<4x192xf32>
    %474 = arith.addf %472, %473 : vector<4x192xf32>
    %475 = vector.extract_strided_slice %467 {offsets = [0, 0], sizes = [4, 64], strides = [1, 1]} : vector<4x192xf32> to vector<4x64xf32>
    %476 = vector.extract_strided_slice %474 {offsets = [0, 0], sizes = [4, 64], strides = [1, 1]} : vector<4x192xf32> to vector<4x64xf32>
    %477 = arith.addf %475, %476 : vector<4x64xf32>
    %478 = arith.negf %477 : vector<4x64xf32>
    %479 = math.exp %478 : vector<4x64xf32>
    %cst_128 = arith.constant 1.000000e+00 : f32
    %480 = vector.broadcast %cst_128 : f32 to vector<4x64xf32>
    %481 = arith.addf %480, %479 : vector<4x64xf32>
    %482 = arith.divf %480, %481 : vector<4x64xf32>
    %483 = vector.extract_strided_slice %467 {offsets = [0, 64], sizes = [4, 32], strides = [1, 1]} : vector<4x192xf32> to vector<4x32xf32>
    %484 = vector.extract_strided_slice %482 {offsets = [0, 0], sizes = [4, 32], strides = [1, 1]} : vector<4x64xf32> to vector<4x32xf32>
    %485 = vector.extract_strided_slice %474 {offsets = [0, 64], sizes = [4, 32], strides = [1, 1]} : vector<4x192xf32> to vector<4x32xf32>
    %486 = arith.mulf %484, %485 : vector<4x32xf32>
    %487 = arith.addf %483, %486 : vector<4x32xf32>
    %488 = math.tanh %487 : vector<4x32xf32>
    %489 = vector.extract_strided_slice %482 {offsets = [0, 32], sizes = [4, 32], strides = [1, 1]} : vector<4x64xf32> to vector<4x32xf32>
    %cst_129 = arith.constant 1.000000e+00 : f32
    %490 = vector.broadcast %cst_129 : f32 to vector<4x32xf32>
    %491 = arith.subf %490, %489 : vector<4x32xf32>
    %492 = arith.mulf %491, %488 : vector<4x32xf32>
    %493 = arith.mulf %489, %438 : vector<4x32xf32>
    %494 = arith.addf %492, %493 : vector<4x32xf32>
    %495 = vector.extract_strided_slice %470 {offsets = [0, 96], sizes = [4, 64], strides = [1, 1]} : vector<4x192xf32> to vector<4x64xf32>
    %496 = vector.extract_strided_slice %474 {offsets = [0, 96], sizes = [4, 64], strides = [1, 1]} : vector<4x192xf32> to vector<4x64xf32>
    %497 = arith.addf %495, %496 : vector<4x64xf32>
    %498 = arith.negf %497 : vector<4x64xf32>
    %499 = math.exp %498 : vector<4x64xf32>
    %cst_130 = arith.constant 1.000000e+00 : f32
    %500 = vector.broadcast %cst_130 : f32 to vector<4x64xf32>
    %501 = arith.addf %500, %499 : vector<4x64xf32>
    %502 = arith.divf %500, %501 : vector<4x64xf32>
    %503 = vector.extract_strided_slice %470 {offsets = [0, 160], sizes = [4, 32], strides = [1, 1]} : vector<4x192xf32> to vector<4x32xf32>
    %504 = vector.extract_strided_slice %502 {offsets = [0, 0], sizes = [4, 32], strides = [1, 1]} : vector<4x64xf32> to vector<4x32xf32>
    %505 = vector.extract_strided_slice %474 {offsets = [0, 160], sizes = [4, 32], strides = [1, 1]} : vector<4x192xf32> to vector<4x32xf32>
    %506 = arith.mulf %504, %505 : vector<4x32xf32>
    %507 = arith.addf %503, %506 : vector<4x32xf32>
    %508 = math.tanh %507 : vector<4x32xf32>
    %509 = vector.extract_strided_slice %502 {offsets = [0, 32], sizes = [4, 32], strides = [1, 1]} : vector<4x64xf32> to vector<4x32xf32>
    %cst_131 = arith.constant 1.000000e+00 : f32
    %510 = vector.broadcast %cst_131 : f32 to vector<4x32xf32>
    %511 = arith.subf %510, %509 : vector<4x32xf32>
    %512 = arith.mulf %511, %508 : vector<4x32xf32>
    %513 = arith.mulf %509, %441 : vector<4x32xf32>
    %514 = arith.addf %512, %513 : vector<4x32xf32>
    %515 = vector.broadcast %c5_i32_121 : i32 to vector<4x1xi32>
    %516 = arith.cmpi slt, %515, %45 : vector<4x1xi32>
    %517 = vector.broadcast %464 : i32 to vector<4x1xi32>
    %518 = arith.cmpi slt, %517, %45 : vector<4x1xi32>
    %519 = vector.shape_cast %516 : vector<4x1xi1> to vector<4x1xi1>
    %520 = vector.broadcast %519 : vector<4x1xi1> to vector<4x32xi1>
    %521 = arith.select %520, %494, %438 : vector<4x32xi1>, vector<4x32xf32>
    %522 = vector.shape_cast %518 : vector<4x1xi1> to vector<4x1xi1>
    %523 = vector.broadcast %522 : vector<4x1xi1> to vector<4x32xi1>
    %524 = arith.select %523, %514, %441 : vector<4x32xi1>, vector<4x32xf32>
    %cst_132 = arith.constant 0.000000e+00 : f32
    %525 = vector.shape_cast %516 : vector<4x1xi1> to vector<4x1xi1>
    %526 = vector.broadcast %525 : vector<4x1xi1> to vector<4x32xi1>
    %527 = vector.broadcast %cst_132 : f32 to vector<4x32xf32>
    %528 = arith.select %526, %521, %527 : vector<4x32xi1>, vector<4x32xf32>
    %529 = vector.extract_strided_slice %528 {offsets = [0, 0], sizes = [1, 32], strides = [1, 1]} : vector<4x32xf32> to vector<1x32xf32>
    %530 = vector.extract_strided_slice %528 {offsets = [1, 0], sizes = [1, 32], strides = [1, 1]} : vector<4x32xf32> to vector<1x32xf32>
    %531 = vector.extract_strided_slice %528 {offsets = [2, 0], sizes = [1, 32], strides = [1, 1]} : vector<4x32xf32> to vector<1x32xf32>
    %532 = vector.extract_strided_slice %528 {offsets = [3, 0], sizes = [1, 32], strides = [1, 1]} : vector<4x32xf32> to vector<1x32xf32>
    %533 = tpu.concatenate %529, %530, %531, %532 in 1 : vector<1x32xf32>, vector<1x32xf32>, vector<1x32xf32>, vector<1x32xf32> -> vector<1x128xf32>
    %534 = arith.index_cast %c5_i32_121 : i32 to index
    %c0_133 = arith.constant 0 : index
    %535 = vector.load %arg8[%534, %c0_133] : memref<8x128xf32, #tpu.memory_space<vmem>>, vector<1x128xf32>
    tpu.vector_store %arg8[%534, %c0_133], %533 {strides = array<i32>} : memref<8x128xf32, #tpu.memory_space<vmem>>, vector<1x128xf32>,
    %cst_134 = arith.constant 0.000000e+00 : f32
    %536 = vector.shape_cast %518 : vector<4x1xi1> to vector<4x1xi1>
    %537 = vector.broadcast %536 : vector<4x1xi1> to vector<4x32xi1>
    %538 = vector.broadcast %cst_134 : f32 to vector<4x32xf32>
    %539 = arith.select %537, %524, %538 : vector<4x32xi1>, vector<4x32xf32>
    %540 = vector.extract_strided_slice %539 {offsets = [0, 0], sizes = [1, 32], strides = [1, 1]} : vector<4x32xf32> to vector<1x32xf32>
    %541 = vector.extract_strided_slice %539 {offsets = [1, 0], sizes = [1, 32], strides = [1, 1]} : vector<4x32xf32> to vector<1x32xf32>
    %542 = vector.extract_strided_slice %539 {offsets = [2, 0], sizes = [1, 32], strides = [1, 1]} : vector<4x32xf32> to vector<1x32xf32>
    %543 = vector.extract_strided_slice %539 {offsets = [3, 0], sizes = [1, 32], strides = [1, 1]} : vector<4x32xf32> to vector<1x32xf32>
    %544 = tpu.concatenate %540, %541, %542, %543 in 1 : vector<1x32xf32>, vector<1x32xf32>, vector<1x32xf32>, vector<1x32xf32> -> vector<1x128xf32>
    %545 = arith.index_cast %464 : i32 to index
    %c0_135 = arith.constant 0 : index
    %546 = vector.load %arg12[%545, %c0_135] : memref<8x128xf32, #tpu.memory_space<vmem>>, vector<1x128xf32>
    tpu.vector_store %arg12[%545, %c0_135], %544 {strides = array<i32>} : memref<8x128xf32, #tpu.memory_space<vmem>>, vector<1x128xf32>,
    %c6_i32_136 = arith.constant 6 : i32
    %c7_i32_137 = arith.constant 7 : i32
    %547 = arith.subi %c7_i32_137, %c6_i32_136 : i32
    %548 = arith.index_cast %c6_i32_136 : i32 to index
    %c0_138 = arith.constant 0 : index
    %c0_139 = arith.constant 0 : index
    %549 = vector.load %arg11[%548, %c0_138, %c0_139] : memref<8x4x192xf32, #tpu.memory_space<vmem>>, vector<1x4x192xf32>
    %550 = vector.shape_cast %549 : vector<1x4x192xf32> to vector<4x192xf32>
    %551 = arith.index_cast %547 : i32 to index
    %c0_140 = arith.constant 0 : index
    %c0_141 = arith.constant 0 : index
    %552 = vector.load %arg11[%551, %c0_140, %c0_141] : memref<8x4x192xf32, #tpu.memory_space<vmem>>, vector<1x4x192xf32>
    %553 = vector.shape_cast %552 : vector<1x4x192xf32> to vector<4x192xf32>
    %554 = tpu.concatenate %521, %524 in 1 : vector<4x32xf32>, vector<4x32xf32> -> vector<4x64xf32>
    %cst_142 = arith.constant dense<0.000000e+00> : vector<4x192xf32>
    %555 = tpu.matmul %554, %46, %cst_142 {dimension_numbers = #tpu.dot_dimension_numbers<[1], [0], [0], [1], [0, 0, 1, 1], [], []>} : vector<4x64xf32>, vector<64x192xf32>, vector<4x192xf32> -> vector<4x192xf32>
    %556 = vector.broadcast %47 : vector<1x192xf32> to vector<4x192xf32>
    %557 = arith.addf %555, %556 : vector<4x192xf32>
    %558 = vector.extract_strided_slice %550 {offsets = [0, 0], sizes = [4, 64], strides = [1, 1]} : vector<4x192xf32> to vector<4x64xf32>
    %559 = vector.extract_strided_slice %557 {offsets = [0, 0], sizes = [4, 64], strides = [1, 1]} : vector<4x192xf32> to vector<4x64xf32>
    %560 = arith.addf %558, %559 : vector<4x64xf32>
    %561 = arith.negf %560 : vector<4x64xf32>
    %562 = math.exp %561 : vector<4x64xf32>
    %cst_143 = arith.constant 1.000000e+00 : f32
    %563 = vector.broadcast %cst_143 : f32 to vector<4x64xf32>
    %564 = arith.addf %563, %562 : vector<4x64xf32>
    %565 = arith.divf %563, %564 : vector<4x64xf32>
    %566 = vector.extract_strided_slice %550 {offsets = [0, 64], sizes = [4, 32], strides = [1, 1]} : vector<4x192xf32> to vector<4x32xf32>
    %567 = vector.extract_strided_slice %565 {offsets = [0, 0], sizes = [4, 32], strides = [1, 1]} : vector<4x64xf32> to vector<4x32xf32>
    %568 = vector.extract_strided_slice %557 {offsets = [0, 64], sizes = [4, 32], strides = [1, 1]} : vector<4x192xf32> to vector<4x32xf32>
    %569 = arith.mulf %567, %568 : vector<4x32xf32>
    %570 = arith.addf %566, %569 : vector<4x32xf32>
    %571 = math.tanh %570 : vector<4x32xf32>
    %572 = vector.extract_strided_slice %565 {offsets = [0, 32], sizes = [4, 32], strides = [1, 1]} : vector<4x64xf32> to vector<4x32xf32>
    %cst_144 = arith.constant 1.000000e+00 : f32
    %573 = vector.broadcast %cst_144 : f32 to vector<4x32xf32>
    %574 = arith.subf %573, %572 : vector<4x32xf32>
    %575 = arith.mulf %574, %571 : vector<4x32xf32>
    %576 = arith.mulf %572, %521 : vector<4x32xf32>
    %577 = arith.addf %575, %576 : vector<4x32xf32>
    %578 = vector.extract_strided_slice %553 {offsets = [0, 96], sizes = [4, 64], strides = [1, 1]} : vector<4x192xf32> to vector<4x64xf32>
    %579 = vector.extract_strided_slice %557 {offsets = [0, 96], sizes = [4, 64], strides = [1, 1]} : vector<4x192xf32> to vector<4x64xf32>
    %580 = arith.addf %578, %579 : vector<4x64xf32>
    %581 = arith.negf %580 : vector<4x64xf32>
    %582 = math.exp %581 : vector<4x64xf32>
    %cst_145 = arith.constant 1.000000e+00 : f32
    %583 = vector.broadcast %cst_145 : f32 to vector<4x64xf32>
    %584 = arith.addf %583, %582 : vector<4x64xf32>
    %585 = arith.divf %583, %584 : vector<4x64xf32>
    %586 = vector.extract_strided_slice %553 {offsets = [0, 160], sizes = [4, 32], strides = [1, 1]} : vector<4x192xf32> to vector<4x32xf32>
    %587 = vector.extract_strided_slice %585 {offsets = [0, 0], sizes = [4, 32], strides = [1, 1]} : vector<4x64xf32> to vector<4x32xf32>
    %588 = vector.extract_strided_slice %557 {offsets = [0, 160], sizes = [4, 32], strides = [1, 1]} : vector<4x192xf32> to vector<4x32xf32>
    %589 = arith.mulf %587, %588 : vector<4x32xf32>
    %590 = arith.addf %586, %589 : vector<4x32xf32>
    %591 = math.tanh %590 : vector<4x32xf32>
    %592 = vector.extract_strided_slice %585 {offsets = [0, 32], sizes = [4, 32], strides = [1, 1]} : vector<4x64xf32> to vector<4x32xf32>
    %cst_146 = arith.constant 1.000000e+00 : f32
    %593 = vector.broadcast %cst_146 : f32 to vector<4x32xf32>
    %594 = arith.subf %593, %592 : vector<4x32xf32>
    %595 = arith.mulf %594, %591 : vector<4x32xf32>
    %596 = arith.mulf %592, %524 : vector<4x32xf32>
    %597 = arith.addf %595, %596 : vector<4x32xf32>
    %598 = vector.broadcast %c6_i32_136 : i32 to vector<4x1xi32>
    %599 = arith.cmpi slt, %598, %45 : vector<4x1xi32>
    %600 = vector.broadcast %547 : i32 to vector<4x1xi32>
    %601 = arith.cmpi slt, %600, %45 : vector<4x1xi32>
    %602 = vector.shape_cast %599 : vector<4x1xi1> to vector<4x1xi1>
    %603 = vector.broadcast %602 : vector<4x1xi1> to vector<4x32xi1>
    %604 = arith.select %603, %577, %521 : vector<4x32xi1>, vector<4x32xf32>
    %605 = vector.shape_cast %601 : vector<4x1xi1> to vector<4x1xi1>
    %606 = vector.broadcast %605 : vector<4x1xi1> to vector<4x32xi1>
    %607 = arith.select %606, %597, %524 : vector<4x32xi1>, vector<4x32xf32>
    %cst_147 = arith.constant 0.000000e+00 : f32
    %608 = vector.shape_cast %599 : vector<4x1xi1> to vector<4x1xi1>
    %609 = vector.broadcast %608 : vector<4x1xi1> to vector<4x32xi1>
    %610 = vector.broadcast %cst_147 : f32 to vector<4x32xf32>
    %611 = arith.select %609, %604, %610 : vector<4x32xi1>, vector<4x32xf32>
    %612 = vector.extract_strided_slice %611 {offsets = [0, 0], sizes = [1, 32], strides = [1, 1]} : vector<4x32xf32> to vector<1x32xf32>
    %613 = vector.extract_strided_slice %611 {offsets = [1, 0], sizes = [1, 32], strides = [1, 1]} : vector<4x32xf32> to vector<1x32xf32>
    %614 = vector.extract_strided_slice %611 {offsets = [2, 0], sizes = [1, 32], strides = [1, 1]} : vector<4x32xf32> to vector<1x32xf32>
    %615 = vector.extract_strided_slice %611 {offsets = [3, 0], sizes = [1, 32], strides = [1, 1]} : vector<4x32xf32> to vector<1x32xf32>
    %616 = tpu.concatenate %612, %613, %614, %615 in 1 : vector<1x32xf32>, vector<1x32xf32>, vector<1x32xf32>, vector<1x32xf32> -> vector<1x128xf32>
    %617 = arith.index_cast %c6_i32_136 : i32 to index
    %c0_148 = arith.constant 0 : index
    %618 = vector.load %arg8[%617, %c0_148] : memref<8x128xf32, #tpu.memory_space<vmem>>, vector<1x128xf32>
    tpu.vector_store %arg8[%617, %c0_148], %616 {strides = array<i32>} : memref<8x128xf32, #tpu.memory_space<vmem>>, vector<1x128xf32>,
    %cst_149 = arith.constant 0.000000e+00 : f32
    %619 = vector.shape_cast %601 : vector<4x1xi1> to vector<4x1xi1>
    %620 = vector.broadcast %619 : vector<4x1xi1> to vector<4x32xi1>
    %621 = vector.broadcast %cst_149 : f32 to vector<4x32xf32>
    %622 = arith.select %620, %607, %621 : vector<4x32xi1>, vector<4x32xf32>
    %623 = vector.extract_strided_slice %622 {offsets = [0, 0], sizes = [1, 32], strides = [1, 1]} : vector<4x32xf32> to vector<1x32xf32>
    %624 = vector.extract_strided_slice %622 {offsets = [1, 0], sizes = [1, 32], strides = [1, 1]} : vector<4x32xf32> to vector<1x32xf32>
    %625 = vector.extract_strided_slice %622 {offsets = [2, 0], sizes = [1, 32], strides = [1, 1]} : vector<4x32xf32> to vector<1x32xf32>
    %626 = vector.extract_strided_slice %622 {offsets = [3, 0], sizes = [1, 32], strides = [1, 1]} : vector<4x32xf32> to vector<1x32xf32>
    %627 = tpu.concatenate %623, %624, %625, %626 in 1 : vector<1x32xf32>, vector<1x32xf32>, vector<1x32xf32>, vector<1x32xf32> -> vector<1x128xf32>
    %628 = arith.index_cast %547 : i32 to index
    %c0_150 = arith.constant 0 : index
    %629 = vector.load %arg12[%628, %c0_150] : memref<8x128xf32, #tpu.memory_space<vmem>>, vector<1x128xf32>
    tpu.vector_store %arg12[%628, %c0_150], %627 {strides = array<i32>} : memref<8x128xf32, #tpu.memory_space<vmem>>, vector<1x128xf32>,
    %c7_i32_151 = arith.constant 7 : i32
    %c7_i32_152 = arith.constant 7 : i32
    %630 = arith.subi %c7_i32_152, %c7_i32_151 : i32
    %631 = arith.index_cast %c7_i32_151 : i32 to index
    %c0_153 = arith.constant 0 : index
    %c0_154 = arith.constant 0 : index
    %632 = vector.load %arg11[%631, %c0_153, %c0_154] : memref<8x4x192xf32, #tpu.memory_space<vmem>>, vector<1x4x192xf32>
    %633 = vector.shape_cast %632 : vector<1x4x192xf32> to vector<4x192xf32>
    %634 = arith.index_cast %630 : i32 to index
    %c0_155 = arith.constant 0 : index
    %c0_156 = arith.constant 0 : index
    %635 = vector.load %arg11[%634, %c0_155, %c0_156] : memref<8x4x192xf32, #tpu.memory_space<vmem>>, vector<1x4x192xf32>
    %636 = vector.shape_cast %635 : vector<1x4x192xf32> to vector<4x192xf32>
    %637 = tpu.concatenate %604, %607 in 1 : vector<4x32xf32>, vector<4x32xf32> -> vector<4x64xf32>
    %cst_157 = arith.constant dense<0.000000e+00> : vector<4x192xf32>
    %638 = tpu.matmul %637, %46, %cst_157 {dimension_numbers = #tpu.dot_dimension_numbers<[1], [0], [0], [1], [0, 0, 1, 1], [], []>} : vector<4x64xf32>, vector<64x192xf32>, vector<4x192xf32> -> vector<4x192xf32>
    %639 = vector.broadcast %47 : vector<1x192xf32> to vector<4x192xf32>
    %640 = arith.addf %638, %639 : vector<4x192xf32>
    %641 = vector.extract_strided_slice %633 {offsets = [0, 0], sizes = [4, 64], strides = [1, 1]} : vector<4x192xf32> to vector<4x64xf32>
    %642 = vector.extract_strided_slice %640 {offsets = [0, 0], sizes = [4, 64], strides = [1, 1]} : vector<4x192xf32> to vector<4x64xf32>
    %643 = arith.addf %641, %642 : vector<4x64xf32>
    %644 = arith.negf %643 : vector<4x64xf32>
    %645 = math.exp %644 : vector<4x64xf32>
    %cst_158 = arith.constant 1.000000e+00 : f32
    %646 = vector.broadcast %cst_158 : f32 to vector<4x64xf32>
    %647 = arith.addf %646, %645 : vector<4x64xf32>
    %648 = arith.divf %646, %647 : vector<4x64xf32>
    %649 = vector.extract_strided_slice %633 {offsets = [0, 64], sizes = [4, 32], strides = [1, 1]} : vector<4x192xf32> to vector<4x32xf32>
    %650 = vector.extract_strided_slice %648 {offsets = [0, 0], sizes = [4, 32], strides = [1, 1]} : vector<4x64xf32> to vector<4x32xf32>
    %651 = vector.extract_strided_slice %640 {offsets = [0, 64], sizes = [4, 32], strides = [1, 1]} : vector<4x192xf32> to vector<4x32xf32>
    %652 = arith.mulf %650, %651 : vector<4x32xf32>
    %653 = arith.addf %649, %652 : vector<4x32xf32>
    %654 = math.tanh %653 : vector<4x32xf32>
    %655 = vector.extract_strided_slice %648 {offsets = [0, 32], sizes = [4, 32], strides = [1, 1]} : vector<4x64xf32> to vector<4x32xf32>
    %cst_159 = arith.constant 1.000000e+00 : f32
    %656 = vector.broadcast %cst_159 : f32 to vector<4x32xf32>
    %657 = arith.subf %656, %655 : vector<4x32xf32>
    %658 = arith.mulf %657, %654 : vector<4x32xf32>
    %659 = arith.mulf %655, %604 : vector<4x32xf32>
    %660 = arith.addf %658, %659 : vector<4x32xf32>
    %661 = vector.extract_strided_slice %636 {offsets = [0, 96], sizes = [4, 64], strides = [1, 1]} : vector<4x192xf32> to vector<4x64xf32>
    %662 = vector.extract_strided_slice %640 {offsets = [0, 96], sizes = [4, 64], strides = [1, 1]} : vector<4x192xf32> to vector<4x64xf32>
    %663 = arith.addf %661, %662 : vector<4x64xf32>
    %664 = arith.negf %663 : vector<4x64xf32>
    %665 = math.exp %664 : vector<4x64xf32>
    %cst_160 = arith.constant 1.000000e+00 : f32
    %666 = vector.broadcast %cst_160 : f32 to vector<4x64xf32>
    %667 = arith.addf %666, %665 : vector<4x64xf32>
    %668 = arith.divf %666, %667 : vector<4x64xf32>
    %669 = vector.extract_strided_slice %636 {offsets = [0, 160], sizes = [4, 32], strides = [1, 1]} : vector<4x192xf32> to vector<4x32xf32>
    %670 = vector.extract_strided_slice %668 {offsets = [0, 0], sizes = [4, 32], strides = [1, 1]} : vector<4x64xf32> to vector<4x32xf32>
    %671 = vector.extract_strided_slice %640 {offsets = [0, 160], sizes = [4, 32], strides = [1, 1]} : vector<4x192xf32> to vector<4x32xf32>
    %672 = arith.mulf %670, %671 : vector<4x32xf32>
    %673 = arith.addf %669, %672 : vector<4x32xf32>
    %674 = math.tanh %673 : vector<4x32xf32>
    %675 = vector.extract_strided_slice %668 {offsets = [0, 32], sizes = [4, 32], strides = [1, 1]} : vector<4x64xf32> to vector<4x32xf32>
    %cst_161 = arith.constant 1.000000e+00 : f32
    %676 = vector.broadcast %cst_161 : f32 to vector<4x32xf32>
    %677 = arith.subf %676, %675 : vector<4x32xf32>
    %678 = arith.mulf %677, %674 : vector<4x32xf32>
    %679 = arith.mulf %675, %607 : vector<4x32xf32>
    %680 = arith.addf %678, %679 : vector<4x32xf32>
    %681 = vector.broadcast %c7_i32_151 : i32 to vector<4x1xi32>
    %682 = arith.cmpi slt, %681, %45 : vector<4x1xi32>
    %683 = vector.broadcast %630 : i32 to vector<4x1xi32>
    %684 = arith.cmpi slt, %683, %45 : vector<4x1xi32>
    %685 = vector.shape_cast %682 : vector<4x1xi1> to vector<4x1xi1>
    %686 = vector.broadcast %685 : vector<4x1xi1> to vector<4x32xi1>
    %687 = arith.select %686, %660, %604 : vector<4x32xi1>, vector<4x32xf32>
    %688 = vector.shape_cast %684 : vector<4x1xi1> to vector<4x1xi1>
    %689 = vector.broadcast %688 : vector<4x1xi1> to vector<4x32xi1>
    %690 = arith.select %689, %680, %607 : vector<4x32xi1>, vector<4x32xf32>
    %cst_162 = arith.constant 0.000000e+00 : f32
    %691 = vector.shape_cast %682 : vector<4x1xi1> to vector<4x1xi1>
    %692 = vector.broadcast %691 : vector<4x1xi1> to vector<4x32xi1>
    %693 = vector.broadcast %cst_162 : f32 to vector<4x32xf32>
    %694 = arith.select %692, %687, %693 : vector<4x32xi1>, vector<4x32xf32>
    %695 = vector.extract_strided_slice %694 {offsets = [0, 0], sizes = [1, 32], strides = [1, 1]} : vector<4x32xf32> to vector<1x32xf32>
    %696 = vector.extract_strided_slice %694 {offsets = [1, 0], sizes = [1, 32], strides = [1, 1]} : vector<4x32xf32> to vector<1x32xf32>
    %697 = vector.extract_strided_slice %694 {offsets = [2, 0], sizes = [1, 32], strides = [1, 1]} : vector<4x32xf32> to vector<1x32xf32>
    %698 = vector.extract_strided_slice %694 {offsets = [3, 0], sizes = [1, 32], strides = [1, 1]} : vector<4x32xf32> to vector<1x32xf32>
    %699 = tpu.concatenate %695, %696, %697, %698 in 1 : vector<1x32xf32>, vector<1x32xf32>, vector<1x32xf32>, vector<1x32xf32> -> vector<1x128xf32>
    %700 = arith.index_cast %c7_i32_151 : i32 to index
    %c0_163 = arith.constant 0 : index
    %701 = vector.load %arg8[%700, %c0_163] : memref<8x128xf32, #tpu.memory_space<vmem>>, vector<1x128xf32>
    tpu.vector_store %arg8[%700, %c0_163], %699 {strides = array<i32>} : memref<8x128xf32, #tpu.memory_space<vmem>>, vector<1x128xf32>,
    %cst_164 = arith.constant 0.000000e+00 : f32
    %702 = vector.shape_cast %684 : vector<4x1xi1> to vector<4x1xi1>
    %703 = vector.broadcast %702 : vector<4x1xi1> to vector<4x32xi1>
    %704 = vector.broadcast %cst_164 : f32 to vector<4x32xf32>
    %705 = arith.select %703, %690, %704 : vector<4x32xi1>, vector<4x32xf32>
    %706 = vector.extract_strided_slice %705 {offsets = [0, 0], sizes = [1, 32], strides = [1, 1]} : vector<4x32xf32> to vector<1x32xf32>
    %707 = vector.extract_strided_slice %705 {offsets = [1, 0], sizes = [1, 32], strides = [1, 1]} : vector<4x32xf32> to vector<1x32xf32>
    %708 = vector.extract_strided_slice %705 {offsets = [2, 0], sizes = [1, 32], strides = [1, 1]} : vector<4x32xf32> to vector<1x32xf32>
    %709 = vector.extract_strided_slice %705 {offsets = [3, 0], sizes = [1, 32], strides = [1, 1]} : vector<4x32xf32> to vector<1x32xf32>
    %710 = tpu.concatenate %706, %707, %708, %709 in 1 : vector<1x32xf32>, vector<1x32xf32>, vector<1x32xf32>, vector<1x32xf32> -> vector<1x128xf32>
    %711 = arith.index_cast %630 : i32 to index
    %c0_165 = arith.constant 0 : index
    %712 = vector.load %arg12[%711, %c0_165] : memref<8x128xf32, #tpu.memory_space<vmem>>, vector<1x128xf32>
    tpu.vector_store %arg12[%711, %c0_165], %710 {strides = array<i32>} : memref<8x128xf32, #tpu.memory_space<vmem>>, vector<1x128xf32>,
    %c8_i32 = arith.constant 8 : i32
    %c0_166 = arith.constant 0 : index
    %c0_167 = arith.constant 0 : index
    %713 = vector.load %arg8[%c0_166, %c0_167] : memref<8x128xf32, #tpu.memory_space<vmem>>, vector<8x128xf32>
    %c0_168 = arith.constant 0 : index
    %c0_169 = arith.constant 0 : index
    %714 = vector.load %arg12[%c0_168, %c0_169] : memref<8x128xf32, #tpu.memory_space<vmem>>, vector<8x128xf32>
    %715 = arith.addf %713, %714 : vector<8x128xf32>
    %c0_170 = arith.constant 0 : index
    %c0_171 = arith.constant 0 : index
    %716 = vector.load %arg8[%c0_170, %c0_171] : memref<8x128xf32, #tpu.memory_space<vmem>>, vector<8x128xf32>
    tpu.vector_store %arg8[%c0_170, %c0_171], %715 {strides = array<i32>} : memref<8x128xf32, #tpu.memory_space<vmem>>, vector<8x128xf32>,
    %717 = vector.extract_strided_slice %687 {offsets = [0, 0], sizes = [1, 32], strides = [1, 1]} : vector<4x32xf32> to vector<1x32xf32>
    %718 = vector.extract_strided_slice %687 {offsets = [1, 0], sizes = [1, 32], strides = [1, 1]} : vector<4x32xf32> to vector<1x32xf32>
    %719 = vector.extract_strided_slice %687 {offsets = [2, 0], sizes = [1, 32], strides = [1, 1]} : vector<4x32xf32> to vector<1x32xf32>
    %720 = vector.extract_strided_slice %687 {offsets = [3, 0], sizes = [1, 32], strides = [1, 1]} : vector<4x32xf32> to vector<1x32xf32>
    %721 = tpu.concatenate %717, %718, %719, %720 in 1 : vector<1x32xf32>, vector<1x32xf32>, vector<1x32xf32>, vector<1x32xf32> -> vector<1x128xf32>
    %c0_172 = arith.constant 0 : index
    %c0_173 = arith.constant 0 : index
    %722 = vector.load %arg9[%c0_172, %c0_173] : memref<2x128xf32, #tpu.memory_space<vmem>>, vector<1x128xf32>
    tpu.vector_store %arg9[%c0_172, %c0_173], %721 {strides = array<i32>} : memref<2x128xf32, #tpu.memory_space<vmem>>, vector<1x128xf32>,
    %723 = vector.extract_strided_slice %690 {offsets = [0, 0], sizes = [1, 32], strides = [1, 1]} : vector<4x32xf32> to vector<1x32xf32>
    %724 = vector.extract_strided_slice %690 {offsets = [1, 0], sizes = [1, 32], strides = [1, 1]} : vector<4x32xf32> to vector<1x32xf32>
    %725 = vector.extract_strided_slice %690 {offsets = [2, 0], sizes = [1, 32], strides = [1, 1]} : vector<4x32xf32> to vector<1x32xf32>
    %726 = vector.extract_strided_slice %690 {offsets = [3, 0], sizes = [1, 32], strides = [1, 1]} : vector<4x32xf32> to vector<1x32xf32>
    %727 = tpu.concatenate %723, %724, %725, %726 in 1 : vector<1x32xf32>, vector<1x32xf32>, vector<1x32xf32>, vector<1x32xf32> -> vector<1x128xf32>
    %c1 = arith.constant 1 : index
    %c0_174 = arith.constant 0 : index
    %728 = vector.load %arg9[%c1, %c0_174] : memref<2x128xf32, #tpu.memory_space<vmem>>, vector<1x128xf32>
    tpu.vector_store %arg9[%c1, %c0_174], %727 {strides = array<i32>} : memref<2x128xf32, #tpu.memory_space<vmem>>, vector<1x128xf32>,
    return
  }
  func.func @transform_0(%arg0: i32, %arg1: memref<64xi32, #tpu.memory_space<smem>>) -> (i32, i32, i32) {
    %c0_i32 = arith.constant 0 : i32
    %c0_i32_0 = arith.constant 0 : i32
    %c0_i32_1 = arith.constant 0 : i32
    return %arg0, %c0_i32, %c0_i32_0 : i32, i32, i32
  }
  func.func @transform_2(%arg0: i32, %arg1: memref<64xi32, #tpu.memory_space<smem>>) -> (i32, i32) {
    %c0_i32 = arith.constant 0 : i32
    %c0_i32_0 = arith.constant 0 : i32
    %c0_i32_1 = arith.constant 0 : i32
    return %c0_i32, %c0_i32_0 : i32, i32
  }
  func.func @transform_3(%arg0: i32, %arg1: memref<64xi32, #tpu.memory_space<smem>>) -> (i32, i32) {
    %c0_i32 = arith.constant 0 : i32
    %c0_i32_0 = arith.constant 0 : i32
    %c0_i32_1 = arith.constant 0 : i32
    return %c0_i32, %c0_i32_0 : i32, i32
  }
  func.func @transform_4(%arg0: i32, %arg1: memref<64xi32, #tpu.memory_space<smem>>) -> (i32, i32) {
    %c0_i32 = arith.constant 0 : i32
    %c0_i32_0 = arith.constant 0 : i32
    %c0_i32_1 = arith.constant 0 : i32
    return %c0_i32, %c0_i32_0 : i32, i32
  }
  func.func @transform_5(%arg0: i32, %arg1: memref<64xi32, #tpu.memory_space<smem>>) -> (i32, i32) {
    %c0_i32 = arith.constant 0 : i32
    %c0_i32_0 = arith.constant 0 : i32
    %c0_i32_1 = arith.constant 0 : i32
    return %c0_i32, %c0_i32_0 : i32, i32
  }
  func.func @transform_6(%arg0: i32, %arg1: memref<64xi32, #tpu.memory_space<smem>>) -> (i32, i32) {
    %c0_i32 = arith.constant 0 : i32
    %c0_i32_0 = arith.constant 0 : i32
    return %c0_i32, %arg0 : i32, i32
  }
  func.func @transform_7(%arg0: i32, %arg1: memref<64xi32, #tpu.memory_space<smem>>) -> (i32, i32) {
    %c0_i32 = arith.constant 0 : i32
    %c0_i32_0 = arith.constant 0 : i32
    return %c0_i32, %arg0 : i32, i32
  }
}

</mosaic_0001>

<llo_original>
// kernel: tpu_custom_call.1
$region0: #{tpu_custom_call.1}
  #allocation0 [shape = 'u32[]', space=smem, size = 0x4, offset = 0x4, fixed_abs, tag = 'smem constant byte address 0x4 - core index']
  #allocation1 [shape = 'u32[72,128]{1,0:T(1,128)}', space=vmem, size = 0x9000, scoped, tag = 'internal scratch']
  #allocation2 [shape = 'f32[32,16]{1,0:T(8,128)}', space=vmem, size = 0x4000, scoped, tag = 'scratch operand']
  #allocation3 [shape = 'f32[8,4,192]{2,1,0:T(4,128)}', space=vmem, size = 0x8000, scoped, tag = 'scratch operand']
  #allocation4 [shape = 'f32[8,128]{1,0:T(8,128)}', space=vmem, size = 0x1000, scoped, tag = 'scratch operand']
  #allocation5 [shape = 's32[8]{0}', space=sflag, size = 0x20, scoped, tag = 'scratch operand']
  #allocation6 [shape = 's32[1]{0}', space=sflag, size = 0x4, scoped, tag = 'scoped memory for tpu_custom_call.1']
  #allocation7 [shape = 'u8[512]{0}', space=smem, size = 0x200, scoped, tag = 'prefetched SMEM operand 0']
  #allocation14 [shape = 's32[]', space=sflag, size = 0x4, offset = 0, fixed_abs, tag = 'sflag constant byte address 0x0 - dummy sync flag']
  %s0 = inlined_call_operand.vmem [shape: s32[64], index: 0, kind: input, shape index: {}]
  %s1 = inlined_call_operand.vmem [shape: s32[2,4,1], index: 1, kind: input, shape index: {}]
  %s2 = inlined_call_operand.vmem [shape: f32[50,16], index: 2, kind: input, shape index: {}]
  %s3 = inlined_call_operand.vmem [shape: bf16[16,192], index: 3, kind: input, shape index: {}]
  %s4 = inlined_call_operand.vmem [shape: f32[1,192], index: 4, kind: input, shape index: {}]
  %s5 = inlined_call_operand.hbm [shape: f32[64,192], index: 5, kind: input, shape index: {}]
  %s6 = inlined_call_operand.vmem [shape: f32[1,192], index: 6, kind: input, shape index: {}]
  %s7 = inlined_call_operand.hbm [shape: f32[8,256], index: 7, kind: output, shape index: {0}]
  %s8 = inlined_call_operand.hbm [shape: f32[2,256], index: 8, kind: output, shape index: {1}]
  %9 = xla_tuple %s7, %s8
  %s10 = sld [smem:[#allocation0]]
  $region106: #{tpu_custom_call.1} parent=0
    _
  %s12 = ssub.s32 1, %s10
  %s13 = scalar_select 0, %s12, %s10
  %s15 = sshll.u32 %s0, 4
  %s16 = int_to_ptr.vmem [resolvable:$true] %s15
  %18 = dma.vmem_to_smem %s16, 16, [#allocation7], [#allocation6]
  %20 = dma.done [#allocation6], 16
  %21 = sfence
  $region1: #{tpu_custom_call.1} parent=0
    #allocation8 [shape = 'u8[65536]{0}', space=vmem, size = 0x10000, scoped, tag = 'input window, operand 5, single buffered']
    #allocation9 [shape = 's32[2]{0}', space=sflag, size = 0x8, scoped, tag = 'scoped memory for tpu_custom_call.1']
    #allocation10 [shape = 's32[2]{0}', space=sflag, size = 0x8, scoped, tag = 'scoped memory for tpu_custom_call.1']
    #allocation11 [shape = 'u8[8192]{0}', space=vmem, size = 0x2000, scoped, tag = 'output window, operand 0']
    #allocation12 [shape = 'u8[2048]{0}', space=vmem, size = 0x800, scoped, tag = 'output window, operand 1']
    #allocation13 [shape = 's32[2]{0}', space=sflag, size = 0x8, scoped, tag = 'scoped memory for tpu_custom_call.1']
    %22 = vsyncpa [#allocation9], 0
    %23 = vsyncpa [#allocation10], 0
    %s24 = scalar_lea.sflag [#allocation10], 1
    %25 = vsyncpa %s24, 0
    %26 = vsyncpa [#allocation13], 0
    %s27 = scalar_lea.sflag [#allocation13], 1
    %28 = vsyncpa %s27, 0
    loop: start=0, step=1, limit=4
    $region2: #{tpu_custom_call.1} parent=1 // loop_pre_header
      _
    $region3: #{tpu_custom_call.1} parent=1 // loop_header
      %s30 = sphi 0, %s34
      %p31 = scmp.ge.s32.totalorder %s30, 4
      %s40 = sphi 0, %s42
      %s43 = sphi 0, %s40
      %s44 = sphi 0, %s43
      %s60 = sphi 0, %s44
      %s64 = sphi 0, %s64
      %s66 = sphi 0, %s64
      %s67 = sphi 0, %s66
      %s81 = sphi 0, %s67
      %s85 = sphi 0, %s85
      %s87 = sphi 0, %s85
      %s88 = sphi 0, %s87
      %s102 = sphi 0, %s88
      %s106 = sphi 0, %s106
      %s108 = sphi 0, %s106
      %s109 = sphi 0, %s108
      %s123 = sphi 0, %s109
      %s127 = sphi 0, %s127
      %s129 = sphi 0, %s127
      %s130 = sphi 0, %s129
      %s144 = sphi 0, %s130
      %s150 = sphi 0, %s152
      %s153 = sphi 0, %s150
      %s154 = sphi 0, %s153
      %s170 = sphi 0, %s154
      %s176 = sphi 0, %s178
      %s179 = sphi 0, %s176
      %s180 = sphi 0, %s179
      %s196 = sphi 0, %s180
    $region4: #{tpu_custom_call.1} parent=1 // loop_header_branch
      %33 = sbr.rel (%p31) target = $region8
    $region5: #{tpu_custom_call.1} parent=1 // loop_body
      %s35 = ssub.s32 %s30, 1
      %s36 = ssub.s32 %s30, 2
      %s37 = sadd.s32 %s30, 1
      %s38 = ssub.s32 %s30, %s37
      %p39 = scmp.eq.s32.totalorder %s38, 0
      %s41 = sadd.s32 %s40, 1
      %s42 = scalar_select %p39, %s40, %s41
      %p45 = pneg %p39
      %p46 = scmp.eq.s32.totalorder %s30, 1
      %p47 = por %p45, %p46
      %p48 = scmp.ne.s32.totalorder %s40, %s43
      %p49 = scmp.eq.s32.totalorder %s30, 0
      %p50 = por %p48, %p49
      %p51 = scmp.ne.s32.totalorder %s40, %s43
      %p52 = scmp.eq.s32.totalorder %s35, 1
      %p53 = por %p51, %p52
      %p54 = scmp.ne.s32.totalorder %s43, %s44
      %p55 = scmp.eq.s32.totalorder %s35, 0
      %p56 = por %p54, %p55
      %p57 = scmp.ne.s32.totalorder %s43, %s44
      %p58 = scmp.eq.s32.totalorder %s36, 1
      %p59 = por %p57, %p58
      %p61 = scmp.ne.s32.totalorder %s44, %s60
      %p62 = scmp.eq.s32.totalorder %s36, 0
      %p63 = por %p61, %p62
      %s65 = sadd.s32 %s64, 1
      %p68 = scmp.eq.s32.totalorder %s30, 1
      %p69 = scmp.ne.s32.totalorder %s64, %s66
      %p70 = scmp.eq.s32.totalorder %s30, 0
      %p71 = por %p69, %p70
      %p72 = scmp.ne.s32.totalorder %s64, %s66
      %p73 = scmp.eq.s32.totalorder %s35, 1
      %p74 = por %p72, %p73
      %p75 = scmp.ne.s32.totalorder %s66, %s67
      %p76 = scmp.eq.s32.totalorder %s35, 0
      %p77 = por %p75, %p76
      %p78 = scmp.ne.s32.totalorder %s66, %s67
      %p79 = scmp.eq.s32.totalorder %s36, 1
      %p80 = por %p78, %p79
      %p82 = scmp.ne.s32.totalorder %s67, %s81
      %p83 = scmp.eq.s32.totalorder %s36, 0
      %p84 = por %p82, %p83
      %s86 = sadd.s32 %s85, 1
      %p89 = scmp.eq.s32.totalorder %s30, 1
      %p90 = scmp.ne.s32.totalorder %s85, %s87
      %p91 = scmp.eq.s32.totalorder %s30, 0
      %p92 = por %p90, %p91
      %p93 = scmp.ne.s32.totalorder %s85, %s87
      %p94 = scmp.eq.s32.totalorder %s35, 1
      %p95 = por %p93, %p94
      %p96 = scmp.ne.s32.totalorder %s87, %s88
      %p97 = scmp.eq.s32.totalorder %s35, 0
      %p98 = por %p96, %p97
      %p99 = scmp.ne.s32.totalorder %s87, %s88
      %p100 = scmp.eq.s32.totalorder %s36, 1
      %p101 = por %p99, %p100
      %p103 = scmp.ne.s32.totalorder %s88, %s102
      %p104 = scmp.eq.s32.totalorder %s36, 0
      %p105 = por %p103, %p104
      %s107 = sadd.s32 %s106, 1
      %p110 = scmp.eq.s32.totalorder %s30, 1
      %p111 = scmp.ne.s32.totalorder %s106, %s108
      %p112 = scmp.eq.s32.totalorder %s30, 0
      %p113 = por %p111, %p112
      %p114 = scmp.ne.s32.totalorder %s106, %s108
      %p115 = scmp.eq.s32.totalorder %s35, 1
      %p116 = por %p114, %p115
      %p117 = scmp.ne.s32.totalorder %s108, %s109
      %p118 = scmp.eq.s32.totalorder %s35, 0
      %p119 = por %p117, %p118
      %p120 = scmp.ne.s32.totalorder %s108, %s109
      %p121 = scmp.eq.s32.totalorder %s36, 1
      %p122 = por %p120, %p121
      %p124 = scmp.ne.s32.totalorder %s109, %s123
      %p125 = scmp.eq.s32.totalorder %s36, 0
      %p126 = por %p124, %p125
      %s128 = sadd.s32 %s127, 1
      %p131 = scmp.eq.s32.totalorder %s30, 1
      %p132 = scmp.ne.s32.totalorder %s127, %s129
      %p133 = scmp.eq.s32.totalorder %s30, 0
      %p134 = por %p132, %p133
      %p135 = scmp.ne.s32.totalorder %s127, %s129
      %p136 = scmp.eq.s32.totalorder %s35, 1
      %p137 = por %p135, %p136
      %p138 = scmp.ne.s32.totalorder %s129, %s130
      %p139 = scmp.eq.s32.totalorder %s35, 0
      %p140 = por %p138, %p139
      %p141 = scmp.ne.s32.totalorder %s129, %s130
      %p142 = scmp.eq.s32.totalorder %s36, 1
      %p143 = por %p141, %p142
      %p145 = scmp.ne.s32.totalorder %s130, %s144
      %p146 = scmp.eq.s32.totalorder %s36, 0
      %p147 = por %p145, %p146
      %s148 = ssub.s32 %s30, %s37
      %p149 = scmp.eq.s32.totalorder %s148, 0
      %s151 = sadd.s32 %s150, 1
      %s152 = scalar_select %p149, %s150, %s151
      %p155 = pneg %p149
      %p156 = scmp.eq.s32.totalorder %s30, 1
      %p157 = por %p155, %p156
      %p158 = scmp.ne.s32.totalorder %s150, %s153
      %p159 = scmp.eq.s32.totalorder %s30, 0
      %p160 = por %p158, %p159
      %p161 = scmp.ne.s32.totalorder %s150, %s153
      %p162 = scmp.eq.s32.totalorder %s35, 1
      %p163 = por %p161, %p162
      %p164 = scmp.ne.s32.totalorder %s153, %s154
      %p165 = scmp.eq.s32.totalorder %s35, 0
      %p166 = por %p164, %p165
      %p167 = scmp.ne.s32.totalorder %s153, %s154
      %p168 = scmp.eq.s32.totalorder %s36, 1
      %p169 = por %p167, %p168
      %p171 = scmp.ne.s32.totalorder %s154, %s170
      %p172 = scmp.eq.s32.totalorder %s36, 0
      %p173 = por %p171, %p172
      %s174 = ssub.s32 %s30, %s37
      %p175 = scmp.eq.s32.totalorder %s174, 0
      %s177 = sadd.s32 %s176, 1
      %s178 = scalar_select %p175, %s176, %s177
      %p181 = pneg %p175
      %p182 = scmp.eq.s32.totalorder %s30, 1
      %p183 = por %p181, %p182
      %p184 = scmp.ne.s32.totalorder %s176, %s179
      %p185 = scmp.eq.s32.totalorder %s30, 0
      %p186 = por %p184, %p185
      %p187 = scmp.ne.s32.totalorder %s176, %s179
      %p188 = scmp.eq.s32.totalorder %s35, 1
      %p189 = por %p187, %p188
      %p190 = scmp.ne.s32.totalorder %s179, %s180
      %p191 = scmp.eq.s32.totalorder %s35, 0
      %p192 = por %p190, %p191
      %p193 = scmp.ne.s32.totalorder %s179, %s180
      %p194 = scmp.eq.s32.totalorder %s36, 1
      %p195 = por %p193, %p194
      %p197 = scmp.ne.s32.totalorder %s180, %s196
      %p198 = scmp.eq.s32.totalorder %s36, 0
      %p199 = por %p197, %p198
      %p200 = scmp.le.s32.totalorder 1, %s30
      %p201 = scmp.lt.s32.totalorder %s30, 3
      %p202 = pnand %p200, %p201
      %p203 = pneg %p202
      // Predicated region
      $region9: #{tpu_custom_call.1} parent=5 // pred_check
        _
      $region10: #{tpu_custom_call.1} parent=5 // pred_check_branch
        %205 = sbr.rel (%p202) target = $region12
      $region11: #{tpu_custom_call.1} parent=5 // pred_region
        %s206 = ssub.s32 %s30, 1
        // Predicated region
        $region13: #{tpu_custom_call.1} parent=11 // pred_check
          %p207 = pneg %p77
        $region14: #{tpu_custom_call.1} parent=11 // pred_check_branch
          %209 = sbr.rel (%p207) target = $region16
        $region15: #{tpu_custom_call.1} parent=11 // pred_region
          _
        $region16: #{tpu_custom_call.1} parent=11 // pred_fallthru
          _
        // Predicated region
        $region17: #{tpu_custom_call.1} parent=11 // pred_check
          %p210 = pneg %p98
        $region18: #{tpu_custom_call.1} parent=11 // pred_check_branch
          %212 = sbr.rel (%p210) target = $region20
        $region19: #{tpu_custom_call.1} parent=11 // pred_region
          _
        $region20: #{tpu_custom_call.1} parent=11 // pred_fallthru
          _
        // Predicated region
        $region21: #{tpu_custom_call.1} parent=11 // pred_check
          %p213 = pneg %p119
        $region22: #{tpu_custom_call.1} parent=11 // pred_check_branch
          %215 = sbr.rel (%p213) target = $region24
        $region23: #{tpu_custom_call.1} parent=11 // pred_region
          %217 = vsyncadd [#allocation9], 0
          %s218 = sshll.u32 %s5, 4
          %s219 = int_to_ptr.hbm [resolvable:$true] %s218
          %s220 = sshll.u32 [#allocation8], 4
          %s221 = int_to_ptr.vmem [resolvable:$true] %s220
          %226 = dma.hbm_to_vmem [thread:$0]  %s219, 2048, %s221, [#allocation9], 256, 256, 16
        $region24: #{tpu_custom_call.1} parent=11 // pred_fallthru
          _
        // Predicated region
        $region25: #{tpu_custom_call.1} parent=11 // pred_check
          %p227 = pneg %p140
        $region26: #{tpu_custom_call.1} parent=11 // pred_check_branch
          %229 = sbr.rel (%p227) target = $region28
        $region27: #{tpu_custom_call.1} parent=11 // pred_region
          _
        $region28: #{tpu_custom_call.1} parent=11 // pred_fallthru
          _
      $region12: #{tpu_custom_call.1} parent=5 // pred_fallthru
        _
      %p230 = scmp.lt.s32.totalorder %s30, 2
      // Predicated region
      $region29: #{tpu_custom_call.1} parent=5 // pred_check
        %p231 = pneg %p230
      $region30: #{tpu_custom_call.1} parent=5 // pred_check_branch
        %233 = sbr.rel (%p231) target = $region32
      $region31: #{tpu_custom_call.1} parent=5 // pred_region
        // Predicated region
        $region33: #{tpu_custom_call.1} parent=31 // pred_check
          %p234 = pneg %p50
        $region34: #{tpu_custom_call.1} parent=31 // pred_check_branch
          %236 = sbr.rel (%p234) target = $region36
        $region35: #{tpu_custom_call.1} parent=31 // pred_region
          %p237 = scmp.lt.s32.totalorder %s30, 1
          %s238 = scalar_select %p237, %s30, 1
          %s239 = smul.addr %s238, 4
          %s240 = scalar_lea.vmem %s1, %s239
        $region36: #{tpu_custom_call.1} parent=31 // pred_fallthru
          _
      $region32: #{tpu_custom_call.1} parent=5 // pred_fallthru
        _
      %p241 = scmp.le.s32.totalorder 1, %s30
      %p242 = scmp.lt.s32.totalorder %s30, 3
      %p243 = pnand %p241, %p242
      %p244 = pneg %p243
      // Predicated region
      $region37: #{tpu_custom_call.1} parent=5 // pred_check
        _
      $region38: #{tpu_custom_call.1} parent=5 // pred_check_branch
        %246 = sbr.rel (%p243) target = $region40
      $region39: #{tpu_custom_call.1} parent=5 // pred_region
        %s247 = ssub.s32 %s30, 1
        // Predicated region
        $region41: #{tpu_custom_call.1} parent=39 // pred_check
          %p248 = pneg %p119
        $region42: #{tpu_custom_call.1} parent=39 // pred_check_branch
          %250 = sbr.rel (%p248) target = $region44
        $region43: #{tpu_custom_call.1} parent=39 // pred_region
          %252 = dma.done [#allocation9], 2048
        $region44: #{tpu_custom_call.1} parent=39 // pred_fallthru
          _
        %p253 = scmp.lt.s32.totalorder %s35, 1
        %s254 = scalar_select %p253, %s35, 1
        %s255 = smul.addr %s254, 4
        %s256 = scalar_lea.vmem %s1, %s255
        %p257 = pneg %p56
        %p258 = pneg %p53
        %p259 = pneg %p77
        %p260 = pneg %p74
        %p261 = pneg %p98
        %p262 = pneg %p95
        %p263 = pneg %p119
        %p264 = pneg %p116
        %p265 = pneg %p140
        %p266 = pneg %p137
        %p267 = pneg %p166
        %p268 = pneg %p163
        %s269 = sand.u32 %s153, 1
        %s270 = scalar_lea.sflag [#allocation10], %s269
        %s271 = sand.u32 %s153, 1
        %s272 = smul.addr %s271, 8
        %s273 = scalar_lea.vmem [#allocation11], %s272
        %p274 = pneg %p192
        %p275 = pneg %p189
        %s276 = sand.u32 %s179, 1
        %s277 = scalar_lea.sflag [#allocation13], %s276
        %s278 = sand.u32 %s179, 1
        %s279 = smul.addr %s278, 2
        %s280 = scalar_lea.vmem [#allocation12], %s279
        %p281 = scmp.lt.s32.totalorder %s35, 1
        %s282 = scalar_select %p281, %s35, 1
        %s283 = smul.addr %s282, 4
        %s284 = scalar_lea.vmem %s1, %s283
        %s286 = smul.u32 %s35, 4
        loop: start=0, step=1, limit=32
        $region45: #{tpu_custom_call.1} parent=39 // loop_pre_header
          _
        $region46: #{tpu_custom_call.1} parent=39 // loop_header
          %s288 = sphi 0, %s292
          %p289 = scmp.ge.s32.totalorder %s288, 32
          %s293 = sphi 0, %s348
          %s294 = sphi 0, %s349
        $region47: #{tpu_custom_call.1} parent=39 // loop_header_branch
          %291 = sbr.rel (%p289) target = $region51
        $region48: #{tpu_custom_call.1} parent=39 // loop_body
          %s295 = sand.u32 %s288, 7
          %p296 = scmp.ge.s32.totalorder %s288, 8
          // Predicated region
          $region52: #{tpu_custom_call.1} parent=48 // pred_check
            %p297 = pneg %p296
          $region53: #{tpu_custom_call.1} parent=48 // pred_check_branch
            %299 = sbr.rel (%p297) target = $region55
          $region54: #{tpu_custom_call.1} parent=48 // pred_region
            %s300 = scalar_lea.sflag [#allocation5], %s295
            %s301 = smul.u32 1, 1
            %s302 = sshll.u32 %s301, 4
            %303 = dma.done %s300, %s302
          $region55: #{tpu_custom_call.1} parent=48 // pred_fallthru
            _
          %s304 = smul.u32 %s293, 8
          %s305 = sadd.s32 %s304, %s286
          %s306 = sadd.s32 %s305, %s294
          %s307 = sld [smem:[#allocation7 + %s306]]
          %s308 = scalar_lea.vmem %s2, %s307
          %s309 = scalar_lea.vmem [#allocation2], %s288
          %s310 = scalar_lea.sflag [#allocation5], %s295
          // Predicated region
          $region56: #{tpu_custom_call.1} parent=48 // pred_check
            _
          $region57: #{tpu_custom_call.1} parent=48 // pred_check_branch
            %312 = sbr.rel target = $region59
          $region58: #{tpu_custom_call.1} parent=48 // pred_region
            // Predicated region
            $region71: #{tpu_custom_call.1} parent=58 // pred_check
              _
            $region72: #{tpu_custom_call.1} parent=58 // pred_check_branch
              %328 = sbr.rel (0) target = $region74
            $region73: #{tpu_custom_call.1} parent=58 // pred_region
              %s330 = ssub.s32 2, 1
              loop: start=0, step=1, limit=1
              $region75: #{tpu_custom_call.1} parent=73 // loop_pre_header
                _
              $region76: #{tpu_custom_call.1} parent=73 // loop_header
                %s332 = sphi 0, %s336
                %p333 = scmp.ge.s32.totalorder %s332, 1
                %s337 = sphi %s308, %s308
                %s338 = sphi %s309, %s309
              $region77: #{tpu_custom_call.1} parent=73 // loop_header_branch
                %335 = sbr.rel (%p333) target = $region81
              $region78: #{tpu_custom_call.1} parent=73 // loop_body
                %v339 = vld [vmem:[%s337] sm:%s330]
                %340 = vst [vmem:[%s338] sm:%s330] %v339
              $region79: #{tpu_custom_call.1} parent=73 // loop_footer
                %s336 = sadd.s32 1, %s332
              $region80: #{tpu_custom_call.1} parent=73 // loop_footer_branch
                %331 = sbr.rel target = $region76
              $region81: #{tpu_custom_call.1} parent=73 // loop_exit
                _
            $region74: #{tpu_custom_call.1} parent=58 // pred_fallthru
              _
          $region59: #{tpu_custom_call.1} parent=48 // pred_fallthru
            _
          // Predicated region
          $region60: #{tpu_custom_call.1} parent=48 // pred_check
            _
          $region61: #{tpu_custom_call.1} parent=48 // pred_check_branch
            %314 = sbr.rel (0) target = $region63
          $region62: #{tpu_custom_call.1} parent=48 // pred_region
            %s316 = ssub.s32 2, 1
            loop: start=0, step=1, limit=1
            $region64: #{tpu_custom_call.1} parent=62 // loop_pre_header
              _
            $region65: #{tpu_custom_call.1} parent=62 // loop_header
              %s318 = sphi 0, %s322
              %p319 = scmp.ge.s32.totalorder %s318, 1
              %s323 = sphi %s308, %s308
              %s324 = sphi %s309, %s309
            $region66: #{tpu_custom_call.1} parent=62 // loop_header_branch
              %321 = sbr.rel (%p319) target = $region70
            $region67: #{tpu_custom_call.1} parent=62 // loop_body
              %v325 = vld [vmem:[%s323] sm:%s316]
              %326 = vst [vmem:[%s324] sm:%s316] %v325
            $region68: #{tpu_custom_call.1} parent=62 // loop_footer
              %s322 = sadd.s32 1, %s318
            $region69: #{tpu_custom_call.1} parent=62 // loop_footer_branch
              %317 = sbr.rel target = $region65
            $region70: #{tpu_custom_call.1} parent=62 // loop_exit
              _
          $region63: #{tpu_custom_call.1} parent=48 // pred_fallthru
            _
          // Predicated region
          $region82: #{tpu_custom_call.1} parent=48 // pred_check
            _
          $region83: #{tpu_custom_call.1} parent=48 // pred_check_branch
            %343 = sbr.rel (0) target = $region85
          $region84: #{tpu_custom_call.1} parent=48 // pred_region
            %344 = vsyncadd %s310, 16
          $region85: #{tpu_custom_call.1} parent=48 // pred_fallthru
            _
          %s345 = sadd.s32 %s294, 1
          %p346 = scmp.eq.s32.totalorder %s345, 4
          %s347 = sadd.s32 %s293, 1
          %s348 = scalar_select %p346, %s347, %s293
          %s349 = scalar_select %p346, 0, %s345
        $region49: #{tpu_custom_call.1} parent=39 // loop_footer
          %s292 = sadd.s32 1, %s288
        $region50: #{tpu_custom_call.1} parent=39 // loop_footer_branch
          %287 = sbr.rel target = $region46
        $region51: #{tpu_custom_call.1} parent=39 // loop_exit
          _
        %s350 = smul.u32 1, 1
        %s351 = sshll.u32 %s350, 4
        %352 = dma.done [#allocation5], %s351
        %s353 = scalar_lea.sflag [#allocation5], 1
        %s354 = sshll.u32 %s350, 4
        %355 = dma.done %s353, %s354
        %s356 = scalar_lea.sflag [#allocation5], 2
        %s357 = sshll.u32 %s350, 4
        %358 = dma.done %s356, %s357
        %s359 = scalar_lea.sflag [#allocation5], 3
        %s360 = sshll.u32 %s350, 4
        %361 = dma.done %s359, %s360
        %s362 = scalar_lea.sflag [#allocation5], 4
        %s363 = sshll.u32 %s350, 4
        %364 = dma.done %s362, %s363
        %s365 = scalar_lea.sflag [#allocation5], 5
        %s366 = sshll.u32 %s350, 4
        %367 = dma.done %s365, %s366
        %s368 = scalar_lea.sflag [#allocation5], 6
        %s369 = sshll.u32 %s350, 4
        %370 = dma.done %s368, %s369
        %s371 = scalar_lea.sflag [#allocation5], 7
        %s372 = sshll.u32 %s350, 4
        %373 = dma.done %s371, %s372
        %v374 = vld [vmem:[#allocation2] sm:$0xff]
        %v375 = vld [vmem:[#allocation2 + $0x8] sm:$0xff]
        %v376 = vld [vmem:[#allocation2 + $0x10] sm:$0xff]
        %v377 = vld [vmem:[#allocation2 + $0x18] sm:$0xff]
        %v378 = vpack.c.bf16 %v375, %v374
        %v379 = vpack.c.bf16 %v377, %v376
        %v380 = vld [vmem:[%s3] sm:$0xff]
        %v381 = vld [vmem:[%s3 + $0x8] sm:$0xff]
        %v382 = vld [vmem:[%s4] sm:$0x3]
        %v384 = vperm.slane %v382, 0
        %v385 = vperm.slane %v382, 1
        %v390 = vunpack.c.l.b16 %v380
        %v391 = vunpack.c.h.b16 %v380
        %v392 = vunpack.c.l.b16 %v381
        %v393 = vunpack.c.h.b16 %v381
        %v394 = vpack.c.b16 %v392, %v390
        %v395 = vpack.c.b16 %v393, %v391
        %vm398 = vcmask 130048
        %v400 = vsel %vm398, %v378, 0
        %v403 = vsel %vm398, %v379, 0
        %405 = vmatpush.bf16.msra.mxu0 0
        %406 = vmatpush.bf16.msra.mxu0 0
        %407 = vmatpush.bf16.msra.mxu0 0
        %408 = vmatpush.bf16.msra.mxu0 0
        %409 = vmatpush.bf16.msra.mxu0 0
        %410 = vmatpush.bf16.msra.mxu0 0
        %411 = vmatpush.bf16.msra.mxu0 0
        %412 = vmatpush.bf16.msra.mxu0 %v394
        %413 = vmatmul.bf16.gmra.mxu0 %v400
        %v414 = vpop.f32.mrf.mxu0
        %v415 = vadd.f32 %v384, %v414
        %v416 = vpop.f32.mrf.mxu0
        %v417 = vadd.f32 %v384, %v416
        %418 = vmatmul.bf16.gmra.mxu0 %v403
        %v419 = vpop.f32.mrf.mxu0
        %v420 = vadd.f32 %v384, %v419
        %v421 = vpop.f32.mrf.mxu0
        %v422 = vadd.f32 %v384, %v421
        %423 = vdwg.mxu0
        %424 = vmatpush.bf16.msra.mxu0 0
        %425 = vmatpush.bf16.msra.mxu0 0
        %426 = vmatpush.bf16.msra.mxu0 0
        %427 = vmatpush.bf16.msra.mxu0 0
        %428 = vmatpush.bf16.msra.mxu0 0
        %429 = vmatpush.bf16.msra.mxu0 0
        %430 = vmatpush.bf16.msra.mxu0 0
        %431 = vmatpush.bf16.msra.mxu0 %v395
        %432 = vmatmul.bf16.gmra.mxu0 %v400
        %v433 = vpop.f32.mrf.mxu0
        %v434 = vadd.f32 %v385, %v433
        %v435 = vpop.f32.mrf.mxu0
        %v436 = vadd.f32 %v385, %v435
        %437 = vmatmul.bf16.gmra.mxu0 %v403
        %v438 = vpop.f32.mrf.mxu0
        %v439 = vadd.f32 %v385, %v438
        %v440 = vpop.f32.mrf.mxu0
        %v441 = vadd.f32 %v385, %v440
        %442 = vdwg.mxu0
        %v451 = vrot.slane %v434, 4
        %v452 = vrot.slane %v436, 4
        %v453 = vrot.slane %v439, 4
        %v454 = vrot.slane %v441, 4
        %vm455 = vcmask 1043456
        %v456 = vsel %vm455, %v415, %v451
        %v457 = vsel %vm455, %v451, %v415
        %v458 = vrot.slane %v457, 4
        %v459 = vsel %vm455, %v417, %v452
        %v460 = vsel %vm455, %v452, %v417
        %v461 = vrot.slane %v460, 4
        %v462 = vsel %vm455, %v420, %v453
        %v463 = vsel %vm455, %v453, %v420
        %v464 = vrot.slane %v463, 4
        %v465 = vsel %vm455, %v422, %v454
        %v466 = vsel %vm455, %v454, %v422
        %v467 = vrot.slane %v466, 4
        %vm476 = vcmask 523268
        %vm477 = vmor %vm476, %vm455
        %478 = vst.msk [vmem:[#allocation3] sm:$0xff] %vm477, %v456
        %479 = vst.msk [vmem:[#allocation3 + $0x8] sm:$0xff] %vm477, %v458
        %480 = vst.msk [vmem:[#allocation3 + $0x10] sm:$0xff] %vm477, %v459
        %481 = vst.msk [vmem:[#allocation3 + $0x18] sm:$0xff] %vm477, %v461
        %482 = vst.msk [vmem:[#allocation3 + $0x20] sm:$0xff] %vm477, %v462
        %483 = vst.msk [vmem:[#allocation3 + $0x28] sm:$0xff] %vm477, %v464
        %484 = vst.msk [vmem:[#allocation3 + $0x30] sm:$0xff] %vm477, %v465
        %485 = vst.msk [vmem:[#allocation3 + $0x38] sm:$0xff] %vm477, %v467
        %v486 = vld [vmem:[%s284] sm:$0xf]
        %v487 = vld [vmem:[#allocation8] sm:$0xff]
        %v488 = vld [vmem:[#allocation8 + $0x8] sm:$0xff]
        %v489 = vld [vmem:[#allocation8 + $0x10] sm:$0xff]
        %v490 = vld [vmem:[#allocation8 + $0x18] sm:$0xff]
        %v491 = vld [vmem:[#allocation8 + $0x20] sm:$0xff]
        %v492 = vld [vmem:[#allocation8 + $0x28] sm:$0xff]
        %v493 = vld [vmem:[#allocation8 + $0x30] sm:$0xff]
        %v494 = vld [vmem:[#allocation8 + $0x38] sm:$0xff]
        %v495 = vld [vmem:[#allocation8 + $0x40] sm:$0xff]
        %v496 = vld [vmem:[#allocation8 + $0x48] sm:$0xff]
        %v497 = vld [vmem:[#allocation8 + $0x50] sm:$0xff]
        %v498 = vld [vmem:[#allocation8 + $0x58] sm:$0xff]
        %v499 = vld [vmem:[#allocation8 + $0x60] sm:$0xff]
        %v500 = vld [vmem:[#allocation8 + $0x68] sm:$0xff]
        %v501 = vld [vmem:[#allocation8 + $0x70] sm:$0xff]
        %v502 = vld [vmem:[#allocation8 + $0x78] sm:$0xff]
        %v503 = vld [vmem:[%s6] sm:$0x3]
        %v504 = vld [vmem:[#allocation3] sm:$0xff]
        %s505 = scalar_lea.vmem [#allocation3], 56
        %v506 = vld [vmem:[%s505] sm:$0xff]
        %v508 = vperm.slane %v503, 0
        %v509 = vperm.slane %v503, 1
        %vm512 = vcmask 523264
        %v514 = vsel %vm512, 0.0, 0
        %516 = vmatpush.msra.mxu0 0.0
        %517 = vmatpush.msra.mxu0 0.0
        %518 = vmatpush.msra.mxu0 0.0
        %519 = vmatpush.msra.mxu0 0.0
        %520 = vmatpush.msra.mxu0 0.0
        %521 = vmatpush.msra.mxu0 0.0
        %522 = vmatpush.msra.mxu0 0.0
        %523 = vmatpush.msra.mxu0 0.0
        %524 = vmatpush.msra.mxu0 %v501
        %525 = vmatpush.msra.mxu0 %v499
        %526 = vmatpush.msra.mxu0 %v497
        %527 = vmatpush.msra.mxu0 %v495
        %528 = vmatpush.msra.mxu0 %v493
        %529 = vmatpush.msra.mxu0 %v491
        %530 = vmatpush.msra.mxu0 %v489
        %531 = vmatpush.msra.mxu0 %v487
        %532 = vmatmul.f32.gmra.mxu0 %v514
        %v533 = vpop.f32.mrf.mxu0
        %v534 = vadd.f32 %v508, %v533
        %535 = vdwg.mxu0
        %536 = vmatpush.msra.mxu0 0.0
        %537 = vmatpush.msra.mxu0 0.0
        %538 = vmatpush.msra.mxu0 0.0
        %539 = vmatpush.msra.mxu0 0.0
        %540 = vmatpush.msra.mxu0 0.0
        %541 = vmatpush.msra.mxu0 0.0
        %542 = vmatpush.msra.mxu0 0.0
        %543 = vmatpush.msra.mxu0 0.0
        %544 = vmatpush.msra.mxu0 %v502
        %545 = vmatpush.msra.mxu0 %v500
        %546 = vmatpush.msra.mxu0 %v498
        %547 = vmatpush.msra.mxu0 %v496
        %548 = vmatpush.msra.mxu0 %v494
        %549 = vmatpush.msra.mxu0 %v492
        %550 = vmatpush.msra.mxu0 %v490
        %551 = vmatpush.msra.mxu0 %v488
        %552 = vmatmul.f32.gmra.mxu0 %v514
        %v553 = vpop.f32.mrf.mxu0
        %v554 = vadd.f32 %v509, %v553
        %555 = vdwg.mxu0
        %v556 = vadd.f32 %v504, %v534
        %v557 = vxor.u32 %v556, 2147483648
        %v558 = vmul.f32 %v557, 1.442695
        %v559 = vpow.pop %v558
        %v560 = vadd.f32 %v559, 1.0
        %v561 = vrcp.pop %v560
        %v562 = vmul.f32 %v560, %v561
        %v563 = vsub.f32 1.0, %v562
        %v564 = vmul.f32 %v561, %v563
        %v565 = vadd.f32 %v561, %v564
        %vm566 = vweird.f32 %v560
        %vm567 = vweird.f32 %v561
        %vm568 = vmor %vm566, %vm567
        %v569 = vsel %vm568, %v561, %v565
        %v570 = vand.u32 2147483647, %v560
        %vm571 = vcmp.eq.f32.partialorder %v570, 8.507059e+37
        %v572 = vand.u32 %v560, 2147483648
        %v573 = vor.u32 1.1754944e-38, %v572
        %v574 = vsel %vm571, %v573, %v569
        %v575 = vmul.f32 1.0, %v574
        %577 = vrot.lane.b32.xlu0 %v534, 64
        %v578 = vpop.permute.xlu0 %577
        %v580 = vmul.f32 %v575, %v578
        %582 = vrot.lane.b32.xlu0 %v580, 64
        %v583 = vpop.permute.xlu0 %582
        %v585 = vadd.f32 %v504, %v583
        %v586 = vtanh.pop %v585
        %v587 = vsub.f32 1.0, %v575
        %589 = vrot.lane.b32.xlu0 %v586, 96
        %v590 = vpop.permute.xlu0 %589
        %v592 = vmul.f32 %v587, %v590
        %v593 = vmul.f32 %v575, 0.0
        %v594 = vadd.f32 %v592, %v593
        %v596 = vrot.slane %v554, 4
        %v597 = vsel %vm455, %v534, %v596
        %v599 = vadd.f32 %v506, %v597
        %v600 = vxor.u32 %v599, 2147483648
        %v601 = vmul.f32 %v600, 1.442695
        %v602 = vpow.pop %v601
        %v603 = vadd.f32 %v602, 1.0
        %v604 = vrcp.pop %v603
        %v605 = vmul.f32 %v603, %v604
        %v606 = vsub.f32 1.0, %v605
        %v607 = vmul.f32 %v604, %v606
        %v608 = vadd.f32 %v604, %v607
        %vm609 = vweird.f32 %v603
        %vm610 = vweird.f32 %v604
        %vm611 = vmor %vm609, %vm610
        %v612 = vsel %vm611, %v604, %v608
        %v613 = vand.u32 2147483647, %v603
        %vm614 = vcmp.eq.f32.partialorder %v613, 8.507059e+37
        %v615 = vand.u32 %v603, 2147483648
        %v616 = vor.u32 1.1754944e-38, %v615
        %v617 = vsel %vm614, %v616, %v612
        %v618 = vmul.f32 1.0, %v617
        %619 = vrot.lane.b32.xlu0 %v554, 64
        %v620 = vpop.permute.xlu0 %619
        %v622 = vmul.f32 %v618, %v620
        %624 = vrot.lane.b32.xlu0 %v506, 96
        %v625 = vpop.permute.xlu0 %624
        %v626 = vrot.slane %v625, 4
        %629 = vrot.lane.b32.xlu0 %v622, 32
        %v630 = vpop.permute.xlu0 %629
        %v632 = vadd.f32 %v626, %v630
        %v633 = vtanh.pop %v632
        %v635 = vrot.slane %v618, 4
        %v637 = vsub.f32 1.0, %v635
        %v638 = vmul.f32 %v637, %v633
        %v639 = vmul.f32 %v635, 0.0
        %v640 = vadd.f32 %v638, %v639
        %vm641 = vcmp.gt.s32.totalorder %v486, 0
        %vm642 = vcmp.gt.s32.totalorder %v486, 7
        %v643 = vsel %vm641, 1, 0
        %644 = vset.pattern.permute.xlu0 0
        %645 = vperm.xlu0 %644, %v643
        %v646 = vpop.permute.xlu0 %645
        %vm647 = vcmp.eq.s32.totalorder %v646, 1
        %649 = vst [vmem:[#allocation1] ss:$2 sm:$0xff] %v594
        %v650 = vld.sshfl [vmem:[#allocation1] sm:$0xff pattern:$0x75316420]
        %651 = vrot.lane.b32.xlu0 %v650, 96
        %v652 = vpop.permute.xlu0 %651
        %v654 = vsel %vm647, %v652, 0.0
        %v655 = vsel %vm642, 1, 0
        %656 = vset.pattern.permute.xlu0 0
        %657 = vperm.xlu0 %656, %v655
        %v658 = vpop.permute.xlu0 %657
        %vm659 = vcmp.eq.s32.totalorder %v658, 1
        %v660 = vsel %vm659, %v640, 0.0
        %v662 = vrot.slane %v654, 1
        %663 = vrot.lane.b32.xlu0 %v662, 32
        %v664 = vpop.permute.xlu0 %663
        %v666 = vrot.slane %v654, 2
        %667 = vrot.lane.b32.xlu0 %v666, 64
        %v668 = vpop.permute.xlu0 %667
        %v670 = vrot.slane %v654, 3
        %671 = vrot.lane.b32.xlu0 %v670, 96
        %v672 = vpop.permute.xlu0 %671
        %vm674 = vcmask 261120
        %v675 = vsel %vm674, %v654, %v664
        %v676 = vsel %vm512, %v675, %v668
        %vm677 = vcmask 785408
        %v678 = vsel %vm677, %v676, %v672
        %679 = vst [vmem:[%s273] sm:$0x1] %v678
        %v681 = vrot.slane %v660, 1
        %682 = vrot.lane.b32.xlu0 %v681, 32
        %v683 = vpop.permute.xlu0 %682
        %v685 = vrot.slane %v660, 2
        %686 = vrot.lane.b32.xlu0 %v685, 64
        %v687 = vpop.permute.xlu0 %686
        %v689 = vrot.slane %v660, 3
        %690 = vrot.lane.b32.xlu0 %v689, 96
        %v691 = vpop.permute.xlu0 %690
        %v693 = vsel %vm674, %v660, %v683
        %v694 = vsel %vm512, %v693, %v687
        %v695 = vsel %vm677, %v694, %v691
        %696 = vst [vmem:[#allocation4 + $0x7] sm:$0x1] %v695
        %s697 = scalar_lea.vmem [#allocation3], 8
        %v698 = vld [vmem:[%s697] sm:$0xff]
        %s699 = scalar_lea.vmem [#allocation3], 48
        %v700 = vld [vmem:[%s699] sm:$0xff]
        %701 = vrot.lane.b32.xlu0 %v660, 32
        %v702 = vpop.permute.xlu0 %701
        %v704 = vsel %vm674, %v654, %v702
        %v706 = vsel %vm512, %v704, 0
        %708 = vmatpush.msra.mxu0 0.0
        %709 = vmatpush.msra.mxu0 0.0
        %710 = vmatpush.msra.mxu0 0.0
        %711 = vmatpush.msra.mxu0 0.0
        %712 = vmatpush.msra.mxu0 0.0
        %713 = vmatpush.msra.mxu0 0.0
        %714 = vmatpush.msra.mxu0 0.0
        %715 = vmatpush.msra.mxu0 0.0
        %716 = vmatpush.msra.mxu0 %v501
        %717 = vmatpush.msra.mxu0 %v499
        %718 = vmatpush.msra.mxu0 %v497
        %719 = vmatpush.msra.mxu0 %v495
        %720 = vmatpush.msra.mxu0 %v493
        %721 = vmatpush.msra.mxu0 %v491
        %722 = vmatpush.msra.mxu0 %v489
        %723 = vmatpush.msra.mxu0 %v487
        %724 = vmatmul.f32.gmra.mxu0 %v706
        %v725 = vpop.f32.mrf.mxu0
        %v726 = vadd.f32 %v508, %v725
        %727 = vdwg.mxu0
        %728 = vmatpush.msra.mxu0 0.0
        %729 = vmatpush.msra.mxu0 0.0
        %730 = vmatpush.msra.mxu0 0.0
        %731 = vmatpush.msra.mxu0 0.0
        %732 = vmatpush.msra.mxu0 0.0
        %733 = vmatpush.msra.mxu0 0.0
        %734 = vmatpush.msra.mxu0 0.0
        %735 = vmatpush.msra.mxu0 0.0
        %736 = vmatpush.msra.mxu0 %v502
        %737 = vmatpush.msra.mxu0 %v500
        %738 = vmatpush.msra.mxu0 %v498
        %739 = vmatpush.msra.mxu0 %v496
        %740 = vmatpush.msra.mxu0 %v494
        %741 = vmatpush.msra.mxu0 %v492
        %742 = vmatpush.msra.mxu0 %v490
        %743 = vmatpush.msra.mxu0 %v488
        %744 = vmatmul.f32.gmra.mxu0 %v706
        %v745 = vpop.f32.mrf.mxu0
        %v746 = vadd.f32 %v509, %v745
        %747 = vdwg.mxu0
        %v748 = vadd.f32 %v698, %v726
        %v749 = vxor.u32 %v748, 2147483648
        %v750 = vmul.f32 %v749, 1.442695
        %v751 = vpow.pop %v750
        %v752 = vadd.f32 %v751, 1.0
        %v753 = vrcp.pop %v752
        %v754 = vmul.f32 %v752, %v753
        %v755 = vsub.f32 1.0, %v754
        %v756 = vmul.f32 %v753, %v755
        %v757 = vadd.f32 %v753, %v756
        %vm758 = vweird.f32 %v752
        %vm759 = vweird.f32 %v753
        %vm760 = vmor %vm758, %vm759
        %v761 = vsel %vm760, %v753, %v757
        %v762 = vand.u32 2147483647, %v752
        %vm763 = vcmp.eq.f32.partialorder %v762, 8.507059e+37
        %v764 = vand.u32 %v752, 2147483648
        %v765 = vor.u32 1.1754944e-38, %v764
        %v766 = vsel %vm763, %v765, %v761
        %v767 = vmul.f32 1.0, %v766
        %769 = vrot.lane.b32.xlu0 %v726, 64
        %v770 = vpop.permute.xlu0 %769
        %v772 = vmul.f32 %v767, %v770
        %774 = vrot.lane.b32.xlu0 %v772, 64
        %v775 = vpop.permute.xlu0 %774
        %v777 = vadd.f32 %v698, %v775
        %v778 = vtanh.pop %v777
        %v779 = vsub.f32 1.0, %v767
        %781 = vrot.lane.b32.xlu0 %v778, 96
        %v782 = vpop.permute.xlu0 %781
        %v784 = vmul.f32 %v779, %v782
        %785 = vrot.lane.b32.xlu0 %v654, 32
        %v786 = vpop.permute.xlu0 %785
        %v788 = vmul.f32 %v767, %v786
        %v789 = vadd.f32 %v784, %v788
        %v791 = vrot.slane %v746, 4
        %v792 = vsel %vm455, %v726, %v791
        %v794 = vadd.f32 %v700, %v792
        %v795 = vxor.u32 %v794, 2147483648
        %v796 = vmul.f32 %v795, 1.442695
        %v797 = vpow.pop %v796
        %v798 = vadd.f32 %v797, 1.0
        %v799 = vrcp.pop %v798
        %v800 = vmul.f32 %v798, %v799
        %v801 = vsub.f32 1.0, %v800
        %v802 = vmul.f32 %v799, %v801
        %v803 = vadd.f32 %v799, %v802
        %vm804 = vweird.f32 %v798
        %vm805 = vweird.f32 %v799
        %vm806 = vmor %vm804, %vm805
        %v807 = vsel %vm806, %v799, %v803
        %v808 = vand.u32 2147483647, %v798
        %vm809 = vcmp.eq.f32.partialorder %v808, 8.507059e+37
        %v810 = vand.u32 %v798, 2147483648
        %v811 = vor.u32 1.1754944e-38, %v810
        %v812 = vsel %vm809, %v811, %v807
        %v813 = vmul.f32 1.0, %v812
        %814 = vrot.lane.b32.xlu0 %v746, 64
        %v815 = vpop.permute.xlu0 %814
        %v817 = vmul.f32 %v813, %v815
        %819 = vrot.lane.b32.xlu0 %v700, 96
        %v820 = vpop.permute.xlu0 %819
        %v821 = vrot.slane %v820, 4
        %824 = vrot.lane.b32.xlu0 %v817, 32
        %v825 = vpop.permute.xlu0 %824
        %v827 = vadd.f32 %v821, %v825
        %v828 = vtanh.pop %v827
        %v830 = vrot.slane %v813, 4
        %v832 = vsub.f32 1.0, %v830
        %v833 = vmul.f32 %v832, %v828
        %v834 = vmul.f32 %v830, %v660
        %v835 = vadd.f32 %v833, %v834
        %vm836 = vcmp.gt.s32.totalorder %v486, 1
        %vm837 = vcmp.gt.s32.totalorder %v486, 6
        %v838 = vsel %vm836, 1, 0
        %839 = vset.pattern.permute.xlu0 0
        %840 = vperm.xlu0 %839, %v838
        %v841 = vpop.permute.xlu0 %840
        %vm842 = vcmp.eq.s32.totalorder %v841, 1
        %844 = vst [vmem:[#allocation1] ss:$2 sm:$0xff] %v789
        %v845 = vld.sshfl [vmem:[#allocation1] sm:$0xff pattern:$0x75316420]
        %846 = vrot.lane.b32.xlu0 %v845, 96
        %v847 = vpop.permute.xlu0 %846
        %v849 = vsel %vm842, %v847, %v654
        %v850 = vsel %vm837, 1, 0
        %851 = vset.pattern.permute.xlu0 0
        %852 = vperm.xlu0 %851, %v850
        %v853 = vpop.permute.xlu0 %852
        %vm854 = vcmp.eq.s32.totalorder %v853, 1
        %v855 = vsel %vm854, %v835, %v660
        %856 = vst [vmem:[#allocation1] ss:$2 sm:$0xff] %v789
        %v857 = vld.sshfl [vmem:[#allocation1] sm:$0xff pattern:$0x75316420]
        %858 = vrot.lane.b32.xlu0 %v857, 96
        %v859 = vpop.permute.xlu0 %858
        %v861 = vsel %vm842, %v859, 0.0
        %v863 = vrot.slane %v861, 1
        %864 = vrot.lane.b32.xlu0 %v863, 32
        %v865 = vpop.permute.xlu0 %864
        %v867 = vrot.slane %v861, 2
        %868 = vrot.lane.b32.xlu0 %v867, 64
        %v869 = vpop.permute.xlu0 %868
        %v871 = vrot.slane %v861, 3
        %872 = vrot.lane.b32.xlu0 %v871, 96
        %v873 = vpop.permute.xlu0 %872
        %v875 = vsel %vm674, %v861, %v865
        %v876 = vsel %vm512, %v875, %v869
        %v877 = vsel %vm677, %v876, %v873
        %878 = vst [vmem:[%s273 + $0x1] sm:$0x1] %v877
        %v879 = vsel %vm854, %v835, 0.0
        %v881 = vrot.slane %v879, 1
        %882 = vrot.lane.b32.xlu0 %v881, 32
        %v883 = vpop.permute.xlu0 %882
        %v885 = vrot.slane %v879, 2
        %886 = vrot.lane.b32.xlu0 %v885, 64
        %v887 = vpop.permute.xlu0 %886
        %v889 = vrot.slane %v879, 3
        %890 = vrot.lane.b32.xlu0 %v889, 96
        %v891 = vpop.permute.xlu0 %890
        %v893 = vsel %vm674, %v879, %v883
        %v894 = vsel %vm512, %v893, %v887
        %v895 = vsel %vm677, %v894, %v891
        %896 = vst [vmem:[#allocation4 + $0x6] sm:$0x1] %v895
        %s897 = scalar_lea.vmem [#allocation3], 16
        %v898 = vld [vmem:[%s897] sm:$0xff]
        %s899 = scalar_lea.vmem [#allocation3], 40
        %v900 = vld [vmem:[%s899] sm:$0xff]
        %902 = vrot.lane.b32.xlu0 %v855, 32
        %v903 = vpop.permute.xlu0 %902
        %v905 = vsel %vm674, %v849, %v903
        %v907 = vsel %vm512, %v905, 0
        %909 = vmatpush.msra.mxu0 0.0
        %910 = vmatpush.msra.mxu0 0.0
        %911 = vmatpush.msra.mxu0 0.0
        %912 = vmatpush.msra.mxu0 0.0
        %913 = vmatpush.msra.mxu0 0.0
        %914 = vmatpush.msra.mxu0 0.0
        %915 = vmatpush.msra.mxu0 0.0
        %916 = vmatpush.msra.mxu0 0.0
        %917 = vmatpush.msra.mxu0 %v501
        %918 = vmatpush.msra.mxu0 %v499
        %919 = vmatpush.msra.mxu0 %v497
        %920 = vmatpush.msra.mxu0 %v495
        %921 = vmatpush.msra.mxu0 %v493
        %922 = vmatpush.msra.mxu0 %v491
        %923 = vmatpush.msra.mxu0 %v489
        %924 = vmatpush.msra.mxu0 %v487
        %925 = vmatmul.f32.gmra.mxu0 %v907
        %v926 = vpop.f32.mrf.mxu0
        %v927 = vadd.f32 %v508, %v926
        %928 = vdwg.mxu0
        %929 = vmatpush.msra.mxu0 0.0
        %930 = vmatpush.msra.mxu0 0.0
        %931 = vmatpush.msra.mxu0 0.0
        %932 = vmatpush.msra.mxu0 0.0
        %933 = vmatpush.msra.mxu0 0.0
        %934 = vmatpush.msra.mxu0 0.0
        %935 = vmatpush.msra.mxu0 0.0
        %936 = vmatpush.msra.mxu0 0.0
        %937 = vmatpush.msra.mxu0 %v502
        %938 = vmatpush.msra.mxu0 %v500
        %939 = vmatpush.msra.mxu0 %v498
        %940 = vmatpush.msra.mxu0 %v496
        %941 = vmatpush.msra.mxu0 %v494
        %942 = vmatpush.msra.mxu0 %v492
        %943 = vmatpush.msra.mxu0 %v490
        %944 = vmatpush.msra.mxu0 %v488
        %945 = vmatmul.f32.gmra.mxu0 %v907
        %v946 = vpop.f32.mrf.mxu0
        %v947 = vadd.f32 %v509, %v946
        %948 = vdwg.mxu0
        %v949 = vadd.f32 %v898, %v927
        %v950 = vxor.u32 %v949, 2147483648
        %v951 = vmul.f32 %v950, 1.442695
        %v952 = vpow.pop %v951
        %v953 = vadd.f32 %v952, 1.0
        %v954 = vrcp.pop %v953
        %v955 = vmul.f32 %v953, %v954
        %v956 = vsub.f32 1.0, %v955
        %v957 = vmul.f32 %v954, %v956
        %v958 = vadd.f32 %v954, %v957
        %vm959 = vweird.f32 %v953
        %vm960 = vweird.f32 %v954
        %vm961 = vmor %vm959, %vm960
        %v962 = vsel %vm961, %v954, %v958
        %v963 = vand.u32 2147483647, %v953
        %vm964 = vcmp.eq.f32.partialorder %v963, 8.507059e+37
        %v965 = vand.u32 %v953, 2147483648
        %v966 = vor.u32 1.1754944e-38, %v965
        %v967 = vsel %vm964, %v966, %v962
        %v968 = vmul.f32 1.0, %v967
        %970 = vrot.lane.b32.xlu0 %v927, 64
        %v971 = vpop.permute.xlu0 %970
        %v973 = vmul.f32 %v968, %v971
        %975 = vrot.lane.b32.xlu0 %v973, 64
        %v976 = vpop.permute.xlu0 %975
        %v978 = vadd.f32 %v898, %v976
        %v979 = vtanh.pop %v978
        %v980 = vsub.f32 1.0, %v968
        %982 = vrot.lane.b32.xlu0 %v979, 96
        %v983 = vpop.permute.xlu0 %982
        %v985 = vmul.f32 %v980, %v983
        %987 = vrot.lane.b32.xlu0 %v849, 32
        %v988 = vpop.permute.xlu0 %987
        %v990 = vmul.f32 %v968, %v988
        %v991 = vadd.f32 %v985, %v990
        %v993 = vrot.slane %v947, 4
        %v994 = vsel %vm455, %v927, %v993
        %v996 = vadd.f32 %v900, %v994
        %v997 = vxor.u32 %v996, 2147483648
        %v998 = vmul.f32 %v997, 1.442695
        %v999 = vpow.pop %v998
        %v1000 = vadd.f32 %v999, 1.0
        %v1001 = vrcp.pop %v1000
        %v1002 = vmul.f32 %v1000, %v1001
        %v1003 = vsub.f32 1.0, %v1002
        %v1004 = vmul.f32 %v1001, %v1003
        %v1005 = vadd.f32 %v1001, %v1004
        %vm1006 = vweird.f32 %v1000
        %vm1007 = vweird.f32 %v1001
        %vm1008 = vmor %vm1006, %vm1007
        %v1009 = vsel %vm1008, %v1001, %v1005
        %v1010 = vand.u32 2147483647, %v1000
        %vm1011 = vcmp.eq.f32.partialorder %v1010, 8.507059e+37
        %v1012 = vand.u32 %v1000, 2147483648
        %v1013 = vor.u32 1.1754944e-38, %v1012
        %v1014 = vsel %vm1011, %v1013, %v1009
        %v1015 = vmul.f32 1.0, %v1014
        %1016 = vrot.lane.b32.xlu0 %v947, 64
        %v1017 = vpop.permute.xlu0 %1016
        %v1019 = vmul.f32 %v1015, %v1017
        %1021 = vrot.lane.b32.xlu0 %v900, 96
        %v1022 = vpop.permute.xlu0 %1021
        %v1023 = vrot.slane %v1022, 4
        %1026 = vrot.lane.b32.xlu0 %v1019, 32
        %v1027 = vpop.permute.xlu0 %1026
        %v1029 = vadd.f32 %v1023, %v1027
        %v1030 = vtanh.pop %v1029
        %v1032 = vrot.slane %v1015, 4
        %v1034 = vsub.f32 1.0, %v1032
        %v1035 = vmul.f32 %v1034, %v1030
        %v1036 = vmul.f32 %v1032, %v855
        %v1037 = vadd.f32 %v1035, %v1036
        %vm1038 = vcmp.gt.s32.totalorder %v486, 2
        %vm1039 = vcmp.gt.s32.totalorder %v486, 5
        %v1040 = vsel %vm1038, 1, 0
        %1041 = vset.pattern.permute.xlu0 0
        %1042 = vperm.xlu0 %1041, %v1040
        %v1043 = vpop.permute.xlu0 %1042
        %vm1044 = vcmp.eq.s32.totalorder %v1043, 1
        %1046 = vst [vmem:[#allocation1] ss:$2 sm:$0xff] %v991
        %v1047 = vld.sshfl [vmem:[#allocation1] sm:$0xff pattern:$0x75316420]
        %1048 = vrot.lane.b32.xlu0 %v1047, 96
        %v1049 = vpop.permute.xlu0 %1048
        %v1051 = vsel %vm1044, %v1049, %v849
        %v1052 = vsel %vm1039, 1, 0
        %1053 = vset.pattern.permute.xlu0 0
        %1054 = vperm.xlu0 %1053, %v1052
        %v1055 = vpop.permute.xlu0 %1054
        %vm1056 = vcmp.eq.s32.totalorder %v1055, 1
        %v1057 = vsel %vm1056, %v1037, %v855
        %1058 = vst [vmem:[#allocation1] ss:$2 sm:$0xff] %v991
        %v1059 = vld.sshfl [vmem:[#allocation1] sm:$0xff pattern:$0x75316420]
        %1060 = vrot.lane.b32.xlu0 %v1059, 96
        %v1061 = vpop.permute.xlu0 %1060
        %v1063 = vsel %vm1044, %v1061, 0.0
        %v1065 = vrot.slane %v1063, 1
        %1066 = vrot.lane.b32.xlu0 %v1065, 32
        %v1067 = vpop.permute.xlu0 %1066
        %v1069 = vrot.slane %v1063, 2
        %1070 = vrot.lane.b32.xlu0 %v1069, 64
        %v1071 = vpop.permute.xlu0 %1070
        %v1073 = vrot.slane %v1063, 3
        %1074 = vrot.lane.b32.xlu0 %v1073, 96
        %v1075 = vpop.permute.xlu0 %1074
        %v1077 = vsel %vm674, %v1063, %v1067
        %v1078 = vsel %vm512, %v1077, %v1071
        %v1079 = vsel %vm677, %v1078, %v1075
        %1080 = vst [vmem:[%s273 + $0x2] sm:$0x1] %v1079
        %v1081 = vsel %vm1056, %v1037, 0.0
        %v1083 = vrot.slane %v1081, 1
        %1084 = vrot.lane.b32.xlu0 %v1083, 32
        %v1085 = vpop.permute.xlu0 %1084
        %v1087 = vrot.slane %v1081, 2
        %1088 = vrot.lane.b32.xlu0 %v1087, 64
        %v1089 = vpop.permute.xlu0 %1088
        %v1091 = vrot.slane %v1081, 3
        %1092 = vrot.lane.b32.xlu0 %v1091, 96
        %v1093 = vpop.permute.xlu0 %1092
        %v1095 = vsel %vm674, %v1081, %v1085
        %v1096 = vsel %vm512, %v1095, %v1089
        %v1097 = vsel %vm677, %v1096, %v1093
        %1098 = vst [vmem:[#allocation4 + $0x5] sm:$0x1] %v1097
        %s1099 = scalar_lea.vmem [#allocation3], 24
        %v1100 = vld [vmem:[%s1099] sm:$0xff]
        %s1101 = scalar_lea.vmem [#allocation3], 32
        %v1102 = vld [vmem:[%s1101] sm:$0xff]
        %1104 = vrot.lane.b32.xlu0 %v1057, 32
        %v1105 = vpop.permute.xlu0 %1104
        %v1107 = vsel %vm674, %v1051, %v1105
        %v1109 = vsel %vm512, %v1107, 0
        %1111 = vmatpush.msra.mxu0 0.0
        %1112 = vmatpush.msra.mxu0 0.0
        %1113 = vmatpush.msra.mxu0 0.0
        %1114 = vmatpush.msra.mxu0 0.0
        %1115 = vmatpush.msra.mxu0 0.0
        %1116 = vmatpush.msra.mxu0 0.0
        %1117 = vmatpush.msra.mxu0 0.0
        %1118 = vmatpush.msra.mxu0 0.0
        %1119 = vmatpush.msra.mxu0 %v501
        %1120 = vmatpush.msra.mxu0 %v499
        %1121 = vmatpush.msra.mxu0 %v497
        %1122 = vmatpush.msra.mxu0 %v495
        %1123 = vmatpush.msra.mxu0 %v493
        %1124 = vmatpush.msra.mxu0 %v491
        %1125 = vmatpush.msra.mxu0 %v489
        %1126 = vmatpush.msra.mxu0 %v487
        %1127 = vmatmul.f32.gmra.mxu0 %v1109
        %v1128 = vpop.f32.mrf.mxu0
        %v1129 = vadd.f32 %v508, %v1128
        %1130 = vdwg.mxu0
        %1131 = vmatpush.msra.mxu0 0.0
        %1132 = vmatpush.msra.mxu0 0.0
        %1133 = vmatpush.msra.mxu0 0.0
        %1134 = vmatpush.msra.mxu0 0.0
        %1135 = vmatpush.msra.mxu0 0.0
        %1136 = vmatpush.msra.mxu0 0.0
        %1137 = vmatpush.msra.mxu0 0.0
        %1138 = vmatpush.msra.mxu0 0.0
        %1139 = vmatpush.msra.mxu0 %v502
        %1140 = vmatpush.msra.mxu0 %v500
        %1141 = vmatpush.msra.mxu0 %v498
        %1142 = vmatpush.msra.mxu0 %v496
        %1143 = vmatpush.msra.mxu0 %v494
        %1144 = vmatpush.msra.mxu0 %v492
        %1145 = vmatpush.msra.mxu0 %v490
        %1146 = vmatpush.msra.mxu0 %v488
        %1147 = vmatmul.f32.gmra.mxu0 %v1109
        %v1148 = vpop.f32.mrf.mxu0
        %v1149 = vadd.f32 %v509, %v1148
        %1150 = vdwg.mxu0
        %v1151 = vadd.f32 %v1100, %v1129
        %v1152 = vxor.u32 %v1151, 2147483648
        %v1153 = vmul.f32 %v1152, 1.442695
        %v1154 = vpow.pop %v1153
        %v1155 = vadd.f32 %v1154, 1.0
        %v1156 = vrcp.pop %v1155
        %v1157 = vmul.f32 %v1155, %v1156
        %v1158 = vsub.f32 1.0, %v1157
        %v1159 = vmul.f32 %v1156, %v1158
        %v1160 = vadd.f32 %v1156, %v1159
        %vm1161 = vweird.f32 %v1155
        %vm1162 = vweird.f32 %v1156
        %vm1163 = vmor %vm1161, %vm1162
        %v1164 = vsel %vm1163, %v1156, %v1160
        %v1165 = vand.u32 2147483647, %v1155
        %vm1166 = vcmp.eq.f32.partialorder %v1165, 8.507059e+37
        %v1167 = vand.u32 %v1155, 2147483648
        %v1168 = vor.u32 1.1754944e-38, %v1167
        %v1169 = vsel %vm1166, %v1168, %v1164
        %v1170 = vmul.f32 1.0, %v1169
        %1172 = vrot.lane.b32.xlu0 %v1129, 64
        %v1173 = vpop.permute.xlu0 %1172
        %v1175 = vmul.f32 %v1170, %v1173
        %1177 = vrot.lane.b32.xlu0 %v1175, 64
        %v1178 = vpop.permute.xlu0 %1177
        %v1180 = vadd.f32 %v1100, %v1178
        %v1181 = vtanh.pop %v1180
        %v1182 = vsub.f32 1.0, %v1170
        %1184 = vrot.lane.b32.xlu0 %v1181, 96
        %v1185 = vpop.permute.xlu0 %1184
        %v1187 = vmul.f32 %v1182, %v1185
        %1189 = vrot.lane.b32.xlu0 %v1051, 32
        %v1190 = vpop.permute.xlu0 %1189
        %v1192 = vmul.f32 %v1170, %v1190
        %v1193 = vadd.f32 %v1187, %v1192
        %v1195 = vrot.slane %v1149, 4
        %v1196 = vsel %vm455, %v1129, %v1195
        %v1198 = vadd.f32 %v1102, %v1196
        %v1199 = vxor.u32 %v1198, 2147483648
        %v1200 = vmul.f32 %v1199, 1.442695
        %v1201 = vpow.pop %v1200
        %v1202 = vadd.f32 %v1201, 1.0
        %v1203 = vrcp.pop %v1202
        %v1204 = vmul.f32 %v1202, %v1203
        %v1205 = vsub.f32 1.0, %v1204
        %v1206 = vmul.f32 %v1203, %v1205
        %v1207 = vadd.f32 %v1203, %v1206
        %vm1208 = vweird.f32 %v1202
        %vm1209 = vweird.f32 %v1203
        %vm1210 = vmor %vm1208, %vm1209
        %v1211 = vsel %vm1210, %v1203, %v1207
        %v1212 = vand.u32 2147483647, %v1202
        %vm1213 = vcmp.eq.f32.partialorder %v1212, 8.507059e+37
        %v1214 = vand.u32 %v1202, 2147483648
        %v1215 = vor.u32 1.1754944e-38, %v1214
        %v1216 = vsel %vm1213, %v1215, %v1211
        %v1217 = vmul.f32 1.0, %v1216
        %1218 = vrot.lane.b32.xlu0 %v1149, 64
        %v1219 = vpop.permute.xlu0 %1218
        %v1221 = vmul.f32 %v1217, %v1219
        %1223 = vrot.lane.b32.xlu0 %v1102, 96
        %v1224 = vpop.permute.xlu0 %1223
        %v1225 = vrot.slane %v1224, 4
        %1228 = vrot.lane.b32.xlu0 %v1221, 32
        %v1229 = vpop.permute.xlu0 %1228
        %v1231 = vadd.f32 %v1225, %v1229
        %v1232 = vtanh.pop %v1231
        %v1234 = vrot.slane %v1217, 4
        %v1236 = vsub.f32 1.0, %v1234
        %v1237 = vmul.f32 %v1236, %v1232
        %v1238 = vmul.f32 %v1234, %v1057
        %v1239 = vadd.f32 %v1237, %v1238
        %vm1240 = vcmp.gt.s32.totalorder %v486, 3
        %vm1241 = vcmp.gt.s32.totalorder %v486, 4
        %v1242 = vsel %vm1240, 1, 0
        %1243 = vset.pattern.permute.xlu0 0
        %1244 = vperm.xlu0 %1243, %v1242
        %v1245 = vpop.permute.xlu0 %1244
        %vm1246 = vcmp.eq.s32.totalorder %v1245, 1
        %1248 = vst [vmem:[#allocation1] ss:$2 sm:$0xff] %v1193
        %v1249 = vld.sshfl [vmem:[#allocation1] sm:$0xff pattern:$0x75316420]
        %1250 = vrot.lane.b32.xlu0 %v1249, 96
        %v1251 = vpop.permute.xlu0 %1250
        %v1253 = vsel %vm1246, %v1251, %v1051
        %v1254 = vsel %vm1241, 1, 0
        %1255 = vset.pattern.permute.xlu0 0
        %1256 = vperm.xlu0 %1255, %v1254
        %v1257 = vpop.permute.xlu0 %1256
        %vm1258 = vcmp.eq.s32.totalorder %v1257, 1
        %v1259 = vsel %vm1258, %v1239, %v1057
        %1260 = vst [vmem:[#allocation1] ss:$2 sm:$0xff] %v1193
        %v1261 = vld.sshfl [vmem:[#allocation1] sm:$0xff pattern:$0x75316420]
        %1262 = vrot.lane.b32.xlu0 %v1261, 96
        %v1263 = vpop.permute.xlu0 %1262
        %v1265 = vsel %vm1246, %v1263, 0.0
        %v1267 = vrot.slane %v1265, 1
        %1268 = vrot.lane.b32.xlu0 %v1267, 32
        %v1269 = vpop.permute.xlu0 %1268
        %v1271 = vrot.slane %v1265, 2
        %1272 = vrot.lane.b32.xlu0 %v1271, 64
        %v1273 = vpop.permute.xlu0 %1272
        %v1275 = vrot.slane %v1265, 3
        %1276 = vrot.lane.b32.xlu0 %v1275, 96
        %v1277 = vpop.permute.xlu0 %1276
        %v1279 = vsel %vm674, %v1265, %v1269
        %v1280 = vsel %vm512, %v1279, %v1273
        %v1281 = vsel %vm677, %v1280, %v1277
        %1282 = vst [vmem:[%s273 + $0x3] sm:$0x1] %v1281
        %v1283 = vsel %vm1258, %v1239, 0.0
        %v1285 = vrot.slane %v1283, 1
        %1286 = vrot.lane.b32.xlu0 %v1285, 32
        %v1287 = vpop.permute.xlu0 %1286
        %v1289 = vrot.slane %v1283, 2
        %1290 = vrot.lane.b32.xlu0 %v1289, 64
        %v1291 = vpop.permute.xlu0 %1290
        %v1293 = vrot.slane %v1283, 3
        %1294 = vrot.lane.b32.xlu0 %v1293, 96
        %v1295 = vpop.permute.xlu0 %1294
        %v1297 = vsel %vm674, %v1283, %v1287
        %v1298 = vsel %vm512, %v1297, %v1291
        %v1299 = vsel %vm677, %v1298, %v1295
        %1300 = vst [vmem:[#allocation4 + $0x4] sm:$0x1] %v1299
        %v1301 = vld [vmem:[%s1101] sm:$0xff]
        %v1302 = vld [vmem:[%s1099] sm:$0xff]
        %1304 = vrot.lane.b32.xlu0 %v1259, 32
        %v1305 = vpop.permute.xlu0 %1304
        %v1307 = vsel %vm674, %v1253, %v1305
        %v1309 = vsel %vm512, %v1307, 0
        %1311 = vmatpush.msra.mxu0 0.0
        %1312 = vmatpush.msra.mxu0 0.0
        %1313 = vmatpush.msra.mxu0 0.0
        %1314 = vmatpush.msra.mxu0 0.0
        %1315 = vmatpush.msra.mxu0 0.0
        %1316 = vmatpush.msra.mxu0 0.0
        %1317 = vmatpush.msra.mxu0 0.0
        %1318 = vmatpush.msra.mxu0 0.0
        %1319 = vmatpush.msra.mxu0 %v501
        %1320 = vmatpush.msra.mxu0 %v499
        %1321 = vmatpush.msra.mxu0 %v497
        %1322 = vmatpush.msra.mxu0 %v495
        %1323 = vmatpush.msra.mxu0 %v493
        %1324 = vmatpush.msra.mxu0 %v491
        %1325 = vmatpush.msra.mxu0 %v489
        %1326 = vmatpush.msra.mxu0 %v487
        %1327 = vmatmul.f32.gmra.mxu0 %v1309
        %v1328 = vpop.f32.mrf.mxu0
        %v1329 = vadd.f32 %v508, %v1328
        %1330 = vdwg.mxu0
        %1331 = vmatpush.msra.mxu0 0.0
        %1332 = vmatpush.msra.mxu0 0.0
        %1333 = vmatpush.msra.mxu0 0.0
        %1334 = vmatpush.msra.mxu0 0.0
        %1335 = vmatpush.msra.mxu0 0.0
        %1336 = vmatpush.msra.mxu0 0.0
        %1337 = vmatpush.msra.mxu0 0.0
        %1338 = vmatpush.msra.mxu0 0.0
        %1339 = vmatpush.msra.mxu0 %v502
        %1340 = vmatpush.msra.mxu0 %v500
        %1341 = vmatpush.msra.mxu0 %v498
        %1342 = vmatpush.msra.mxu0 %v496
        %1343 = vmatpush.msra.mxu0 %v494
        %1344 = vmatpush.msra.mxu0 %v492
        %1345 = vmatpush.msra.mxu0 %v490
        %1346 = vmatpush.msra.mxu0 %v488
        %1347 = vmatmul.f32.gmra.mxu0 %v1309
        %v1348 = vpop.f32.mrf.mxu0
        %v1349 = vadd.f32 %v509, %v1348
        %1350 = vdwg.mxu0
        %v1351 = vadd.f32 %v1301, %v1329
        %v1352 = vxor.u32 %v1351, 2147483648
        %v1353 = vmul.f32 %v1352, 1.442695
        %v1354 = vpow.pop %v1353
        %v1355 = vadd.f32 %v1354, 1.0
        %v1356 = vrcp.pop %v1355
        %v1357 = vmul.f32 %v1355, %v1356
        %v1358 = vsub.f32 1.0, %v1357
        %v1359 = vmul.f32 %v1356, %v1358
        %v1360 = vadd.f32 %v1356, %v1359
        %vm1361 = vweird.f32 %v1355
        %vm1362 = vweird.f32 %v1356
        %vm1363 = vmor %vm1361, %vm1362
        %v1364 = vsel %vm1363, %v1356, %v1360
        %v1365 = vand.u32 2147483647, %v1355
        %vm1366 = vcmp.eq.f32.partialorder %v1365, 8.507059e+37
        %v1367 = vand.u32 %v1355, 2147483648
        %v1368 = vor.u32 1.1754944e-38, %v1367
        %v1369 = vsel %vm1366, %v1368, %v1364
        %v1370 = vmul.f32 1.0, %v1369
        %1372 = vrot.lane.b32.xlu0 %v1329, 64
        %v1373 = vpop.permute.xlu0 %1372
        %v1375 = vmul.f32 %v1370, %v1373
        %1377 = vrot.lane.b32.xlu0 %v1375, 64
        %v1378 = vpop.permute.xlu0 %1377
        %v1380 = vadd.f32 %v1301, %v1378
        %v1381 = vtanh.pop %v1380
        %v1382 = vsub.f32 1.0, %v1370
        %1384 = vrot.lane.b32.xlu0 %v1381, 96
        %v1385 = vpop.permute.xlu0 %1384
        %v1387 = vmul.f32 %v1382, %v1385
        %1389 = vrot.lane.b32.xlu0 %v1253, 32
        %v1390 = vpop.permute.xlu0 %1389
        %v1392 = vmul.f32 %v1370, %v1390
        %v1393 = vadd.f32 %v1387, %v1392
        %v1395 = vrot.slane %v1349, 4
        %v1396 = vsel %vm455, %v1329, %v1395
        %v1398 = vadd.f32 %v1302, %v1396
        %v1399 = vxor.u32 %v1398, 2147483648
        %v1400 = vmul.f32 %v1399, 1.442695
        %v1401 = vpow.pop %v1400
        %v1402 = vadd.f32 %v1401, 1.0
        %v1403 = vrcp.pop %v1402
        %v1404 = vmul.f32 %v1402, %v1403
        %v1405 = vsub.f32 1.0, %v1404
        %v1406 = vmul.f32 %v1403, %v1405
        %v1407 = vadd.f32 %v1403, %v1406
        %vm1408 = vweird.f32 %v1402
        %vm1409 = vweird.f32 %v1403
        %vm1410 = vmor %vm1408, %vm1409
        %v1411 = vsel %vm1410, %v1403, %v1407
        %v1412 = vand.u32 2147483647, %v1402
        %vm1413 = vcmp.eq.f32.partialorder %v1412, 8.507059e+37
        %v1414 = vand.u32 %v1402, 2147483648
        %v1415 = vor.u32 1.1754944e-38, %v1414
        %v1416 = vsel %vm1413, %v1415, %v1411
        %v1417 = vmul.f32 1.0, %v1416
        %1418 = vrot.lane.b32.xlu0 %v1349, 64
        %v1419 = vpop.permute.xlu0 %1418
        %v1421 = vmul.f32 %v1417, %v1419
        %1423 = vrot.lane.b32.xlu0 %v1302, 96
        %v1424 = vpop.permute.xlu0 %1423
        %v1425 = vrot.slane %v1424, 4
        %1428 = vrot.lane.b32.xlu0 %v1421, 32
        %v1429 = vpop.permute.xlu0 %1428
        %v1431 = vadd.f32 %v1425, %v1429
        %v1432 = vtanh.pop %v1431
        %v1434 = vrot.slane %v1417, 4
        %v1436 = vsub.f32 1.0, %v1434
        %v1437 = vmul.f32 %v1436, %v1432
        %v1438 = vmul.f32 %v1434, %v1259
        %v1439 = vadd.f32 %v1437, %v1438
        %1441 = vst [vmem:[#allocation1] ss:$2 sm:$0xff] %v1393
        %v1442 = vld.sshfl [vmem:[#allocation1] sm:$0xff pattern:$0x75316420]
        %1443 = vrot.lane.b32.xlu0 %v1442, 96
        %v1444 = vpop.permute.xlu0 %1443
        %v1446 = vsel %vm1258, %v1444, %v1253
        %v1447 = vsel %vm1246, %v1439, %v1259
        %1448 = vst [vmem:[#allocation1] ss:$2 sm:$0xff] %v1393
        %v1449 = vld.sshfl [vmem:[#allocation1] sm:$0xff pattern:$0x75316420]
        %1450 = vrot.lane.b32.xlu0 %v1449, 96
        %v1451 = vpop.permute.xlu0 %1450
        %v1453 = vsel %vm1258, %v1451, 0.0
        %v1455 = vrot.slane %v1453, 1
        %1456 = vrot.lane.b32.xlu0 %v1455, 32
        %v1457 = vpop.permute.xlu0 %1456
        %v1459 = vrot.slane %v1453, 2
        %1460 = vrot.lane.b32.xlu0 %v1459, 64
        %v1461 = vpop.permute.xlu0 %1460
        %v1463 = vrot.slane %v1453, 3
        %1464 = vrot.lane.b32.xlu0 %v1463, 96
        %v1465 = vpop.permute.xlu0 %1464
        %v1467 = vsel %vm674, %v1453, %v1457
        %v1468 = vsel %vm512, %v1467, %v1461
        %v1469 = vsel %vm677, %v1468, %v1465
        %1470 = vst [vmem:[%s273 + $0x4] sm:$0x1] %v1469
        %v1471 = vsel %vm1246, %v1439, 0.0
        %v1473 = vrot.slane %v1471, 1
        %1474 = vrot.lane.b32.xlu0 %v1473, 32
        %v1475 = vpop.permute.xlu0 %1474
        %v1477 = vrot.slane %v1471, 2
        %1478 = vrot.lane.b32.xlu0 %v1477, 64
        %v1479 = vpop.permute.xlu0 %1478
        %v1481 = vrot.slane %v1471, 3
        %1482 = vrot.lane.b32.xlu0 %v1481, 96
        %v1483 = vpop.permute.xlu0 %1482
        %v1485 = vsel %vm674, %v1471, %v1475
        %v1486 = vsel %vm512, %v1485, %v1479
        %v1487 = vsel %vm677, %v1486, %v1483
        %1488 = vst [vmem:[#allocation4 + $0x3] sm:$0x1] %v1487
        %v1489 = vld [vmem:[%s899] sm:$0xff]
        %v1490 = vld [vmem:[%s897] sm:$0xff]
        %1492 = vrot.lane.b32.xlu0 %v1447, 32
        %v1493 = vpop.permute.xlu0 %1492
        %v1495 = vsel %vm674, %v1446, %v1493
        %v1497 = vsel %vm512, %v1495, 0
        %1499 = vmatpush.msra.mxu0 0.0
        %1500 = vmatpush.msra.mxu0 0.0
        %1501 = vmatpush.msra.mxu0 0.0
        %1502 = vmatpush.msra.mxu0 0.0
        %1503 = vmatpush.msra.mxu0 0.0
        %1504 = vmatpush.msra.mxu0 0.0
        %1505 = vmatpush.msra.mxu0 0.0
        %1506 = vmatpush.msra.mxu0 0.0
        %1507 = vmatpush.msra.mxu0 %v501
        %1508 = vmatpush.msra.mxu0 %v499
        %1509 = vmatpush.msra.mxu0 %v497
        %1510 = vmatpush.msra.mxu0 %v495
        %1511 = vmatpush.msra.mxu0 %v493
        %1512 = vmatpush.msra.mxu0 %v491
        %1513 = vmatpush.msra.mxu0 %v489
        %1514 = vmatpush.msra.mxu0 %v487
        %1515 = vmatmul.f32.gmra.mxu0 %v1497
        %v1516 = vpop.f32.mrf.mxu0
        %v1517 = vadd.f32 %v508, %v1516
        %1518 = vdwg.mxu0
        %1519 = vmatpush.msra.mxu0 0.0
        %1520 = vmatpush.msra.mxu0 0.0
        %1521 = vmatpush.msra.mxu0 0.0
        %1522 = vmatpush.msra.mxu0 0.0
        %1523 = vmatpush.msra.mxu0 0.0
        %1524 = vmatpush.msra.mxu0 0.0
        %1525 = vmatpush.msra.mxu0 0.0
        %1526 = vmatpush.msra.mxu0 0.0
        %1527 = vmatpush.msra.mxu0 %v502
        %1528 = vmatpush.msra.mxu0 %v500
        %1529 = vmatpush.msra.mxu0 %v498
        %1530 = vmatpush.msra.mxu0 %v496
        %1531 = vmatpush.msra.mxu0 %v494
        %1532 = vmatpush.msra.mxu0 %v492
        %1533 = vmatpush.msra.mxu0 %v490
        %1534 = vmatpush.msra.mxu0 %v488
        %1535 = vmatmul.f32.gmra.mxu0 %v1497
        %v1536 = vpop.f32.mrf.mxu0
        %v1537 = vadd.f32 %v509, %v1536
        %1538 = vdwg.mxu0
        %v1539 = vadd.f32 %v1489, %v1517
        %v1540 = vxor.u32 %v1539, 2147483648
        %v1541 = vmul.f32 %v1540, 1.442695
        %v1542 = vpow.pop %v1541
        %v1543 = vadd.f32 %v1542, 1.0
        %v1544 = vrcp.pop %v1543
        %v1545 = vmul.f32 %v1543, %v1544
        %v1546 = vsub.f32 1.0, %v1545
        %v1547 = vmul.f32 %v1544, %v1546
        %v1548 = vadd.f32 %v1544, %v1547
        %vm1549 = vweird.f32 %v1543
        %vm1550 = vweird.f32 %v1544
        %vm1551 = vmor %vm1549, %vm1550
        %v1552 = vsel %vm1551, %v1544, %v1548
        %v1553 = vand.u32 2147483647, %v1543
        %vm1554 = vcmp.eq.f32.partialorder %v1553, 8.507059e+37
        %v1555 = vand.u32 %v1543, 2147483648
        %v1556 = vor.u32 1.1754944e-38, %v1555
        %v1557 = vsel %vm1554, %v1556, %v1552
        %v1558 = vmul.f32 1.0, %v1557
        %1560 = vrot.lane.b32.xlu0 %v1517, 64
        %v1561 = vpop.permute.xlu0 %1560
        %v1563 = vmul.f32 %v1558, %v1561
        %1565 = vrot.lane.b32.xlu0 %v1563, 64
        %v1566 = vpop.permute.xlu0 %1565
        %v1568 = vadd.f32 %v1489, %v1566
        %v1569 = vtanh.pop %v1568
        %v1570 = vsub.f32 1.0, %v1558
        %1572 = vrot.lane.b32.xlu0 %v1569, 96
        %v1573 = vpop.permute.xlu0 %1572
        %v1575 = vmul.f32 %v1570, %v1573
        %1577 = vrot.lane.b32.xlu0 %v1446, 32
        %v1578 = vpop.permute.xlu0 %1577
        %v1580 = vmul.f32 %v1558, %v1578
        %v1581 = vadd.f32 %v1575, %v1580
        %v1583 = vrot.slane %v1537, 4
        %v1584 = vsel %vm455, %v1517, %v1583
        %v1586 = vadd.f32 %v1490, %v1584
        %v1587 = vxor.u32 %v1586, 2147483648
        %v1588 = vmul.f32 %v1587, 1.442695
        %v1589 = vpow.pop %v1588
        %v1590 = vadd.f32 %v1589, 1.0
        %v1591 = vrcp.pop %v1590
        %v1592 = vmul.f32 %v1590, %v1591
        %v1593 = vsub.f32 1.0, %v1592
        %v1594 = vmul.f32 %v1591, %v1593
        %v1595 = vadd.f32 %v1591, %v1594
        %vm1596 = vweird.f32 %v1590
        %vm1597 = vweird.f32 %v1591
        %vm1598 = vmor %vm1596, %vm1597
        %v1599 = vsel %vm1598, %v1591, %v1595
        %v1600 = vand.u32 2147483647, %v1590
        %vm1601 = vcmp.eq.f32.partialorder %v1600, 8.507059e+37
        %v1602 = vand.u32 %v1590, 2147483648
        %v1603 = vor.u32 1.1754944e-38, %v1602
        %v1604 = vsel %vm1601, %v1603, %v1599
        %v1605 = vmul.f32 1.0, %v1604
        %1606 = vrot.lane.b32.xlu0 %v1537, 64
        %v1607 = vpop.permute.xlu0 %1606
        %v1609 = vmul.f32 %v1605, %v1607
        %1611 = vrot.lane.b32.xlu0 %v1490, 96
        %v1612 = vpop.permute.xlu0 %1611
        %v1613 = vrot.slane %v1612, 4
        %1616 = vrot.lane.b32.xlu0 %v1609, 32
        %v1617 = vpop.permute.xlu0 %1616
        %v1619 = vadd.f32 %v1613, %v1617
        %v1620 = vtanh.pop %v1619
        %v1622 = vrot.slane %v1605, 4
        %v1624 = vsub.f32 1.0, %v1622
        %v1625 = vmul.f32 %v1624, %v1620
        %v1626 = vmul.f32 %v1622, %v1447
        %v1627 = vadd.f32 %v1625, %v1626
        %1629 = vst [vmem:[#allocation1] ss:$2 sm:$0xff] %v1581
        %v1630 = vld.sshfl [vmem:[#allocation1] sm:$0xff pattern:$0x75316420]
        %1631 = vrot.lane.b32.xlu0 %v1630, 96
        %v1632 = vpop.permute.xlu0 %1631
        %v1634 = vsel %vm1056, %v1632, %v1446
        %v1635 = vsel %vm1044, %v1627, %v1447
        %1636 = vst [vmem:[#allocation1] ss:$2 sm:$0xff] %v1581
        %v1637 = vld.sshfl [vmem:[#allocation1] sm:$0xff pattern:$0x75316420]
        %1638 = vrot.lane.b32.xlu0 %v1637, 96
        %v1639 = vpop.permute.xlu0 %1638
        %v1641 = vsel %vm1056, %v1639, 0.0
        %v1643 = vrot.slane %v1641, 1
        %1644 = vrot.lane.b32.xlu0 %v1643, 32
        %v1645 = vpop.permute.xlu0 %1644
        %v1647 = vrot.slane %v1641, 2
        %1648 = vrot.lane.b32.xlu0 %v1647, 64
        %v1649 = vpop.permute.xlu0 %1648
        %v1651 = vrot.slane %v1641, 3
        %1652 = vrot.lane.b32.xlu0 %v1651, 96
        %v1653 = vpop.permute.xlu0 %1652
        %v1655 = vsel %vm674, %v1641, %v1645
        %v1656 = vsel %vm512, %v1655, %v1649
        %v1657 = vsel %vm677, %v1656, %v1653
        %1658 = vst [vmem:[%s273 + $0x5] sm:$0x1] %v1657
        %v1659 = vsel %vm1044, %v1627, 0.0
        %v1661 = vrot.slane %v1659, 1
        %1662 = vrot.lane.b32.xlu0 %v1661, 32
        %v1663 = vpop.permute.xlu0 %1662
        %v1665 = vrot.slane %v1659, 2
        %1666 = vrot.lane.b32.xlu0 %v1665, 64
        %v1667 = vpop.permute.xlu0 %1666
        %v1669 = vrot.slane %v1659, 3
        %1670 = vrot.lane.b32.xlu0 %v1669, 96
        %v1671 = vpop.permute.xlu0 %1670
        %v1673 = vsel %vm674, %v1659, %v1663
        %v1674 = vsel %vm512, %v1673, %v1667
        %v1675 = vsel %vm677, %v1674, %v1671
        %1676 = vst [vmem:[#allocation4 + $0x2] sm:$0x1] %v1675
        %v1677 = vld [vmem:[%s699] sm:$0xff]
        %v1678 = vld [vmem:[%s697] sm:$0xff]
        %1680 = vrot.lane.b32.xlu0 %v1635, 32
        %v1681 = vpop.permute.xlu0 %1680
        %v1683 = vsel %vm674, %v1634, %v1681
        %v1685 = vsel %vm512, %v1683, 0
        %1687 = vmatpush.msra.mxu0 0.0
        %1688 = vmatpush.msra.mxu0 0.0
        %1689 = vmatpush.msra.mxu0 0.0
        %1690 = vmatpush.msra.mxu0 0.0
        %1691 = vmatpush.msra.mxu0 0.0
        %1692 = vmatpush.msra.mxu0 0.0
        %1693 = vmatpush.msra.mxu0 0.0
        %1694 = vmatpush.msra.mxu0 0.0
        %1695 = vmatpush.msra.mxu0 %v501
        %1696 = vmatpush.msra.mxu0 %v499
        %1697 = vmatpush.msra.mxu0 %v497
        %1698 = vmatpush.msra.mxu0 %v495
        %1699 = vmatpush.msra.mxu0 %v493
        %1700 = vmatpush.msra.mxu0 %v491
        %1701 = vmatpush.msra.mxu0 %v489
        %1702 = vmatpush.msra.mxu0 %v487
        %1703 = vmatmul.f32.gmra.mxu0 %v1685
        %v1704 = vpop.f32.mrf.mxu0
        %v1705 = vadd.f32 %v508, %v1704
        %1706 = vdwg.mxu0
        %1707 = vmatpush.msra.mxu0 0.0
        %1708 = vmatpush.msra.mxu0 0.0
        %1709 = vmatpush.msra.mxu0 0.0
        %1710 = vmatpush.msra.mxu0 0.0
        %1711 = vmatpush.msra.mxu0 0.0
        %1712 = vmatpush.msra.mxu0 0.0
        %1713 = vmatpush.msra.mxu0 0.0
        %1714 = vmatpush.msra.mxu0 0.0
        %1715 = vmatpush.msra.mxu0 %v502
        %1716 = vmatpush.msra.mxu0 %v500
        %1717 = vmatpush.msra.mxu0 %v498
        %1718 = vmatpush.msra.mxu0 %v496
        %1719 = vmatpush.msra.mxu0 %v494
        %1720 = vmatpush.msra.mxu0 %v492
        %1721 = vmatpush.msra.mxu0 %v490
        %1722 = vmatpush.msra.mxu0 %v488
        %1723 = vmatmul.f32.gmra.mxu0 %v1685
        %v1724 = vpop.f32.mrf.mxu0
        %v1725 = vadd.f32 %v509, %v1724
        %1726 = vdwg.mxu0
        %v1727 = vadd.f32 %v1677, %v1705
        %v1728 = vxor.u32 %v1727, 2147483648
        %v1729 = vmul.f32 %v1728, 1.442695
        %v1730 = vpow.pop %v1729
        %v1731 = vadd.f32 %v1730, 1.0
        %v1732 = vrcp.pop %v1731
        %v1733 = vmul.f32 %v1731, %v1732
        %v1734 = vsub.f32 1.0, %v1733
        %v1735 = vmul.f32 %v1732, %v1734
        %v1736 = vadd.f32 %v1732, %v1735
        %vm1737 = vweird.f32 %v1731
        %vm1738 = vweird.f32 %v1732
        %vm1739 = vmor %vm1737, %vm1738
        %v1740 = vsel %vm1739, %v1732, %v1736
        %v1741 = vand.u32 2147483647, %v1731
        %vm1742 = vcmp.eq.f32.partialorder %v1741, 8.507059e+37
        %v1743 = vand.u32 %v1731, 2147483648
        %v1744 = vor.u32 1.1754944e-38, %v1743
        %v1745 = vsel %vm1742, %v1744, %v1740
        %v1746 = vmul.f32 1.0, %v1745
        %1748 = vrot.lane.b32.xlu0 %v1705, 64
        %v1749 = vpop.permute.xlu0 %1748
        %v1751 = vmul.f32 %v1746, %v1749
        %1753 = vrot.lane.b32.xlu0 %v1751, 64
        %v1754 = vpop.permute.xlu0 %1753
        %v1756 = vadd.f32 %v1677, %v1754
        %v1757 = vtanh.pop %v1756
        %v1758 = vsub.f32 1.0, %v1746
        %1760 = vrot.lane.b32.xlu0 %v1757, 96
        %v1761 = vpop.permute.xlu0 %1760
        %v1763 = vmul.f32 %v1758, %v1761
        %1765 = vrot.lane.b32.xlu0 %v1634, 32
        %v1766 = vpop.permute.xlu0 %1765
        %v1768 = vmul.f32 %v1746, %v1766
        %v1769 = vadd.f32 %v1763, %v1768
        %v1771 = vrot.slane %v1725, 4
        %v1772 = vsel %vm455, %v1705, %v1771
        %v1774 = vadd.f32 %v1678, %v1772
        %v1775 = vxor.u32 %v1774, 2147483648
        %v1776 = vmul.f32 %v1775, 1.442695
        %v1777 = vpow.pop %v1776
        %v1778 = vadd.f32 %v1777, 1.0
        %v1779 = vrcp.pop %v1778
        %v1780 = vmul.f32 %v1778, %v1779
        %v1781 = vsub.f32 1.0, %v1780
        %v1782 = vmul.f32 %v1779, %v1781
        %v1783 = vadd.f32 %v1779, %v1782
        %vm1784 = vweird.f32 %v1778
        %vm1785 = vweird.f32 %v1779
        %vm1786 = vmor %vm1784, %vm1785
        %v1787 = vsel %vm1786, %v1779, %v1783
        %v1788 = vand.u32 2147483647, %v1778
        %vm1789 = vcmp.eq.f32.partialorder %v1788, 8.507059e+37
        %v1790 = vand.u32 %v1778, 2147483648
        %v1791 = vor.u32 1.1754944e-38, %v1790
        %v1792 = vsel %vm1789, %v1791, %v1787
        %v1793 = vmul.f32 1.0, %v1792
        %1794 = vrot.lane.b32.xlu0 %v1725, 64
        %v1795 = vpop.permute.xlu0 %1794
        %v1797 = vmul.f32 %v1793, %v1795
        %1799 = vrot.lane.b32.xlu0 %v1678, 96
        %v1800 = vpop.permute.xlu0 %1799
        %v1801 = vrot.slane %v1800, 4
        %1804 = vrot.lane.b32.xlu0 %v1797, 32
        %v1805 = vpop.permute.xlu0 %1804
        %v1807 = vadd.f32 %v1801, %v1805
        %v1808 = vtanh.pop %v1807
        %v1810 = vrot.slane %v1793, 4
        %v1812 = vsub.f32 1.0, %v1810
        %v1813 = vmul.f32 %v1812, %v1808
        %v1814 = vmul.f32 %v1810, %v1635
        %v1815 = vadd.f32 %v1813, %v1814
        %1817 = vst [vmem:[#allocation1] ss:$2 sm:$0xff] %v1769
        %v1818 = vld.sshfl [vmem:[#allocation1] sm:$0xff pattern:$0x75316420]
        %1819 = vrot.lane.b32.xlu0 %v1818, 96
        %v1820 = vpop.permute.xlu0 %1819
        %v1822 = vsel %vm854, %v1820, %v1634
        %v1823 = vsel %vm842, %v1815, %v1635
        %1824 = vst [vmem:[#allocation1] ss:$2 sm:$0xff] %v1769
        %v1825 = vld.sshfl [vmem:[#allocation1] sm:$0xff pattern:$0x75316420]
        %1826 = vrot.lane.b32.xlu0 %v1825, 96
        %v1827 = vpop.permute.xlu0 %1826
        %v1829 = vsel %vm854, %v1827, 0.0
        %v1831 = vrot.slane %v1829, 1
        %1832 = vrot.lane.b32.xlu0 %v1831, 32
        %v1833 = vpop.permute.xlu0 %1832
        %v1835 = vrot.slane %v1829, 2
        %1836 = vrot.lane.b32.xlu0 %v1835, 64
        %v1837 = vpop.permute.xlu0 %1836
        %v1839 = vrot.slane %v1829, 3
        %1840 = vrot.lane.b32.xlu0 %v1839, 96
        %v1841 = vpop.permute.xlu0 %1840
        %v1843 = vsel %vm674, %v1829, %v1833
        %v1844 = vsel %vm512, %v1843, %v1837
        %v1845 = vsel %vm677, %v1844, %v1841
        %1846 = vst [vmem:[%s273 + $0x6] sm:$0x1] %v1845
        %v1847 = vsel %vm842, %v1815, 0.0
        %v1849 = vrot.slane %v1847, 1
        %1850 = vrot.lane.b32.xlu0 %v1849, 32
        %v1851 = vpop.permute.xlu0 %1850
        %v1853 = vrot.slane %v1847, 2
        %1854 = vrot.lane.b32.xlu0 %v1853, 64
        %v1855 = vpop.permute.xlu0 %1854
        %v1857 = vrot.slane %v1847, 3
        %1858 = vrot.lane.b32.xlu0 %v1857, 96
        %v1859 = vpop.permute.xlu0 %1858
        %v1861 = vsel %vm674, %v1847, %v1851
        %v1862 = vsel %vm512, %v1861, %v1855
        %v1863 = vsel %vm677, %v1862, %v1859
        %1864 = vst [vmem:[#allocation4 + $0x1] sm:$0x1] %v1863
        %v1865 = vld [vmem:[%s505] sm:$0xff]
        %v1866 = vld [vmem:[#allocation3] sm:$0xff]
        %1868 = vrot.lane.b32.xlu0 %v1823, 32
        %v1869 = vpop.permute.xlu0 %1868
        %v1871 = vsel %vm674, %v1822, %v1869
        %v1873 = vsel %vm512, %v1871, 0
        %1875 = vmatpush.msra.mxu0 0.0
        %1876 = vmatpush.msra.mxu0 0.0
        %1877 = vmatpush.msra.mxu0 0.0
        %1878 = vmatpush.msra.mxu0 0.0
        %1879 = vmatpush.msra.mxu0 0.0
        %1880 = vmatpush.msra.mxu0 0.0
        %1881 = vmatpush.msra.mxu0 0.0
        %1882 = vmatpush.msra.mxu0 0.0
        %1883 = vmatpush.msra.mxu0 %v501
        %1884 = vmatpush.msra.mxu0 %v499
        %1885 = vmatpush.msra.mxu0 %v497
        %1886 = vmatpush.msra.mxu0 %v495
        %1887 = vmatpush.msra.mxu0 %v493
        %1888 = vmatpush.msra.mxu0 %v491
        %1889 = vmatpush.msra.mxu0 %v489
        %1890 = vmatpush.msra.mxu0 %v487
        %1891 = vmatmul.f32.gmra.mxu0 %v1873
        %v1892 = vpop.f32.mrf.mxu0
        %v1893 = vadd.f32 %v508, %v1892
        %1894 = vdwg.mxu0
        %1895 = vmatpush.msra.mxu0 0.0
        %1896 = vmatpush.msra.mxu0 0.0
        %1897 = vmatpush.msra.mxu0 0.0
        %1898 = vmatpush.msra.mxu0 0.0
        %1899 = vmatpush.msra.mxu0 0.0
        %1900 = vmatpush.msra.mxu0 0.0
        %1901 = vmatpush.msra.mxu0 0.0
        %1902 = vmatpush.msra.mxu0 0.0
        %1903 = vmatpush.msra.mxu0 %v502
        %1904 = vmatpush.msra.mxu0 %v500
        %1905 = vmatpush.msra.mxu0 %v498
        %1906 = vmatpush.msra.mxu0 %v496
        %1907 = vmatpush.msra.mxu0 %v494
        %1908 = vmatpush.msra.mxu0 %v492
        %1909 = vmatpush.msra.mxu0 %v490
        %1910 = vmatpush.msra.mxu0 %v488
        %1911 = vmatmul.f32.gmra.mxu0 %v1873
        %v1912 = vpop.f32.mrf.mxu0
        %v1913 = vadd.f32 %v509, %v1912
        %1914 = vdwg.mxu0
        %v1915 = vadd.f32 %v1865, %v1893
        %v1916 = vxor.u32 %v1915, 2147483648
        %v1917 = vmul.f32 %v1916, 1.442695
        %v1918 = vpow.pop %v1917
        %v1919 = vadd.f32 %v1918, 1.0
        %v1920 = vrcp.pop %v1919
        %v1921 = vmul.f32 %v1919, %v1920
        %v1922 = vsub.f32 1.0, %v1921
        %v1923 = vmul.f32 %v1920, %v1922
        %v1924 = vadd.f32 %v1920, %v1923
        %vm1925 = vweird.f32 %v1919
        %vm1926 = vweird.f32 %v1920
        %vm1927 = vmor %vm1925, %vm1926
        %v1928 = vsel %vm1927, %v1920, %v1924
        %v1929 = vand.u32 2147483647, %v1919
        %vm1930 = vcmp.eq.f32.partialorder %v1929, 8.507059e+37
        %v1931 = vand.u32 %v1919, 2147483648
        %v1932 = vor.u32 1.1754944e-38, %v1931
        %v1933 = vsel %vm1930, %v1932, %v1928
        %v1934 = vmul.f32 1.0, %v1933
        %1936 = vrot.lane.b32.xlu0 %v1893, 64
        %v1937 = vpop.permute.xlu0 %1936
        %v1939 = vmul.f32 %v1934, %v1937
        %1941 = vrot.lane.b32.xlu0 %v1939, 64
        %v1942 = vpop.permute.xlu0 %1941
        %v1944 = vadd.f32 %v1865, %v1942
        %v1945 = vtanh.pop %v1944
        %v1946 = vsub.f32 1.0, %v1934
        %1948 = vrot.lane.b32.xlu0 %v1945, 96
        %v1949 = vpop.permute.xlu0 %1948
        %v1951 = vmul.f32 %v1946, %v1949
        %1953 = vrot.lane.b32.xlu0 %v1822, 32
        %v1954 = vpop.permute.xlu0 %1953
        %v1956 = vmul.f32 %v1934, %v1954
        %v1957 = vadd.f32 %v1951, %v1956
        %v1959 = vrot.slane %v1913, 4
        %v1960 = vsel %vm455, %v1893, %v1959
        %v1962 = vadd.f32 %v1866, %v1960
        %v1963 = vxor.u32 %v1962, 2147483648
        %v1964 = vmul.f32 %v1963, 1.442695
        %v1965 = vpow.pop %v1964
        %v1966 = vadd.f32 %v1965, 1.0
        %v1967 = vrcp.pop %v1966
        %v1968 = vmul.f32 %v1966, %v1967
        %v1969 = vsub.f32 1.0, %v1968
        %v1970 = vmul.f32 %v1967, %v1969
        %v1971 = vadd.f32 %v1967, %v1970
        %vm1972 = vweird.f32 %v1966
        %vm1973 = vweird.f32 %v1967
        %vm1974 = vmor %vm1972, %vm1973
        %v1975 = vsel %vm1974, %v1967, %v1971
        %v1976 = vand.u32 2147483647, %v1966
        %vm1977 = vcmp.eq.f32.partialorder %v1976, 8.507059e+37
        %v1978 = vand.u32 %v1966, 2147483648
        %v1979 = vor.u32 1.1754944e-38, %v1978
        %v1980 = vsel %vm1977, %v1979, %v1975
        %v1981 = vmul.f32 1.0, %v1980
        %1982 = vrot.lane.b32.xlu0 %v1913, 64
        %v1983 = vpop.permute.xlu0 %1982
        %v1985 = vmul.f32 %v1981, %v1983
        %1987 = vrot.lane.b32.xlu0 %v1866, 96
        %v1988 = vpop.permute.xlu0 %1987
        %v1989 = vrot.slane %v1988, 4
        %1992 = vrot.lane.b32.xlu0 %v1985, 32
        %v1993 = vpop.permute.xlu0 %1992
        %v1995 = vadd.f32 %v1989, %v1993
        %v1996 = vtanh.pop %v1995
        %v1998 = vrot.slane %v1981, 4
        %v2000 = vsub.f32 1.0, %v1998
        %v2001 = vmul.f32 %v2000, %v1996
        %v2002 = vmul.f32 %v1998, %v1823
        %v2003 = vadd.f32 %v2001, %v2002
        %2005 = vst [vmem:[#allocation1] ss:$2 sm:$0xff] %v1957
        %v2006 = vld.sshfl [vmem:[#allocation1] sm:$0xff pattern:$0x75316420]
        %2007 = vrot.lane.b32.xlu0 %v2006, 96
        %v2008 = vpop.permute.xlu0 %2007
        %v2010 = vsel %vm659, %v2008, %v1822
        %v2011 = vsel %vm647, %v2003, %v1823
        %2012 = vst [vmem:[#allocation1] ss:$2 sm:$0xff] %v1957
        %v2013 = vld.sshfl [vmem:[#allocation1] sm:$0xff pattern:$0x75316420]
        %2014 = vrot.lane.b32.xlu0 %v2013, 96
        %v2015 = vpop.permute.xlu0 %2014
        %v2017 = vsel %vm659, %v2015, 0.0
        %v2019 = vrot.slane %v2017, 1
        %2020 = vrot.lane.b32.xlu0 %v2019, 32
        %v2021 = vpop.permute.xlu0 %2020
        %v2023 = vrot.slane %v2017, 2
        %2024 = vrot.lane.b32.xlu0 %v2023, 64
        %v2025 = vpop.permute.xlu0 %2024
        %v2027 = vrot.slane %v2017, 3
        %2028 = vrot.lane.b32.xlu0 %v2027, 96
        %v2029 = vpop.permute.xlu0 %2028
        %v2031 = vsel %vm674, %v2017, %v2021
        %v2032 = vsel %vm512, %v2031, %v2025
        %v2033 = vsel %vm677, %v2032, %v2029
        %2034 = vst [vmem:[%s273 + $0x7] sm:$0x1] %v2033
        %v2035 = vsel %vm647, %v2003, 0.0
        %v2037 = vrot.slane %v2035, 1
        %2038 = vrot.lane.b32.xlu0 %v2037, 32
        %v2039 = vpop.permute.xlu0 %2038
        %v2041 = vrot.slane %v2035, 2
        %2042 = vrot.lane.b32.xlu0 %v2041, 64
        %v2043 = vpop.permute.xlu0 %2042
        %v2045 = vrot.slane %v2035, 3
        %2046 = vrot.lane.b32.xlu0 %v2045, 96
        %v2047 = vpop.permute.xlu0 %2046
        %v2049 = vsel %vm674, %v2035, %v2039
        %v2050 = vsel %vm512, %v2049, %v2043
        %v2051 = vsel %vm677, %v2050, %v2047
        %2052 = vst [vmem:[#allocation4] sm:$0x1] %v2051
        %v2053 = vld [vmem:[%s273] sm:$0xff]
        %v2054 = vld [vmem:[#allocation4] sm:$0xff]
        %v2055 = vadd.f32 %v2053, %v2054
        %2056 = vst [vmem:[%s273] sm:$0xff] %v2055
        %v2058 = vrot.slane %v2010, 1
        %2059 = vrot.lane.b32.xlu0 %v2058, 32
        %v2060 = vpop.permute.xlu0 %2059
        %v2062 = vrot.slane %v2010, 2
        %2063 = vrot.lane.b32.xlu0 %v2062, 64
        %v2064 = vpop.permute.xlu0 %2063
        %v2066 = vrot.slane %v2010, 3
        %2067 = vrot.lane.b32.xlu0 %v2066, 96
        %v2068 = vpop.permute.xlu0 %2067
        %v2070 = vsel %vm674, %v2010, %v2060
        %v2071 = vsel %vm512, %v2070, %v2064
        %v2072 = vsel %vm677, %v2071, %v2068
        %2073 = vst [vmem:[%s280] sm:$0x1] %v2072
        %v2075 = vrot.slane %v2011, 1
        %2076 = vrot.lane.b32.xlu0 %v2075, 32
        %v2077 = vpop.permute.xlu0 %2076
        %v2079 = vrot.slane %v2011, 2
        %2080 = vrot.lane.b32.xlu0 %v2079, 64
        %v2081 = vpop.permute.xlu0 %2080
        %v2083 = vrot.slane %v2011, 3
        %2084 = vrot.lane.b32.xlu0 %v2083, 96
        %v2085 = vpop.permute.xlu0 %2084
        %v2087 = vsel %vm674, %v2011, %v2077
        %v2088 = vsel %vm512, %v2087, %v2081
        %v2089 = vsel %vm677, %v2088, %v2085
        %2090 = vst [vmem:[%s280 + $0x1] sm:$0x1] %v2089
        %s2091 = sand.u32 %s153, 1
        %s2092 = scalar_lea.sflag [#allocation10], %s2091
        %s2093 = sand.u32 %s153, 1
        %s2094 = smul.addr %s2093, 8
        %s2095 = scalar_lea.vmem [#allocation11], %s2094
        %s2096 = sand.u32 %s179, 1
        %s2097 = scalar_lea.sflag [#allocation13], %s2096
        %s2098 = sand.u32 %s179, 1
        %s2099 = smul.addr %s2098, 2
        %s2100 = scalar_lea.vmem [#allocation12], %s2099
        // Predicated region
        $region86: #{tpu_custom_call.1} parent=39 // pred_check
          %p2101 = pneg %p163
        $region87: #{tpu_custom_call.1} parent=39 // pred_check_branch
          %2103 = sbr.rel (%p2101) target = $region89
        $region88: #{tpu_custom_call.1} parent=39 // pred_region
          %2105 = vsyncadd %s2092, 0
          %s2106 = smul.addr %s35, 8
          %s2107 = scalar_lea.hbm %s7, %s2106
          %s2109 = sshll.u32 %s2095, 4
          %s2110 = int_to_ptr.vmem [resolvable:$true] %s2109
          %s2111 = sshll.u32 %s2107, 4
          %s2112 = int_to_ptr.hbm [resolvable:$true] %s2111
          %2114 = dma.vmem_to_hbm [thread:$0]  %s2110, 128, %s2112, %s2092
        $region89: #{tpu_custom_call.1} parent=39 // pred_fallthru
          _
        // Predicated region
        $region90: #{tpu_custom_call.1} parent=39 // pred_check
          %p2115 = pneg %p189
        $region91: #{tpu_custom_call.1} parent=39 // pred_check_branch
          %2117 = sbr.rel (%p2115) target = $region93
        $region92: #{tpu_custom_call.1} parent=39 // pred_region
          %2119 = vsyncadd %s2097, 0
          %s2120 = smul.addr %s35, 2
          %s2121 = scalar_lea.hbm %s8, %s2120
          %s2123 = sshll.u32 %s2100, 4
          %s2124 = int_to_ptr.vmem [resolvable:$true] %s2123
          %s2125 = sshll.u32 %s2121, 4
          %s2126 = int_to_ptr.hbm [resolvable:$true] %s2125
          %2128 = dma.vmem_to_hbm [thread:$0]  %s2124, 32, %s2126, %s2097
        $region93: #{tpu_custom_call.1} parent=39 // pred_fallthru
          _
      $region40: #{tpu_custom_call.1} parent=5 // pred_fallthru
        _
      %p2129 = scmp.le.s32.totalorder 2, %s30
      // Predicated region
      $region94: #{tpu_custom_call.1} parent=5 // pred_check
        %p2130 = pneg %p2129
      $region95: #{tpu_custom_call.1} parent=5 // pred_check_branch
        %2132 = sbr.rel (%p2130) target = $region97
      $region96: #{tpu_custom_call.1} parent=5 // pred_region
        %s2133 = ssub.s32 %s30, 2
        // Predicated region
        $region98: #{tpu_custom_call.1} parent=96 // pred_check
          %p2134 = pneg %p169
        $region99: #{tpu_custom_call.1} parent=96 // pred_check_branch
          %2136 = sbr.rel (%p2134) target = $region101
        $region100: #{tpu_custom_call.1} parent=96 // pred_region
          %s2137 = sand.u32 %s154, 1
          %s2138 = scalar_lea.sflag [#allocation10], %s2137
          %s2139 = sand.u32 %s154, 1
          %s2140 = smul.addr %s2139, 8
          %s2141 = scalar_lea.vmem [#allocation11], %s2140
          %2143 = dma.done %s2138, 128
        $region101: #{tpu_custom_call.1} parent=96 // pred_fallthru
          _
        // Predicated region
        $region102: #{tpu_custom_call.1} parent=96 // pred_check
          %p2144 = pneg %p195
        $region103: #{tpu_custom_call.1} parent=96 // pred_check_branch
          %2146 = sbr.rel (%p2144) target = $region105
        $region104: #{tpu_custom_call.1} parent=96 // pred_region
          %s2147 = sand.u32 %s180, 1
          %s2148 = scalar_lea.sflag [#allocation13], %s2147
          %s2149 = sand.u32 %s180, 1
          %s2150 = smul.addr %s2149, 2
          %s2151 = scalar_lea.vmem [#allocation12], %s2150
          %2153 = dma.done %s2148, 32
        $region105: #{tpu_custom_call.1} parent=96 // pred_fallthru
          _
      $region97: #{tpu_custom_call.1} parent=5 // pred_fallthru
        _
    $region6: #{tpu_custom_call.1} parent=1 // loop_footer
      %s34 = sadd.s32 1, %s30
    $region7: #{tpu_custom_call.1} parent=1 // loop_footer_branch
      %29 = sbr.rel target = $region3
    $region8: #{tpu_custom_call.1} parent=1 // loop_exit
      _
    %2154 = vsyncpa [#allocation9], 1
    %s2155 = scalar_lea.sflag [#allocation9], 1
    %2156 = vsyncpa %s2155, 1
    %2157 = vsyncpa [#allocation10], 1
    %s2158 = scalar_lea.sflag [#allocation10], 1
    %2159 = vsyncpa %s2158, 1
    %2160 = vsyncpa [#allocation13], 1
    %s2161 = scalar_lea.sflag [#allocation13], 1
    %2162 = vsyncpa %s2161, 1
  %2163 = vsyncmov [#allocation5]
  %s2164 = vpop.sfrf %2163
  %p2165 = scmp.eq.s32.totalorder %s2164, 0
  %p2166 = pneg %p2165
  %2168 = shalt.err (%p2166)
  %s2169 = scalar_lea.sflag [#allocation5], 1
  %2170 = vsyncmov %s2169
  %s2171 = vpop.sfrf %2170
  %p2172 = scmp.eq.s32.totalorder %s2171, 0
  %p2173 = pneg %p2172
  %2175 = shalt.err (%p2173)
  %s2176 = scalar_lea.sflag [#allocation5], 2
  %2177 = vsyncmov %s2176
  %s2178 = vpop.sfrf %2177
  %p2179 = scmp.eq.s32.totalorder %s2178, 0
  %p2180 = pneg %p2179
  %2182 = shalt.err (%p2180)
  %s2183 = scalar_lea.sflag [#allocation5], 3
  %2184 = vsyncmov %s2183
  %s2185 = vpop.sfrf %2184
  %p2186 = scmp.eq.s32.totalorder %s2185, 0
  %p2187 = pneg %p2186
  %2189 = shalt.err (%p2187)
  %s2190 = scalar_lea.sflag [#allocation5], 4
  %2191 = vsyncmov %s2190
  %s2192 = vpop.sfrf %2191
  %p2193 = scmp.eq.s32.totalorder %s2192, 0
  %p2194 = pneg %p2193
  %2196 = shalt.err (%p2194)
  %s2197 = scalar_lea.sflag [#allocation5], 5
  %2198 = vsyncmov %s2197
  %s2199 = vpop.sfrf %2198
  %p2200 = scmp.eq.s32.totalorder %s2199, 0
  %p2201 = pneg %p2200
  %2203 = shalt.err (%p2201)
  %s2204 = scalar_lea.sflag [#allocation5], 6
  %2205 = vsyncmov %s2204
  %s2206 = vpop.sfrf %2205
  %p2207 = scmp.eq.s32.totalorder %s2206, 0
  %p2208 = pneg %p2207
  %2210 = shalt.err (%p2208)
  %s2211 = scalar_lea.sflag [#allocation5], 7
  %2212 = vsyncmov %s2211
  %s2213 = vpop.sfrf %2212
  %p2214 = scmp.eq.s32.totalorder %s2213, 0
  %p2215 = pneg %p2214
  %2217 = shalt.err (%p2215)

</llo_original>
